<compile_context>
chip_gen: v7x
topology: tpu7x:2x2x1
jax: 0.10.0
libtpu: 0.0.40
codegen_flags: <defaults>
</compile_context>

<pallas_src>
import functools
import math

import jax
import jax.numpy as jnp
from jax import lax
from jax.experimental import pallas as pl
from jax.experimental.pallas import tpu as pltpu

D_MODEL = 128
N_HEADS = 4
HEAD_DIM = D_MODEL // N_HEADS
LN_EPS = 1e-5  # torch.nn.LayerNorm default

# ---- packed-slab column layout (all offsets are multiples of 128) ----------
# w_d slab (128, 1280) bf16:
_W_QKVQ = (0, 512)     # [Q_self | K_self | V_self | Q_cross]  (scale folded into Q)
_W_CKV = (512, 768)    # [K_cross | V_cross]
_W_AO = (768, 896)     # self-attention output projection
_W_CO = (896, 1024)    # cross-attention output projection
_W_G = (1024, 1280)    # [W_g_e | W_g_v]
WD_COLS = 1280
# bias slab (1, 2048) f32:
_B_E = (0, 128)
_B_V = (128, 256)
_B_QKVQ = (256, 768)
_B_CKV = (768, 1024)
_B_AO = (1024, 1152)
_B_CO = (1152, 1280)
_B_G = (1280, 1536)
_LN_E_G = (1536, 1664)
_LN_E_B = (1664, 1792)
_LN_V_G = (1792, 1920)
_LN_V_B = (1920, 2048)
BIAS_COLS = 2048


# --------------------------------------------------------------------------
# In-kernel helpers (traced inside the Pallas kernel body)
# --------------------------------------------------------------------------
def _bf16(x):
    return x.astype(jnp.bfloat16)


def _mha_heads(q, k, v):
    """Per-head softmax attention on lane-dense (L,128) tensors.

    1/sqrt(head_dim) is already folded into q.  Operands are bf16 on the MXU,
    accumulation / softmax stay f32.  QK^T contracts the last dim of both
    operands (no explicit K transpose on the XLU).
    """
    qb, kb, vb = _bf16(q), _bf16(k), _bf16(v)
    outs = []
    for h in range(N_HEADS):
        sl = slice(h * HEAD_DIM, (h + 1) * HEAD_DIM)
        s = lax.dot_general(qb[:, sl], kb[:, sl],
                            (((1,), (1,)), ((), ())),
                            preferred_element_type=jnp.float32)
        m = jnp.max(s, axis=-1, keepdims=True)
        p = jnp.exp(s - m)
        denom = jnp.sum(p, axis=-1, keepdims=True)
        p = p * pl.reciprocal(denom, approx=True)
        # TODO(synk): per-head accumulation into the output projection only if
        # a bundle dump shows this lane-concat materializing (review item 10).
        outs.append(jnp.dot(_bf16(p), vb[:, sl],
                            preferred_element_type=jnp.float32))
    return jnp.concatenate(outs, axis=-1)  # (L, 128) f32


# --------------------------------------------------------------------------
# Fused forward kernel (whole batch in one grid step)
# --------------------------------------------------------------------------
def fused_forward_kernel(e_ref, v_ref, w_in_ref, w_d_ref, bias_ref, out_ref,
                         *, b_sz, le, lv):
    seq = le + lv

    def bias(c):
        return bias_ref[:, c[0]:c[1]]

    def wd(c):
        return w_d_ref[:, c[0]:c[1]]

    # --- mlp_e / mlp_v : Linear -> ReLU (Dropout = identity in eval) -------
    # inputs arrive f32; cast to bf16 right at the dot (review item 1).
    e2d = _bf16(jnp.concatenate([e_ref[b] for b in range(b_sz)], axis=0))
    v2d = _bf16(jnp.concatenate([v_ref[b] for b in range(b_sz)], axis=0))
    h_e = jnp.maximum(
        jnp.dot(e2d, w_in_ref[:, 0:D_MODEL],
                preferred_element_type=jnp.float32) + bias(_B_E), 0.0)
    h_v = jnp.maximum(
        jnp.dot(v2d, w_in_ref[:, D_MODEL:2 * D_MODEL],
                preferred_element_type=jnp.float32) + bias(_B_V), 0.0)

    # --- h_f = cat([h_e, h_v], dim=1), all batch elements stacked on rows ---
    parts = []
    for b in range(b_sz):
        parts.append(h_e[b * le:(b + 1) * le])
        parts.append(h_v[b * lv:(b + 1) * lv])
    h_f = jnp.concatenate(parts, axis=0)                     # (B*seq, 128) f32

    # --- one MXU push: [Q_self | K_self | V_self | Q_cross] -----------------
    qkvq = (jnp.dot(_bf16(h_f), wd(_W_QKVQ),
                    preferred_element_type=jnp.float32) + bias(_B_QKVQ))

    # --- mma: multi-head self-attention over each batch element ------------
    attn_parts = []
    for b in range(b_sz):
        sl = slice(b * seq, (b + 1) * seq)
        attn_parts.append(_mha_heads(qkvq[sl, 0:D_MODEL],
                                     qkvq[sl, D_MODEL:2 * D_MODEL],
                                     qkvq[sl, 2 * D_MODEL:3 * D_MODEL]))
    attn = jnp.concatenate(attn_parts, axis=0)
    h_mid = (jnp.dot(_bf16(attn), wd(_W_AO),
                     preferred_element_type=jnp.float32) + bias(_B_AO))

    # --- mha: cross-attention; h_e and h_v both query h_mid (shared weights)
    kv = (jnp.dot(_bf16(h_mid), wd(_W_CKV),
                  preferred_element_type=jnp.float32) + bias(_B_CKV))
    cross_parts = []
    for b in range(b_sz):
        sl = slice(b * seq, (b + 1) * seq)
        cross_parts.append(_mha_heads(qkvq[sl, 3 * D_MODEL:4 * D_MODEL],
                                      kv[sl, 0:D_MODEL],
                                      kv[sl, D_MODEL:2 * D_MODEL]))
    cross = jnp.concatenate(cross_parts, axis=0)
    out = (jnp.dot(_bf16(cross), wd(_W_CO),
                   preferred_element_type=jnp.float32) + bias(_B_CO))

    # --- mean over seq -> merged mlp_g (one push) -> LayerNorm --------------
    e_means, v_means = [], []
    for b in range(b_sz):
        base = b * seq
        e_means.append(jnp.mean(out[base:base + le], axis=0, keepdims=True))
        v_means.append(jnp.mean(out[base + le:base + seq], axis=0, keepdims=True))
    pooled = jnp.concatenate(e_means + v_means, axis=0)      # (2B,128): e rows, then v rows

    g = (jnp.dot(_bf16(pooled), wd(_W_G),
                 preferred_element_type=jnp.float32) + bias(_B_G))   # (2B, 256)
    row = lax.broadcasted_iota(jnp.int32, (2 * b_sz, D_MODEL), 0)
    gsel = jnp.where(row < b_sz, g[:, 0:D_MODEL], g[:, D_MODEL:2 * D_MODEL])
    gsel = jnp.maximum(gsel, 0.0)

    gamma = jnp.concatenate([bias(_LN_E_G)] * b_sz + [bias(_LN_V_G)] * b_sz, axis=0)
    beta = jnp.concatenate([bias(_LN_E_B)] * b_sz + [bias(_LN_V_B)] * b_sz, axis=0)
    mu = jnp.mean(gsel, axis=-1, keepdims=True)
    var = jnp.mean(jnp.square(gsel - mu), axis=-1, keepdims=True)
    y = (gsel - mu) * lax.rsqrt(var + LN_EPS) * gamma + beta

    # rows [0:B) = g_e_v per batch, rows [B:2B) = g_v per batch
    out_ref[...] = y.astype(out_ref.dtype)


# --------------------------------------------------------------------------
# EventAwareVisual.forward
# --------------------------------------------------------------------------
@jax.jit
def event_aware_visual_forward(params, visual_fea, event_fea, event_ord):
    # TODO(synk): memory_bank_v.push(event_ord, g_e_v, g_v) is a host-side
    # Python deque side effect with no tensor output; skipped.
    del event_ord
    B, Le, De = event_fea.shape
    _, Lv, Dv = visual_fea.shape
    L = Le + Lv

    args = (event_fea, visual_fea, params["w_in"], params["w_d"], params["bias"])

    def full_spec(a):
        nd = a.ndim
        return pl.BlockSpec(tuple(a.shape), lambda i, nd=nd: (0,) * nd)

    in_specs = [full_spec(a) for a in args]
    out_spec = pl.BlockSpec((2 * B, D_MODEL), lambda i: (0, 0))

    # Advisory cost estimate for XLA scheduling around the custom call.
    flops = 2 * (
        B * Le * De * D_MODEL + B * Lv * Dv * D_MODEL      # mlp_e / mlp_v
        + B * L * D_MODEL * (4 * D_MODEL)                  # fused QKV + cross-Q
        + B * L * D_MODEL * D_MODEL                        # self out proj
        + B * L * D_MODEL * (2 * D_MODEL)                  # cross fused KV
        + B * L * D_MODEL * D_MODEL                        # cross out proj
        + 2 * B * N_HEADS * 2 * L * L * HEAD_DIM           # QK^T + PV, both attns
        + 2 * B * D_MODEL * (2 * D_MODEL))                 # merged mlp_g
    transcendentals = 2 * B * N_HEADS * L * L
    bytes_accessed = int(sum(int(a.size) * a.dtype.itemsize for a in args)
                         + 2 * B * D_MODEL * 4)

    out = pl.pallas_call(
        functools.partial(fused_forward_kernel, b_sz=B, le=Le, lv=Lv),
        out_shape=jax.ShapeDtypeStruct((2 * B, D_MODEL), jnp.float32),
        grid=(1,),
        in_specs=in_specs,
        out_specs=out_spec,
        compiler_params=pltpu.CompilerParams(
            dimension_semantics=("arbitrary",)),
        cost_estimate=pl.CostEstimate(flops=int(flops),
                                      transcendentals=int(transcendentals),
                                      bytes_accessed=bytes_accessed),
    )(*args)

    g_e_v = out[:B]
    g_v = out[B:]
    return g_v, g_e_v


# --------------------------------------------------------------------------
# Parameter init (deterministic, synthetic).  Builds the three packed slabs:
#   w_in : (512, 256)  bf16   [W_e | W_v]
#   w_d  : (128, 1280) bf16   [Wq_s|Wk_s|Wv_s|Wq_c | Wk_c|Wv_c | W_ao | W_co | W_ge|W_gv]
#   bias : (1, 2048)   f32    all biases + LayerNorm gamma/beta
# 1/sqrt(head_dim) is folded into the Q projections here (host-side, one-time).
# --------------------------------------------------------------------------
def _lin(key, din, dout, scale=0.02):
    kw, kb = jax.random.split(key)
    w = scale * jax.random.normal(kw, (din, dout), jnp.float32)
    b = scale * jax.random.normal(kb, (1, dout), jnp.float32)
    return w, b


def init_params(key, text_dim, visual_dim=512):
    # TODO(synk): for 'fakesv' (text_dim=768) keep the mlp_e weight as a
    # separate input instead of packing it with mlp_v.
    assert text_dim == visual_dim, "weight packing assumes text_dim == visual_dim"
    keys = jax.random.split(key, 12)
    w_e, b_e = _lin(keys[0], text_dim, D_MODEL)
    w_v, b_v = _lin(keys[1], visual_dim, D_MODEL)
    w_qs, b_qs = _lin(keys[2], D_MODEL, D_MODEL)
    w_ks, b_ks = _lin(keys[3], D_MODEL, D_MODEL)
    w_vs, b_vs = _lin(keys[4], D_MODEL, D_MODEL)
    w_ao, b_ao = _lin(keys[5], D_MODEL, D_MODEL)
    w_qc, b_qc = _lin(keys[6], D_MODEL, D_MODEL)
    w_kc, b_kc = _lin(keys[7], D_MODEL, D_MODEL)
    w_vc, b_vc = _lin(keys[8], D_MODEL, D_MODEL)
    w_co, b_co = _lin(keys[9], D_MODEL, D_MODEL)
    w_ge, b_ge = _lin(keys[10], D_MODEL, D_MODEL)
    w_gv, b_gv = _lin(keys[11], D_MODEL, D_MODEL)

    att_scale = 1.0 / math.sqrt(HEAD_DIM)
    w_qs, b_qs = w_qs * att_scale, b_qs * att_scale
    w_qc, b_qc = w_qc * att_scale, b_qc * att_scale

    ones = jnp.ones((1, D_MODEL), jnp.float32)
    zeros = jnp.zeros((1, D_MODEL), jnp.float32)

    w_in = jnp.concatenate([w_e, w_v], axis=1).astype(jnp.bfloat16)
    w_d = jnp.concatenate(
        [w_qs, w_ks, w_vs, w_qc,       # cols [0:512]
         w_kc, w_vc,                   # cols [512:768]
         w_ao,                         # cols [768:896]
         w_co,                         # cols [896:1024]
         w_ge, w_gv],                  # cols [1024:1280]
        axis=1).astype(jnp.bfloat16)
    bias = jnp.concatenate(
        [b_e, b_v,
         b_qs, b_ks, b_vs, b_qc,
         b_kc, b_vc,
         b_ao,
         b_co,
         b_ge, b_gv,
         ones, zeros,                  # layernorm_e gamma / beta
         ones, zeros],                 # layernorm_v gamma / beta
        axis=1)                        # (1, 2048) f32

    assert w_d.shape == (D_MODEL, WD_COLS)
    assert bias.shape == (1, BIAS_COLS)
    return {"w_in": w_in, "w_d": w_d, "bias": bias}


# --------------------------------------------------------------------------
if __name__ == "__main__":
    B, Le, Lv = 2, 8, 8
    TEXT_DIM, VIS_DIM = 512, 512  # dataset == 'fakett'

    key = jax.random.PRNGKey(0)
    k_v, k_e = jax.random.split(key)
    visual_fea = jax.random.normal(k_v, (B, Lv, VIS_DIM), jnp.float32)
    event_fea = jax.random.normal(k_e, (B, Le, TEXT_DIM), jnp.float32)
    event_ord = jnp.arange(B, dtype=jnp.int32)

    params = init_params(jax.random.PRNGKey(42), TEXT_DIM, VIS_DIM)

    g_v, g_e_v = event_aware_visual_forward(params, visual_fea, event_fea,
                                            event_ord)
    jax.block_until_ready((g_v, g_e_v))

    assert g_v.shape == (B, D_MODEL) and g_e_v.shape == (B, D_MODEL)
    assert bool(jnp.all(jnp.isfinite(g_v))) and bool(jnp.all(jnp.isfinite(g_e_v)))
    print("KERNEL_OK")
</pallas_src>

<mosaic_0001>
module attributes {stable_mosaic.version = 11 : i64} {
  func.func @fused_forward_kernel(%arg0: i32, %arg1: memref<2x8x512xf32, #tpu.memory_space<vmem>>, %arg2: memref<2x8x512xf32, #tpu.memory_space<vmem>>, %arg3: memref<512x256xbf16, #tpu.memory_space<vmem>>, %arg4: memref<128x1280xbf16, #tpu.memory_space<vmem>>, %arg5: memref<1x2048xf32, #tpu.memory_space<vmem>>, %arg6: memref<4x128xf32, #tpu.memory_space<vmem>>) attributes {dimension_semantics = [#tpu.dimension_semantics<arbitrary>], iteration_bounds = array<i64: 1>, scalar_prefetch = 0 : i64, scratch_operands = 0 : i64, tpu.core_type = #tpu.core_type<tc>, window_params = [{pipeline_mode = #tpu.pipeline_mode<synchronous>, transform_indices = @transform_0, window_bounds = array<i64: 2, 8, 512>}, {pipeline_mode = #tpu.pipeline_mode<synchronous>, transform_indices = @transform_1, window_bounds = array<i64: 2, 8, 512>}, {pipeline_mode = #tpu.pipeline_mode<synchronous>, transform_indices = @transform_2, window_bounds = array<i64: 512, 256>}, {pipeline_mode = #tpu.pipeline_mode<synchronous>, transform_indices = @transform_3, window_bounds = array<i64: 128, 1280>}, {pipeline_mode = #tpu.pipeline_mode<synchronous>, transform_indices = @transform_4, window_bounds = array<i64: 1, 2048>}, {pipeline_mode = #tpu.pipeline_mode<synchronous>, transform_indices = @transform_5, window_bounds = array<i64: 4, 128>}]} {
    %c0 = arith.constant 0 : index
    %c0_0 = arith.constant 0 : index
    %c0_1 = arith.constant 0 : index
    %0 = vector.load %arg1[%c0, %c0_0, %c0_1] : memref<2x8x512xf32, #tpu.memory_space<vmem>>, vector<1x8x512xf32>
    %1 = vector.shape_cast %0 : vector<1x8x512xf32> to vector<8x512xf32>
    %c1 = arith.constant 1 : index
    %c0_2 = arith.constant 0 : index
    %c0_3 = arith.constant 0 : index
    %2 = vector.load %arg1[%c1, %c0_2, %c0_3] : memref<2x8x512xf32, #tpu.memory_space<vmem>>, vector<1x8x512xf32>
    %3 = vector.shape_cast %2 : vector<1x8x512xf32> to vector<8x512xf32>
    %4 = tpu.concatenate %1, %3 in 0 : vector<8x512xf32>, vector<8x512xf32> -> vector<16x512xf32>
    %5 = arith.truncf %4 : vector<16x512xf32> to vector<16x512xbf16>
    %c0_4 = arith.constant 0 : index
    %c0_5 = arith.constant 0 : index
    %c0_6 = arith.constant 0 : index
    %6 = vector.load %arg2[%c0_4, %c0_5, %c0_6] : memref<2x8x512xf32, #tpu.memory_space<vmem>>, vector<1x8x512xf32>
    %7 = vector.shape_cast %6 : vector<1x8x512xf32> to vector<8x512xf32>
    %c1_7 = arith.constant 1 : index
    %c0_8 = arith.constant 0 : index
    %c0_9 = arith.constant 0 : index
    %8 = vector.load %arg2[%c1_7, %c0_8, %c0_9] : memref<2x8x512xf32, #tpu.memory_space<vmem>>, vector<1x8x512xf32>
    %9 = vector.shape_cast %8 : vector<1x8x512xf32> to vector<8x512xf32>
    %10 = tpu.concatenate %7, %9 in 0 : vector<8x512xf32>, vector<8x512xf32> -> vector<16x512xf32>
    %11 = arith.truncf %10 : vector<16x512xf32> to vector<16x512xbf16>
    %c0_10 = arith.constant 0 : index
    %c0_11 = arith.constant 0 : index
    %12 = vector.load %arg3[%c0_10, %c0_11] : memref<512x256xbf16, #tpu.memory_space<vmem>>, vector<512x128xbf16>
    %cst = arith.constant dense<0.000000e+00> : vector<16x128xf32>
    %13 = tpu.matmul %5, %12, %cst {dimension_numbers = #tpu.dot_dimension_numbers<[1], [0], [0], [1], [0, 0, 1, 1], [], []>} : vector<16x512xbf16>, vector<512x128xbf16>, vector<16x128xf32> -> vector<16x128xf32>
    %c0_12 = arith.constant 0 : index
    %c0_13 = arith.constant 0 : index
    %14 = vector.load %arg5[%c0_12, %c0_13] : memref<1x2048xf32, #tpu.memory_space<vmem>>, vector<1x128xf32>
    %15 = vector.broadcast %14 : vector<1x128xf32> to vector<16x128xf32>
    %16 = arith.addf %13, %15 : vector<16x128xf32>
    %cst_14 = arith.constant 0.000000e+00 : f32
    %17 = vector.broadcast %cst_14 : f32 to vector<16x128xf32>
    %18 = arith.maximumf %16, %17 : vector<16x128xf32>
    %c0_15 = arith.constant 0 : index
    %c128 = arith.constant 128 : index
    %19 = vector.load %arg3[%c0_15, %c128] : memref<512x256xbf16, #tpu.memory_space<vmem>>, vector<512x128xbf16>
    %cst_16 = arith.constant dense<0.000000e+00> : vector<16x128xf32>
    %20 = tpu.matmul %11, %19, %cst_16 {dimension_numbers = #tpu.dot_dimension_numbers<[1], [0], [0], [1], [0, 0, 1, 1], [], []>} : vector<16x512xbf16>, vector<512x128xbf16>, vector<16x128xf32> -> vector<16x128xf32>
    %c0_17 = arith.constant 0 : index
    %c128_18 = arith.constant 128 : index
    %21 = vector.load %arg5[%c0_17, %c128_18] : memref<1x2048xf32, #tpu.memory_space<vmem>>, vector<1x128xf32>
    %22 = vector.broadcast %21 : vector<1x128xf32> to vector<16x128xf32>
    %23 = arith.addf %20, %22 : vector<16x128xf32>
    %cst_19 = arith.constant 0.000000e+00 : f32
    %24 = vector.broadcast %cst_19 : f32 to vector<16x128xf32>
    %25 = arith.maximumf %23, %24 : vector<16x128xf32>
    %26 = vector.extract_strided_slice %18 {offsets = [0, 0], sizes = [8, 128], strides = [1, 1]} : vector<16x128xf32> to vector<8x128xf32>
    %27 = vector.extract_strided_slice %25 {offsets = [0, 0], sizes = [8, 128], strides = [1, 1]} : vector<16x128xf32> to vector<8x128xf32>
    %28 = vector.extract_strided_slice %18 {offsets = [8, 0], sizes = [8, 128], strides = [1, 1]} : vector<16x128xf32> to vector<8x128xf32>
    %29 = vector.extract_strided_slice %25 {offsets = [8, 0], sizes = [8, 128], strides = [1, 1]} : vector<16x128xf32> to vector<8x128xf32>
    %30 = tpu.concatenate %26, %27, %28, %29 in 0 : vector<8x128xf32>, vector<8x128xf32>, vector<8x128xf32>, vector<8x128xf32> -> vector<32x128xf32>
    %31 = arith.truncf %30 : vector<32x128xf32> to vector<32x128xbf16>
    %c0_20 = arith.constant 0 : index
    %c0_21 = arith.constant 0 : index
    %32 = vector.load %arg4[%c0_20, %c0_21] : memref<128x1280xbf16, #tpu.memory_space<vmem>>, vector<128x512xbf16>
    %cst_22 = arith.constant dense<0.000000e+00> : vector<32x512xf32>
    %33 = tpu.matmul %31, %32, %cst_22 {dimension_numbers = #tpu.dot_dimension_numbers<[1], [0], [0], [1], [0, 0, 1, 1], [], []>} : vector<32x128xbf16>, vector<128x512xbf16>, vector<32x512xf32> -> vector<32x512xf32>
    %c0_23 = arith.constant 0 : index
    %c256 = arith.constant 256 : index
    %34 = vector.load %arg5[%c0_23, %c256] : memref<1x2048xf32, #tpu.memory_space<vmem>>, vector<1x512xf32>
    %35 = vector.broadcast %34 : vector<1x512xf32> to vector<32x512xf32>
    %36 = arith.addf %33, %35 : vector<32x512xf32>
    %37 = vector.extract_strided_slice %36 {offsets = [0, 0], sizes = [16, 128], strides = [1, 1]} : vector<32x512xf32> to vector<16x128xf32>
    %38 = vector.extract_strided_slice %36 {offsets = [0, 128], sizes = [16, 128], strides = [1, 1]} : vector<32x512xf32> to vector<16x128xf32>
    %39 = vector.extract_strided_slice %36 {offsets = [0, 256], sizes = [16, 128], strides = [1, 1]} : vector<32x512xf32> to vector<16x128xf32>
    %40 = arith.truncf %37 : vector<16x128xf32> to vector<16x128xbf16>
    %41 = arith.truncf %38 : vector<16x128xf32> to vector<16x128xbf16>
    %42 = arith.truncf %39 : vector<16x128xf32> to vector<16x128xbf16>
    %43 = vector.extract_strided_slice %40 {offsets = [0, 0], sizes = [16, 32], strides = [1, 1]} : vector<16x128xbf16> to vector<16x32xbf16>
    %44 = vector.extract_strided_slice %41 {offsets = [0, 0], sizes = [16, 32], strides = [1, 1]} : vector<16x128xbf16> to vector<16x32xbf16>
    %cst_24 = arith.constant dense<0.000000e+00> : vector<16x16xf32>
    %45 = tpu.matmul %43, %44, %cst_24 {dimension_numbers = #tpu.dot_dimension_numbers<[1], [1], [0], [0], [0, 0, 1, 0], [], []>} : vector<16x32xbf16>, vector<16x32xbf16>, vector<16x16xf32> -> vector<16x16xf32>
    %cst_25 = arith.constant dense<0xFF800000> : vector<16xf32>
    %46 = vector.multi_reduction <maximumf>, %45, %cst_25 [1] : vector<16x16xf32> to vector<16xf32>
    %47 = vector.shape_cast %46 : vector<16xf32> to vector<16x1xf32>
    %48 = vector.broadcast %47 : vector<16x1xf32> to vector<16x16xf32>
    %49 = arith.subf %45, %48 : vector<16x16xf32>
    %50 = math.exp %49 : vector<16x16xf32>
    %cst_26 = arith.constant dense<0.000000e+00> : vector<16xf32>
    %51 = vector.multi_reduction <add>, %50, %cst_26 [1] : vector<16x16xf32> to vector<16xf32>
    %52 = vector.shape_cast %51 : vector<16xf32> to vector<16x1xf32>
    %53 = tpu.reciprocal %52 {approx = true} : vector<16x1xf32> -> vector<16x1xf32>
    %54 = vector.broadcast %53 : vector<16x1xf32> to vector<16x16xf32>
    %55 = arith.mulf %50, %54 : vector<16x16xf32>
    %56 = arith.truncf %55 : vector<16x16xf32> to vector<16x16xbf16>
    %57 = vector.extract_strided_slice %42 {offsets = [0, 0], sizes = [16, 32], strides = [1, 1]} : vector<16x128xbf16> to vector<16x32xbf16>
    %cst_27 = arith.constant dense<0.000000e+00> : vector<16x32xf32>
    %58 = tpu.matmul %56, %57, %cst_27 {dimension_numbers = #tpu.dot_dimension_numbers<[1], [0], [0], [1], [0, 0, 1, 1], [], []>} : vector<16x16xbf16>, vector<16x32xbf16>, vector<16x32xf32> -> vector<16x32xf32>
    %59 = vector.extract_strided_slice %40 {offsets = [0, 32], sizes = [16, 32], strides = [1, 1]} : vector<16x128xbf16> to vector<16x32xbf16>
    %60 = vector.extract_strided_slice %41 {offsets = [0, 32], sizes = [16, 32], strides = [1, 1]} : vector<16x128xbf16> to vector<16x32xbf16>
    %cst_28 = arith.constant dense<0.000000e+00> : vector<16x16xf32>
    %61 = tpu.matmul %59, %60, %cst_28 {dimension_numbers = #tpu.dot_dimension_numbers<[1], [1], [0], [0], [0, 0, 1, 0], [], []>} : vector<16x32xbf16>, vector<16x32xbf16>, vector<16x16xf32> -> vector<16x16xf32>
    %cst_29 = arith.constant dense<0xFF800000> : vector<16xf32>
    %62 = vector.multi_reduction <maximumf>, %61, %cst_29 [1] : vector<16x16xf32> to vector<16xf32>
    %63 = vector.shape_cast %62 : vector<16xf32> to vector<16x1xf32>
    %64 = vector.broadcast %63 : vector<16x1xf32> to vector<16x16xf32>
    %65 = arith.subf %61, %64 : vector<16x16xf32>
    %66 = math.exp %65 : vector<16x16xf32>
    %cst_30 = arith.constant dense<0.000000e+00> : vector<16xf32>
    %67 = vector.multi_reduction <add>, %66, %cst_30 [1] : vector<16x16xf32> to vector<16xf32>
    %68 = vector.shape_cast %67 : vector<16xf32> to vector<16x1xf32>
    %69 = tpu.reciprocal %68 {approx = true} : vector<16x1xf32> -> vector<16x1xf32>
    %70 = vector.broadcast %69 : vector<16x1xf32> to vector<16x16xf32>
    %71 = arith.mulf %66, %70 : vector<16x16xf32>
    %72 = arith.truncf %71 : vector<16x16xf32> to vector<16x16xbf16>
    %73 = vector.extract_strided_slice %42 {offsets = [0, 32], sizes = [16, 32], strides = [1, 1]} : vector<16x128xbf16> to vector<16x32xbf16>
    %cst_31 = arith.constant dense<0.000000e+00> : vector<16x32xf32>
    %74 = tpu.matmul %72, %73, %cst_31 {dimension_numbers = #tpu.dot_dimension_numbers<[1], [0], [0], [1], [0, 0, 1, 1], [], []>} : vector<16x16xbf16>, vector<16x32xbf16>, vector<16x32xf32> -> vector<16x32xf32>
    %75 = vector.extract_strided_slice %40 {offsets = [0, 64], sizes = [16, 32], strides = [1, 1]} : vector<16x128xbf16> to vector<16x32xbf16>
    %76 = vector.extract_strided_slice %41 {offsets = [0, 64], sizes = [16, 32], strides = [1, 1]} : vector<16x128xbf16> to vector<16x32xbf16>
    %cst_32 = arith.constant dense<0.000000e+00> : vector<16x16xf32>
    %77 = tpu.matmul %75, %76, %cst_32 {dimension_numbers = #tpu.dot_dimension_numbers<[1], [1], [0], [0], [0, 0, 1, 0], [], []>} : vector<16x32xbf16>, vector<16x32xbf16>, vector<16x16xf32> -> vector<16x16xf32>
    %cst_33 = arith.constant dense<0xFF800000> : vector<16xf32>
    %78 = vector.multi_reduction <maximumf>, %77, %cst_33 [1] : vector<16x16xf32> to vector<16xf32>
    %79 = vector.shape_cast %78 : vector<16xf32> to vector<16x1xf32>
    %80 = vector.broadcast %79 : vector<16x1xf32> to vector<16x16xf32>
    %81 = arith.subf %77, %80 : vector<16x16xf32>
    %82 = math.exp %81 : vector<16x16xf32>
    %cst_34 = arith.constant dense<0.000000e+00> : vector<16xf32>
    %83 = vector.multi_reduction <add>, %82, %cst_34 [1] : vector<16x16xf32> to vector<16xf32>
    %84 = vector.shape_cast %83 : vector<16xf32> to vector<16x1xf32>
    %85 = tpu.reciprocal %84 {approx = true} : vector<16x1xf32> -> vector<16x1xf32>
    %86 = vector.broadcast %85 : vector<16x1xf32> to vector<16x16xf32>
    %87 = arith.mulf %82, %86 : vector<16x16xf32>
    %88 = arith.truncf %87 : vector<16x16xf32> to vector<16x16xbf16>
    %89 = vector.extract_strided_slice %42 {offsets = [0, 64], sizes = [16, 32], strides = [1, 1]} : vector<16x128xbf16> to vector<16x32xbf16>
    %cst_35 = arith.constant dense<0.000000e+00> : vector<16x32xf32>
    %90 = tpu.matmul %88, %89, %cst_35 {dimension_numbers = #tpu.dot_dimension_numbers<[1], [0], [0], [1], [0, 0, 1, 1], [], []>} : vector<16x16xbf16>, vector<16x32xbf16>, vector<16x32xf32> -> vector<16x32xf32>
    %91 = vector.extract_strided_slice %40 {offsets = [0, 96], sizes = [16, 32], strides = [1, 1]} : vector<16x128xbf16> to vector<16x32xbf16>
    %92 = vector.extract_strided_slice %41 {offsets = [0, 96], sizes = [16, 32], strides = [1, 1]} : vector<16x128xbf16> to vector<16x32xbf16>
    %cst_36 = arith.constant dense<0.000000e+00> : vector<16x16xf32>
    %93 = tpu.matmul %91, %92, %cst_36 {dimension_numbers = #tpu.dot_dimension_numbers<[1], [1], [0], [0], [0, 0, 1, 0], [], []>} : vector<16x32xbf16>, vector<16x32xbf16>, vector<16x16xf32> -> vector<16x16xf32>
    %cst_37 = arith.constant dense<0xFF800000> : vector<16xf32>
    %94 = vector.multi_reduction <maximumf>, %93, %cst_37 [1] : vector<16x16xf32> to vector<16xf32>
    %95 = vector.shape_cast %94 : vector<16xf32> to vector<16x1xf32>
    %96 = vector.broadcast %95 : vector<16x1xf32> to vector<16x16xf32>
    %97 = arith.subf %93, %96 : vector<16x16xf32>
    %98 = math.exp %97 : vector<16x16xf32>
    %cst_38 = arith.constant dense<0.000000e+00> : vector<16xf32>
    %99 = vector.multi_reduction <add>, %98, %cst_38 [1] : vector<16x16xf32> to vector<16xf32>
    %100 = vector.shape_cast %99 : vector<16xf32> to vector<16x1xf32>
    %101 = tpu.reciprocal %100 {approx = true} : vector<16x1xf32> -> vector<16x1xf32>
    %102 = vector.broadcast %101 : vector<16x1xf32> to vector<16x16xf32>
    %103 = arith.mulf %98, %102 : vector<16x16xf32>
    %104 = arith.truncf %103 : vector<16x16xf32> to vector<16x16xbf16>
    %105 = vector.extract_strided_slice %42 {offsets = [0, 96], sizes = [16, 32], strides = [1, 1]} : vector<16x128xbf16> to vector<16x32xbf16>
    %cst_39 = arith.constant dense<0.000000e+00> : vector<16x32xf32>
    %106 = tpu.matmul %104, %105, %cst_39 {dimension_numbers = #tpu.dot_dimension_numbers<[1], [0], [0], [1], [0, 0, 1, 1], [], []>} : vector<16x16xbf16>, vector<16x32xbf16>, vector<16x32xf32> -> vector<16x32xf32>
    %107 = tpu.concatenate %58, %74, %90, %106 in 1 : vector<16x32xf32>, vector<16x32xf32>, vector<16x32xf32>, vector<16x32xf32> -> vector<16x128xf32>
    %108 = vector.extract_strided_slice %36 {offsets = [16, 0], sizes = [16, 128], strides = [1, 1]} : vector<32x512xf32> to vector<16x128xf32>
    %109 = vector.extract_strided_slice %36 {offsets = [16, 128], sizes = [16, 128], strides = [1, 1]} : vector<32x512xf32> to vector<16x128xf32>
    %110 = vector.extract_strided_slice %36 {offsets = [16, 256], sizes = [16, 128], strides = [1, 1]} : vector<32x512xf32> to vector<16x128xf32>
    %111 = arith.truncf %108 : vector<16x128xf32> to vector<16x128xbf16>
    %112 = arith.truncf %109 : vector<16x128xf32> to vector<16x128xbf16>
    %113 = arith.truncf %110 : vector<16x128xf32> to vector<16x128xbf16>
    %114 = vector.extract_strided_slice %111 {offsets = [0, 0], sizes = [16, 32], strides = [1, 1]} : vector<16x128xbf16> to vector<16x32xbf16>
    %115 = vector.extract_strided_slice %112 {offsets = [0, 0], sizes = [16, 32], strides = [1, 1]} : vector<16x128xbf16> to vector<16x32xbf16>
    %cst_40 = arith.constant dense<0.000000e+00> : vector<16x16xf32>
    %116 = tpu.matmul %114, %115, %cst_40 {dimension_numbers = #tpu.dot_dimension_numbers<[1], [1], [0], [0], [0, 0, 1, 0], [], []>} : vector<16x32xbf16>, vector<16x32xbf16>, vector<16x16xf32> -> vector<16x16xf32>
    %cst_41 = arith.constant dense<0xFF800000> : vector<16xf32>
    %117 = vector.multi_reduction <maximumf>, %116, %cst_41 [1] : vector<16x16xf32> to vector<16xf32>
    %118 = vector.shape_cast %117 : vector<16xf32> to vector<16x1xf32>
    %119 = vector.broadcast %118 : vector<16x1xf32> to vector<16x16xf32>
    %120 = arith.subf %116, %119 : vector<16x16xf32>
    %121 = math.exp %120 : vector<16x16xf32>
    %cst_42 = arith.constant dense<0.000000e+00> : vector<16xf32>
    %122 = vector.multi_reduction <add>, %121, %cst_42 [1] : vector<16x16xf32> to vector<16xf32>
    %123 = vector.shape_cast %122 : vector<16xf32> to vector<16x1xf32>
    %124 = tpu.reciprocal %123 {approx = true} : vector<16x1xf32> -> vector<16x1xf32>
    %125 = vector.broadcast %124 : vector<16x1xf32> to vector<16x16xf32>
    %126 = arith.mulf %121, %125 : vector<16x16xf32>
    %127 = arith.truncf %126 : vector<16x16xf32> to vector<16x16xbf16>
    %128 = vector.extract_strided_slice %113 {offsets = [0, 0], sizes = [16, 32], strides = [1, 1]} : vector<16x128xbf16> to vector<16x32xbf16>
    %cst_43 = arith.constant dense<0.000000e+00> : vector<16x32xf32>
    %129 = tpu.matmul %127, %128, %cst_43 {dimension_numbers = #tpu.dot_dimension_numbers<[1], [0], [0], [1], [0, 0, 1, 1], [], []>} : vector<16x16xbf16>, vector<16x32xbf16>, vector<16x32xf32> -> vector<16x32xf32>
    %130 = vector.extract_strided_slice %111 {offsets = [0, 32], sizes = [16, 32], strides = [1, 1]} : vector<16x128xbf16> to vector<16x32xbf16>
    %131 = vector.extract_strided_slice %112 {offsets = [0, 32], sizes = [16, 32], strides = [1, 1]} : vector<16x128xbf16> to vector<16x32xbf16>
    %cst_44 = arith.constant dense<0.000000e+00> : vector<16x16xf32>
    %132 = tpu.matmul %130, %131, %cst_44 {dimension_numbers = #tpu.dot_dimension_numbers<[1], [1], [0], [0], [0, 0, 1, 0], [], []>} : vector<16x32xbf16>, vector<16x32xbf16>, vector<16x16xf32> -> vector<16x16xf32>
    %cst_45 = arith.constant dense<0xFF800000> : vector<16xf32>
    %133 = vector.multi_reduction <maximumf>, %132, %cst_45 [1] : vector<16x16xf32> to vector<16xf32>
    %134 = vector.shape_cast %133 : vector<16xf32> to vector<16x1xf32>
    %135 = vector.broadcast %134 : vector<16x1xf32> to vector<16x16xf32>
    %136 = arith.subf %132, %135 : vector<16x16xf32>
    %137 = math.exp %136 : vector<16x16xf32>
    %cst_46 = arith.constant dense<0.000000e+00> : vector<16xf32>
    %138 = vector.multi_reduction <add>, %137, %cst_46 [1] : vector<16x16xf32> to vector<16xf32>
    %139 = vector.shape_cast %138 : vector<16xf32> to vector<16x1xf32>
    %140 = tpu.reciprocal %139 {approx = true} : vector<16x1xf32> -> vector<16x1xf32>
    %141 = vector.broadcast %140 : vector<16x1xf32> to vector<16x16xf32>
    %142 = arith.mulf %137, %141 : vector<16x16xf32>
    %143 = arith.truncf %142 : vector<16x16xf32> to vector<16x16xbf16>
    %144 = vector.extract_strided_slice %113 {offsets = [0, 32], sizes = [16, 32], strides = [1, 1]} : vector<16x128xbf16> to vector<16x32xbf16>
    %cst_47 = arith.constant dense<0.000000e+00> : vector<16x32xf32>
    %145 = tpu.matmul %143, %144, %cst_47 {dimension_numbers = #tpu.dot_dimension_numbers<[1], [0], [0], [1], [0, 0, 1, 1], [], []>} : vector<16x16xbf16>, vector<16x32xbf16>, vector<16x32xf32> -> vector<16x32xf32>
    %146 = vector.extract_strided_slice %111 {offsets = [0, 64], sizes = [16, 32], strides = [1, 1]} : vector<16x128xbf16> to vector<16x32xbf16>
    %147 = vector.extract_strided_slice %112 {offsets = [0, 64], sizes = [16, 32], strides = [1, 1]} : vector<16x128xbf16> to vector<16x32xbf16>
    %cst_48 = arith.constant dense<0.000000e+00> : vector<16x16xf32>
    %148 = tpu.matmul %146, %147, %cst_48 {dimension_numbers = #tpu.dot_dimension_numbers<[1], [1], [0], [0], [0, 0, 1, 0], [], []>} : vector<16x32xbf16>, vector<16x32xbf16>, vector<16x16xf32> -> vector<16x16xf32>
    %cst_49 = arith.constant dense<0xFF800000> : vector<16xf32>
    %149 = vector.multi_reduction <maximumf>, %148, %cst_49 [1] : vector<16x16xf32> to vector<16xf32>
    %150 = vector.shape_cast %149 : vector<16xf32> to vector<16x1xf32>
    %151 = vector.broadcast %150 : vector<16x1xf32> to vector<16x16xf32>
    %152 = arith.subf %148, %151 : vector<16x16xf32>
    %153 = math.exp %152 : vector<16x16xf32>
    %cst_50 = arith.constant dense<0.000000e+00> : vector<16xf32>
    %154 = vector.multi_reduction <add>, %153, %cst_50 [1] : vector<16x16xf32> to vector<16xf32>
    %155 = vector.shape_cast %154 : vector<16xf32> to vector<16x1xf32>
    %156 = tpu.reciprocal %155 {approx = true} : vector<16x1xf32> -> vector<16x1xf32>
    %157 = vector.broadcast %156 : vector<16x1xf32> to vector<16x16xf32>
    %158 = arith.mulf %153, %157 : vector<16x16xf32>
    %159 = arith.truncf %158 : vector<16x16xf32> to vector<16x16xbf16>
    %160 = vector.extract_strided_slice %113 {offsets = [0, 64], sizes = [16, 32], strides = [1, 1]} : vector<16x128xbf16> to vector<16x32xbf16>
    %cst_51 = arith.constant dense<0.000000e+00> : vector<16x32xf32>
    %161 = tpu.matmul %159, %160, %cst_51 {dimension_numbers = #tpu.dot_dimension_numbers<[1], [0], [0], [1], [0, 0, 1, 1], [], []>} : vector<16x16xbf16>, vector<16x32xbf16>, vector<16x32xf32> -> vector<16x32xf32>
    %162 = vector.extract_strided_slice %111 {offsets = [0, 96], sizes = [16, 32], strides = [1, 1]} : vector<16x128xbf16> to vector<16x32xbf16>
    %163 = vector.extract_strided_slice %112 {offsets = [0, 96], sizes = [16, 32], strides = [1, 1]} : vector<16x128xbf16> to vector<16x32xbf16>
    %cst_52 = arith.constant dense<0.000000e+00> : vector<16x16xf32>
    %164 = tpu.matmul %162, %163, %cst_52 {dimension_numbers = #tpu.dot_dimension_numbers<[1], [1], [0], [0], [0, 0, 1, 0], [], []>} : vector<16x32xbf16>, vector<16x32xbf16>, vector<16x16xf32> -> vector<16x16xf32>
    %cst_53 = arith.constant dense<0xFF800000> : vector<16xf32>
    %165 = vector.multi_reduction <maximumf>, %164, %cst_53 [1] : vector<16x16xf32> to vector<16xf32>
    %166 = vector.shape_cast %165 : vector<16xf32> to vector<16x1xf32>
    %167 = vector.broadcast %166 : vector<16x1xf32> to vector<16x16xf32>
    %168 = arith.subf %164, %167 : vector<16x16xf32>
    %169 = math.exp %168 : vector<16x16xf32>
    %cst_54 = arith.constant dense<0.000000e+00> : vector<16xf32>
    %170 = vector.multi_reduction <add>, %169, %cst_54 [1] : vector<16x16xf32> to vector<16xf32>
    %171 = vector.shape_cast %170 : vector<16xf32> to vector<16x1xf32>
    %172 = tpu.reciprocal %171 {approx = true} : vector<16x1xf32> -> vector<16x1xf32>
    %173 = vector.broadcast %172 : vector<16x1xf32> to vector<16x16xf32>
    %174 = arith.mulf %169, %173 : vector<16x16xf32>
    %175 = arith.truncf %174 : vector<16x16xf32> to vector<16x16xbf16>
    %176 = vector.extract_strided_slice %113 {offsets = [0, 96], sizes = [16, 32], strides = [1, 1]} : vector<16x128xbf16> to vector<16x32xbf16>
    %cst_55 = arith.constant dense<0.000000e+00> : vector<16x32xf32>
    %177 = tpu.matmul %175, %176, %cst_55 {dimension_numbers = #tpu.dot_dimension_numbers<[1], [0], [0], [1], [0, 0, 1, 1], [], []>} : vector<16x16xbf16>, vector<16x32xbf16>, vector<16x32xf32> -> vector<16x32xf32>
    %178 = tpu.concatenate %129, %145, %161, %177 in 1 : vector<16x32xf32>, vector<16x32xf32>, vector<16x32xf32>, vector<16x32xf32> -> vector<16x128xf32>
    %179 = tpu.concatenate %107, %178 in 0 : vector<16x128xf32>, vector<16x128xf32> -> vector<32x128xf32>
    %180 = arith.truncf %179 : vector<32x128xf32> to vector<32x128xbf16>
    %c0_56 = arith.constant 0 : index
    %c768 = arith.constant 768 : index
    %181 = vector.load %arg4[%c0_56, %c768] : memref<128x1280xbf16, #tpu.memory_space<vmem>>, vector<128x128xbf16>
    %cst_57 = arith.constant dense<0.000000e+00> : vector<32x128xf32>
    %182 = tpu.matmul %180, %181, %cst_57 {dimension_numbers = #tpu.dot_dimension_numbers<[1], [0], [0], [1], [0, 0, 1, 1], [], []>} : vector<32x128xbf16>, vector<128x128xbf16>, vector<32x128xf32> -> vector<32x128xf32>
    %c0_58 = arith.constant 0 : index
    %c1024 = arith.constant 1024 : index
    %183 = vector.load %arg5[%c0_58, %c1024] : memref<1x2048xf32, #tpu.memory_space<vmem>>, vector<1x128xf32>
    %184 = vector.broadcast %183 : vector<1x128xf32> to vector<32x128xf32>
    %185 = arith.addf %182, %184 : vector<32x128xf32>
    %186 = arith.truncf %185 : vector<32x128xf32> to vector<32x128xbf16>
    %c0_59 = arith.constant 0 : index
    %c512 = arith.constant 512 : index
    %187 = vector.load %arg4[%c0_59, %c512] : memref<128x1280xbf16, #tpu.memory_space<vmem>>, vector<128x256xbf16>
    %cst_60 = arith.constant dense<0.000000e+00> : vector<32x256xf32>
    %188 = tpu.matmul %186, %187, %cst_60 {dimension_numbers = #tpu.dot_dimension_numbers<[1], [0], [0], [1], [0, 0, 1, 1], [], []>} : vector<32x128xbf16>, vector<128x256xbf16>, vector<32x256xf32> -> vector<32x256xf32>
    %c0_61 = arith.constant 0 : index
    %c768_62 = arith.constant 768 : index
    %189 = vector.load %arg5[%c0_61, %c768_62] : memref<1x2048xf32, #tpu.memory_space<vmem>>, vector<1x256xf32>
    %190 = vector.broadcast %189 : vector<1x256xf32> to vector<32x256xf32>
    %191 = arith.addf %188, %190 : vector<32x256xf32>
    %192 = vector.extract_strided_slice %36 {offsets = [0, 384], sizes = [16, 128], strides = [1, 1]} : vector<32x512xf32> to vector<16x128xf32>
    %193 = vector.extract_strided_slice %191 {offsets = [0, 0], sizes = [16, 128], strides = [1, 1]} : vector<32x256xf32> to vector<16x128xf32>
    %194 = vector.extract_strided_slice %191 {offsets = [0, 128], sizes = [16, 128], strides = [1, 1]} : vector<32x256xf32> to vector<16x128xf32>
    %195 = arith.truncf %192 : vector<16x128xf32> to vector<16x128xbf16>
    %196 = arith.truncf %193 : vector<16x128xf32> to vector<16x128xbf16>
    %197 = arith.truncf %194 : vector<16x128xf32> to vector<16x128xbf16>
    %198 = vector.extract_strided_slice %195 {offsets = [0, 0], sizes = [16, 32], strides = [1, 1]} : vector<16x128xbf16> to vector<16x32xbf16>
    %199 = vector.extract_strided_slice %196 {offsets = [0, 0], sizes = [16, 32], strides = [1, 1]} : vector<16x128xbf16> to vector<16x32xbf16>
    %cst_63 = arith.constant dense<0.000000e+00> : vector<16x16xf32>
    %200 = tpu.matmul %198, %199, %cst_63 {dimension_numbers = #tpu.dot_dimension_numbers<[1], [1], [0], [0], [0, 0, 1, 0], [], []>} : vector<16x32xbf16>, vector<16x32xbf16>, vector<16x16xf32> -> vector<16x16xf32>
    %cst_64 = arith.constant dense<0xFF800000> : vector<16xf32>
    %201 = vector.multi_reduction <maximumf>, %200, %cst_64 [1] : vector<16x16xf32> to vector<16xf32>
    %202 = vector.shape_cast %201 : vector<16xf32> to vector<16x1xf32>
    %203 = vector.broadcast %202 : vector<16x1xf32> to vector<16x16xf32>
    %204 = arith.subf %200, %203 : vector<16x16xf32>
    %205 = math.exp %204 : vector<16x16xf32>
    %cst_65 = arith.constant dense<0.000000e+00> : vector<16xf32>
    %206 = vector.multi_reduction <add>, %205, %cst_65 [1] : vector<16x16xf32> to vector<16xf32>
    %207 = vector.shape_cast %206 : vector<16xf32> to vector<16x1xf32>
    %208 = tpu.reciprocal %207 {approx = true} : vector<16x1xf32> -> vector<16x1xf32>
    %209 = vector.broadcast %208 : vector<16x1xf32> to vector<16x16xf32>
    %210 = arith.mulf %205, %209 : vector<16x16xf32>
    %211 = arith.truncf %210 : vector<16x16xf32> to vector<16x16xbf16>
    %212 = vector.extract_strided_slice %197 {offsets = [0, 0], sizes = [16, 32], strides = [1, 1]} : vector<16x128xbf16> to vector<16x32xbf16>
    %cst_66 = arith.constant dense<0.000000e+00> : vector<16x32xf32>
    %213 = tpu.matmul %211, %212, %cst_66 {dimension_numbers = #tpu.dot_dimension_numbers<[1], [0], [0], [1], [0, 0, 1, 1], [], []>} : vector<16x16xbf16>, vector<16x32xbf16>, vector<16x32xf32> -> vector<16x32xf32>
    %214 = vector.extract_strided_slice %195 {offsets = [0, 32], sizes = [16, 32], strides = [1, 1]} : vector<16x128xbf16> to vector<16x32xbf16>
    %215 = vector.extract_strided_slice %196 {offsets = [0, 32], sizes = [16, 32], strides = [1, 1]} : vector<16x128xbf16> to vector<16x32xbf16>
    %cst_67 = arith.constant dense<0.000000e+00> : vector<16x16xf32>
    %216 = tpu.matmul %214, %215, %cst_67 {dimension_numbers = #tpu.dot_dimension_numbers<[1], [1], [0], [0], [0, 0, 1, 0], [], []>} : vector<16x32xbf16>, vector<16x32xbf16>, vector<16x16xf32> -> vector<16x16xf32>
    %cst_68 = arith.constant dense<0xFF800000> : vector<16xf32>
    %217 = vector.multi_reduction <maximumf>, %216, %cst_68 [1] : vector<16x16xf32> to vector<16xf32>
    %218 = vector.shape_cast %217 : vector<16xf32> to vector<16x1xf32>
    %219 = vector.broadcast %218 : vector<16x1xf32> to vector<16x16xf32>
    %220 = arith.subf %216, %219 : vector<16x16xf32>
    %221 = math.exp %220 : vector<16x16xf32>
    %cst_69 = arith.constant dense<0.000000e+00> : vector<16xf32>
    %222 = vector.multi_reduction <add>, %221, %cst_69 [1] : vector<16x16xf32> to vector<16xf32>
    %223 = vector.shape_cast %222 : vector<16xf32> to vector<16x1xf32>
    %224 = tpu.reciprocal %223 {approx = true} : vector<16x1xf32> -> vector<16x1xf32>
    %225 = vector.broadcast %224 : vector<16x1xf32> to vector<16x16xf32>
    %226 = arith.mulf %221, %225 : vector<16x16xf32>
    %227 = arith.truncf %226 : vector<16x16xf32> to vector<16x16xbf16>
    %228 = vector.extract_strided_slice %197 {offsets = [0, 32], sizes = [16, 32], strides = [1, 1]} : vector<16x128xbf16> to vector<16x32xbf16>
    %cst_70 = arith.constant dense<0.000000e+00> : vector<16x32xf32>
    %229 = tpu.matmul %227, %228, %cst_70 {dimension_numbers = #tpu.dot_dimension_numbers<[1], [0], [0], [1], [0, 0, 1, 1], [], []>} : vector<16x16xbf16>, vector<16x32xbf16>, vector<16x32xf32> -> vector<16x32xf32>
    %230 = vector.extract_strided_slice %195 {offsets = [0, 64], sizes = [16, 32], strides = [1, 1]} : vector<16x128xbf16> to vector<16x32xbf16>
    %231 = vector.extract_strided_slice %196 {offsets = [0, 64], sizes = [16, 32], strides = [1, 1]} : vector<16x128xbf16> to vector<16x32xbf16>
    %cst_71 = arith.constant dense<0.000000e+00> : vector<16x16xf32>
    %232 = tpu.matmul %230, %231, %cst_71 {dimension_numbers = #tpu.dot_dimension_numbers<[1], [1], [0], [0], [0, 0, 1, 0], [], []>} : vector<16x32xbf16>, vector<16x32xbf16>, vector<16x16xf32> -> vector<16x16xf32>
    %cst_72 = arith.constant dense<0xFF800000> : vector<16xf32>
    %233 = vector.multi_reduction <maximumf>, %232, %cst_72 [1] : vector<16x16xf32> to vector<16xf32>
    %234 = vector.shape_cast %233 : vector<16xf32> to vector<16x1xf32>
    %235 = vector.broadcast %234 : vector<16x1xf32> to vector<16x16xf32>
    %236 = arith.subf %232, %235 : vector<16x16xf32>
    %237 = math.exp %236 : vector<16x16xf32>
    %cst_73 = arith.constant dense<0.000000e+00> : vector<16xf32>
    %238 = vector.multi_reduction <add>, %237, %cst_73 [1] : vector<16x16xf32> to vector<16xf32>
    %239 = vector.shape_cast %238 : vector<16xf32> to vector<16x1xf32>
    %240 = tpu.reciprocal %239 {approx = true} : vector<16x1xf32> -> vector<16x1xf32>
    %241 = vector.broadcast %240 : vector<16x1xf32> to vector<16x16xf32>
    %242 = arith.mulf %237, %241 : vector<16x16xf32>
    %243 = arith.truncf %242 : vector<16x16xf32> to vector<16x16xbf16>
    %244 = vector.extract_strided_slice %197 {offsets = [0, 64], sizes = [16, 32], strides = [1, 1]} : vector<16x128xbf16> to vector<16x32xbf16>
    %cst_74 = arith.constant dense<0.000000e+00> : vector<16x32xf32>
    %245 = tpu.matmul %243, %244, %cst_74 {dimension_numbers = #tpu.dot_dimension_numbers<[1], [0], [0], [1], [0, 0, 1, 1], [], []>} : vector<16x16xbf16>, vector<16x32xbf16>, vector<16x32xf32> -> vector<16x32xf32>
    %246 = vector.extract_strided_slice %195 {offsets = [0, 96], sizes = [16, 32], strides = [1, 1]} : vector<16x128xbf16> to vector<16x32xbf16>
    %247 = vector.extract_strided_slice %196 {offsets = [0, 96], sizes = [16, 32], strides = [1, 1]} : vector<16x128xbf16> to vector<16x32xbf16>
    %cst_75 = arith.constant dense<0.000000e+00> : vector<16x16xf32>
    %248 = tpu.matmul %246, %247, %cst_75 {dimension_numbers = #tpu.dot_dimension_numbers<[1], [1], [0], [0], [0, 0, 1, 0], [], []>} : vector<16x32xbf16>, vector<16x32xbf16>, vector<16x16xf32> -> vector<16x16xf32>
    %cst_76 = arith.constant dense<0xFF800000> : vector<16xf32>
    %249 = vector.multi_reduction <maximumf>, %248, %cst_76 [1] : vector<16x16xf32> to vector<16xf32>
    %250 = vector.shape_cast %249 : vector<16xf32> to vector<16x1xf32>
    %251 = vector.broadcast %250 : vector<16x1xf32> to vector<16x16xf32>
    %252 = arith.subf %248, %251 : vector<16x16xf32>
    %253 = math.exp %252 : vector<16x16xf32>
    %cst_77 = arith.constant dense<0.000000e+00> : vector<16xf32>
    %254 = vector.multi_reduction <add>, %253, %cst_77 [1] : vector<16x16xf32> to vector<16xf32>
    %255 = vector.shape_cast %254 : vector<16xf32> to vector<16x1xf32>
    %256 = tpu.reciprocal %255 {approx = true} : vector<16x1xf32> -> vector<16x1xf32>
    %257 = vector.broadcast %256 : vector<16x1xf32> to vector<16x16xf32>
    %258 = arith.mulf %253, %257 : vector<16x16xf32>
    %259 = arith.truncf %258 : vector<16x16xf32> to vector<16x16xbf16>
    %260 = vector.extract_strided_slice %197 {offsets = [0, 96], sizes = [16, 32], strides = [1, 1]} : vector<16x128xbf16> to vector<16x32xbf16>
    %cst_78 = arith.constant dense<0.000000e+00> : vector<16x32xf32>
    %261 = tpu.matmul %259, %260, %cst_78 {dimension_numbers = #tpu.dot_dimension_numbers<[1], [0], [0], [1], [0, 0, 1, 1], [], []>} : vector<16x16xbf16>, vector<16x32xbf16>, vector<16x32xf32> -> vector<16x32xf32>
    %262 = tpu.concatenate %213, %229, %245, %261 in 1 : vector<16x32xf32>, vector<16x32xf32>, vector<16x32xf32>, vector<16x32xf32> -> vector<16x128xf32>
    %263 = vector.extract_strided_slice %36 {offsets = [16, 384], sizes = [16, 128], strides = [1, 1]} : vector<32x512xf32> to vector<16x128xf32>
    %264 = vector.extract_strided_slice %191 {offsets = [16, 0], sizes = [16, 128], strides = [1, 1]} : vector<32x256xf32> to vector<16x128xf32>
    %265 = vector.extract_strided_slice %191 {offsets = [16, 128], sizes = [16, 128], strides = [1, 1]} : vector<32x256xf32> to vector<16x128xf32>
    %266 = arith.truncf %263 : vector<16x128xf32> to vector<16x128xbf16>
    %267 = arith.truncf %264 : vector<16x128xf32> to vector<16x128xbf16>
    %268 = arith.truncf %265 : vector<16x128xf32> to vector<16x128xbf16>
    %269 = vector.extract_strided_slice %266 {offsets = [0, 0], sizes = [16, 32], strides = [1, 1]} : vector<16x128xbf16> to vector<16x32xbf16>
    %270 = vector.extract_strided_slice %267 {offsets = [0, 0], sizes = [16, 32], strides = [1, 1]} : vector<16x128xbf16> to vector<16x32xbf16>
    %cst_79 = arith.constant dense<0.000000e+00> : vector<16x16xf32>
    %271 = tpu.matmul %269, %270, %cst_79 {dimension_numbers = #tpu.dot_dimension_numbers<[1], [1], [0], [0], [0, 0, 1, 0], [], []>} : vector<16x32xbf16>, vector<16x32xbf16>, vector<16x16xf32> -> vector<16x16xf32>
    %cst_80 = arith.constant dense<0xFF800000> : vector<16xf32>
    %272 = vector.multi_reduction <maximumf>, %271, %cst_80 [1] : vector<16x16xf32> to vector<16xf32>
    %273 = vector.shape_cast %272 : vector<16xf32> to vector<16x1xf32>
    %274 = vector.broadcast %273 : vector<16x1xf32> to vector<16x16xf32>
    %275 = arith.subf %271, %274 : vector<16x16xf32>
    %276 = math.exp %275 : vector<16x16xf32>
    %cst_81 = arith.constant dense<0.000000e+00> : vector<16xf32>
    %277 = vector.multi_reduction <add>, %276, %cst_81 [1] : vector<16x16xf32> to vector<16xf32>
    %278 = vector.shape_cast %277 : vector<16xf32> to vector<16x1xf32>
    %279 = tpu.reciprocal %278 {approx = true} : vector<16x1xf32> -> vector<16x1xf32>
    %280 = vector.broadcast %279 : vector<16x1xf32> to vector<16x16xf32>
    %281 = arith.mulf %276, %280 : vector<16x16xf32>
    %282 = arith.truncf %281 : vector<16x16xf32> to vector<16x16xbf16>
    %283 = vector.extract_strided_slice %268 {offsets = [0, 0], sizes = [16, 32], strides = [1, 1]} : vector<16x128xbf16> to vector<16x32xbf16>
    %cst_82 = arith.constant dense<0.000000e+00> : vector<16x32xf32>
    %284 = tpu.matmul %282, %283, %cst_82 {dimension_numbers = #tpu.dot_dimension_numbers<[1], [0], [0], [1], [0, 0, 1, 1], [], []>} : vector<16x16xbf16>, vector<16x32xbf16>, vector<16x32xf32> -> vector<16x32xf32>
    %285 = vector.extract_strided_slice %266 {offsets = [0, 32], sizes = [16, 32], strides = [1, 1]} : vector<16x128xbf16> to vector<16x32xbf16>
    %286 = vector.extract_strided_slice %267 {offsets = [0, 32], sizes = [16, 32], strides = [1, 1]} : vector<16x128xbf16> to vector<16x32xbf16>
    %cst_83 = arith.constant dense<0.000000e+00> : vector<16x16xf32>
    %287 = tpu.matmul %285, %286, %cst_83 {dimension_numbers = #tpu.dot_dimension_numbers<[1], [1], [0], [0], [0, 0, 1, 0], [], []>} : vector<16x32xbf16>, vector<16x32xbf16>, vector<16x16xf32> -> vector<16x16xf32>
    %cst_84 = arith.constant dense<0xFF800000> : vector<16xf32>
    %288 = vector.multi_reduction <maximumf>, %287, %cst_84 [1] : vector<16x16xf32> to vector<16xf32>
    %289 = vector.shape_cast %288 : vector<16xf32> to vector<16x1xf32>
    %290 = vector.broadcast %289 : vector<16x1xf32> to vector<16x16xf32>
    %291 = arith.subf %287, %290 : vector<16x16xf32>
    %292 = math.exp %291 : vector<16x16xf32>
    %cst_85 = arith.constant dense<0.000000e+00> : vector<16xf32>
    %293 = vector.multi_reduction <add>, %292, %cst_85 [1] : vector<16x16xf32> to vector<16xf32>
    %294 = vector.shape_cast %293 : vector<16xf32> to vector<16x1xf32>
    %295 = tpu.reciprocal %294 {approx = true} : vector<16x1xf32> -> vector<16x1xf32>
    %296 = vector.broadcast %295 : vector<16x1xf32> to vector<16x16xf32>
    %297 = arith.mulf %292, %296 : vector<16x16xf32>
    %298 = arith.truncf %297 : vector<16x16xf32> to vector<16x16xbf16>
    %299 = vector.extract_strided_slice %268 {offsets = [0, 32], sizes = [16, 32], strides = [1, 1]} : vector<16x128xbf16> to vector<16x32xbf16>
    %cst_86 = arith.constant dense<0.000000e+00> : vector<16x32xf32>
    %300 = tpu.matmul %298, %299, %cst_86 {dimension_numbers = #tpu.dot_dimension_numbers<[1], [0], [0], [1], [0, 0, 1, 1], [], []>} : vector<16x16xbf16>, vector<16x32xbf16>, vector<16x32xf32> -> vector<16x32xf32>
    %301 = vector.extract_strided_slice %266 {offsets = [0, 64], sizes = [16, 32], strides = [1, 1]} : vector<16x128xbf16> to vector<16x32xbf16>
    %302 = vector.extract_strided_slice %267 {offsets = [0, 64], sizes = [16, 32], strides = [1, 1]} : vector<16x128xbf16> to vector<16x32xbf16>
    %cst_87 = arith.constant dense<0.000000e+00> : vector<16x16xf32>
    %303 = tpu.matmul %301, %302, %cst_87 {dimension_numbers = #tpu.dot_dimension_numbers<[1], [1], [0], [0], [0, 0, 1, 0], [], []>} : vector<16x32xbf16>, vector<16x32xbf16>, vector<16x16xf32> -> vector<16x16xf32>
    %cst_88 = arith.constant dense<0xFF800000> : vector<16xf32>
    %304 = vector.multi_reduction <maximumf>, %303, %cst_88 [1] : vector<16x16xf32> to vector<16xf32>
    %305 = vector.shape_cast %304 : vector<16xf32> to vector<16x1xf32>
    %306 = vector.broadcast %305 : vector<16x1xf32> to vector<16x16xf32>
    %307 = arith.subf %303, %306 : vector<16x16xf32>
    %308 = math.exp %307 : vector<16x16xf32>
    %cst_89 = arith.constant dense<0.000000e+00> : vector<16xf32>
    %309 = vector.multi_reduction <add>, %308, %cst_89 [1] : vector<16x16xf32> to vector<16xf32>
    %310 = vector.shape_cast %309 : vector<16xf32> to vector<16x1xf32>
    %311 = tpu.reciprocal %310 {approx = true} : vector<16x1xf32> -> vector<16x1xf32>
    %312 = vector.broadcast %311 : vector<16x1xf32> to vector<16x16xf32>
    %313 = arith.mulf %308, %312 : vector<16x16xf32>
    %314 = arith.truncf %313 : vector<16x16xf32> to vector<16x16xbf16>
    %315 = vector.extract_strided_slice %268 {offsets = [0, 64], sizes = [16, 32], strides = [1, 1]} : vector<16x128xbf16> to vector<16x32xbf16>
    %cst_90 = arith.constant dense<0.000000e+00> : vector<16x32xf32>
    %316 = tpu.matmul %314, %315, %cst_90 {dimension_numbers = #tpu.dot_dimension_numbers<[1], [0], [0], [1], [0, 0, 1, 1], [], []>} : vector<16x16xbf16>, vector<16x32xbf16>, vector<16x32xf32> -> vector<16x32xf32>
    %317 = vector.extract_strided_slice %266 {offsets = [0, 96], sizes = [16, 32], strides = [1, 1]} : vector<16x128xbf16> to vector<16x32xbf16>
    %318 = vector.extract_strided_slice %267 {offsets = [0, 96], sizes = [16, 32], strides = [1, 1]} : vector<16x128xbf16> to vector<16x32xbf16>
    %cst_91 = arith.constant dense<0.000000e+00> : vector<16x16xf32>
    %319 = tpu.matmul %317, %318, %cst_91 {dimension_numbers = #tpu.dot_dimension_numbers<[1], [1], [0], [0], [0, 0, 1, 0], [], []>} : vector<16x32xbf16>, vector<16x32xbf16>, vector<16x16xf32> -> vector<16x16xf32>
    %cst_92 = arith.constant dense<0xFF800000> : vector<16xf32>
    %320 = vector.multi_reduction <maximumf>, %319, %cst_92 [1] : vector<16x16xf32> to vector<16xf32>
    %321 = vector.shape_cast %320 : vector<16xf32> to vector<16x1xf32>
    %322 = vector.broadcast %321 : vector<16x1xf32> to vector<16x16xf32>
    %323 = arith.subf %319, %322 : vector<16x16xf32>
    %324 = math.exp %323 : vector<16x16xf32>
    %cst_93 = arith.constant dense<0.000000e+00> : vector<16xf32>
    %325 = vector.multi_reduction <add>, %324, %cst_93 [1] : vector<16x16xf32> to vector<16xf32>
    %326 = vector.shape_cast %325 : vector<16xf32> to vector<16x1xf32>
    %327 = tpu.reciprocal %326 {approx = true} : vector<16x1xf32> -> vector<16x1xf32>
    %328 = vector.broadcast %327 : vector<16x1xf32> to vector<16x16xf32>
    %329 = arith.mulf %324, %328 : vector<16x16xf32>
    %330 = arith.truncf %329 : vector<16x16xf32> to vector<16x16xbf16>
    %331 = vector.extract_strided_slice %268 {offsets = [0, 96], sizes = [16, 32], strides = [1, 1]} : vector<16x128xbf16> to vector<16x32xbf16>
    %cst_94 = arith.constant dense<0.000000e+00> : vector<16x32xf32>
    %332 = tpu.matmul %330, %331, %cst_94 {dimension_numbers = #tpu.dot_dimension_numbers<[1], [0], [0], [1], [0, 0, 1, 1], [], []>} : vector<16x16xbf16>, vector<16x32xbf16>, vector<16x32xf32> -> vector<16x32xf32>
    %333 = tpu.concatenate %284, %300, %316, %332 in 1 : vector<16x32xf32>, vector<16x32xf32>, vector<16x32xf32>, vector<16x32xf32> -> vector<16x128xf32>
    %334 = tpu.concatenate %262, %333 in 0 : vector<16x128xf32>, vector<16x128xf32> -> vector<32x128xf32>
    %335 = arith.truncf %334 : vector<32x128xf32> to vector<32x128xbf16>
    %c0_95 = arith.constant 0 : index
    %c896 = arith.constant 896 : index
    %336 = vector.load %arg4[%c0_95, %c896] : memref<128x1280xbf16, #tpu.memory_space<vmem>>, vector<128x128xbf16>
    %cst_96 = arith.constant dense<0.000000e+00> : vector<32x128xf32>
    %337 = tpu.matmul %335, %336, %cst_96 {dimension_numbers = #tpu.dot_dimension_numbers<[1], [0], [0], [1], [0, 0, 1, 1], [], []>} : vector<32x128xbf16>, vector<128x128xbf16>, vector<32x128xf32> -> vector<32x128xf32>
    %c0_97 = arith.constant 0 : index
    %c1152 = arith.constant 1152 : index
    %338 = vector.load %arg5[%c0_97, %c1152] : memref<1x2048xf32, #tpu.memory_space<vmem>>, vector<1x128xf32>
    %339 = vector.broadcast %338 : vector<1x128xf32> to vector<32x128xf32>
    %340 = arith.addf %337, %339 : vector<32x128xf32>
    %341 = vector.extract_strided_slice %340 {offsets = [0, 0], sizes = [8, 128], strides = [1, 1]} : vector<32x128xf32> to vector<8x128xf32>
    %cst_98 = arith.constant dense<0.000000e+00> : vector<128xf32>
    %342 = vector.multi_reduction <add>, %341, %cst_98 [0] : vector<8x128xf32> to vector<128xf32>
    %343 = vector.shape_cast %342 : vector<128xf32> to vector<1x128xf32>
    %cst_99 = arith.constant 8.000000e+00 : f32
    %344 = vector.broadcast %cst_99 : f32 to vector<1x128xf32>
    %345 = arith.divf %343, %344 : vector<1x128xf32>
    %346 = vector.extract_strided_slice %340 {offsets = [8, 0], sizes = [8, 128], strides = [1, 1]} : vector<32x128xf32> to vector<8x128xf32>
    %cst_100 = arith.constant dense<0.000000e+00> : vector<128xf32>
    %347 = vector.multi_reduction <add>, %346, %cst_100 [0] : vector<8x128xf32> to vector<128xf32>
    %348 = vector.shape_cast %347 : vector<128xf32> to vector<1x128xf32>
    %cst_101 = arith.constant 8.000000e+00 : f32
    %349 = vector.broadcast %cst_101 : f32 to vector<1x128xf32>
    %350 = arith.divf %348, %349 : vector<1x128xf32>
    %351 = vector.extract_strided_slice %340 {offsets = [16, 0], sizes = [8, 128], strides = [1, 1]} : vector<32x128xf32> to vector<8x128xf32>
    %cst_102 = arith.constant dense<0.000000e+00> : vector<128xf32>
    %352 = vector.multi_reduction <add>, %351, %cst_102 [0] : vector<8x128xf32> to vector<128xf32>
    %353 = vector.shape_cast %352 : vector<128xf32> to vector<1x128xf32>
    %cst_103 = arith.constant 8.000000e+00 : f32
    %354 = vector.broadcast %cst_103 : f32 to vector<1x128xf32>
    %355 = arith.divf %353, %354 : vector<1x128xf32>
    %356 = vector.extract_strided_slice %340 {offsets = [24, 0], sizes = [8, 128], strides = [1, 1]} : vector<32x128xf32> to vector<8x128xf32>
    %cst_104 = arith.constant dense<0.000000e+00> : vector<128xf32>
    %357 = vector.multi_reduction <add>, %356, %cst_104 [0] : vector<8x128xf32> to vector<128xf32>
    %358 = vector.shape_cast %357 : vector<128xf32> to vector<1x128xf32>
    %cst_105 = arith.constant 8.000000e+00 : f32
    %359 = vector.broadcast %cst_105 : f32 to vector<1x128xf32>
    %360 = arith.divf %358, %359 : vector<1x128xf32>
    %361 = tpu.concatenate %345, %355, %350, %360 in 0 : vector<1x128xf32>, vector<1x128xf32>, vector<1x128xf32>, vector<1x128xf32> -> vector<4x128xf32>
    %362 = arith.truncf %361 : vector<4x128xf32> to vector<4x128xbf16>
    %c0_106 = arith.constant 0 : index
    %c1024_107 = arith.constant 1024 : index
    %363 = vector.load %arg4[%c0_106, %c1024_107] : memref<128x1280xbf16, #tpu.memory_space<vmem>>, vector<128x256xbf16>
    %cst_108 = arith.constant dense<0.000000e+00> : vector<4x256xf32>
    %364 = tpu.matmul %362, %363, %cst_108 {dimension_numbers = #tpu.dot_dimension_numbers<[1], [0], [0], [1], [0, 0, 1, 1], [], []>} : vector<4x128xbf16>, vector<128x256xbf16>, vector<4x256xf32> -> vector<4x256xf32>
    %c0_109 = arith.constant 0 : index
    %c1280 = arith.constant 1280 : index
    %365 = vector.load %arg5[%c0_109, %c1280] : memref<1x2048xf32, #tpu.memory_space<vmem>>, vector<1x256xf32>
    %366 = vector.broadcast %365 : vector<1x256xf32> to vector<4x256xf32>
    %367 = arith.addf %364, %366 : vector<4x256xf32>
    %368 = tpu.iota {dimensions = array<i32: 0>} : vector<4x128xi32>
    %c2_i32 = arith.constant 2 : i32
    %369 = vector.broadcast %c2_i32 : i32 to vector<4x128xi32>
    %370 = arith.cmpi slt, %368, %369 : vector<4x128xi32>
    %371 = vector.extract_strided_slice %367 {offsets = [0, 0], sizes = [4, 128], strides = [1, 1]} : vector<4x256xf32> to vector<4x128xf32>
    %372 = vector.extract_strided_slice %367 {offsets = [0, 128], sizes = [4, 128], strides = [1, 1]} : vector<4x256xf32> to vector<4x128xf32>
    %373 = arith.select %370, %371, %372 : vector<4x128xi1>, vector<4x128xf32>
    %cst_110 = arith.constant 0.000000e+00 : f32
    %374 = vector.broadcast %cst_110 : f32 to vector<4x128xf32>
    %375 = arith.maximumf %373, %374 : vector<4x128xf32>
    %c0_111 = arith.constant 0 : index
    %c1536 = arith.constant 1536 : index
    %376 = vector.load %arg5[%c0_111, %c1536] : memref<1x2048xf32, #tpu.memory_space<vmem>>, vector<1x128xf32>
    %c0_112 = arith.constant 0 : index
    %c1792 = arith.constant 1792 : index
    %377 = vector.load %arg5[%c0_112, %c1792] : memref<1x2048xf32, #tpu.memory_space<vmem>>, vector<1x128xf32>
    %378 = tpu.concatenate %376, %376, %377, %377 in 0 : vector<1x128xf32>, vector<1x128xf32>, vector<1x128xf32>, vector<1x128xf32> -> vector<4x128xf32>
    %c0_113 = arith.constant 0 : index
    %c1664 = arith.constant 1664 : index
    %379 = vector.load %arg5[%c0_113, %c1664] : memref<1x2048xf32, #tpu.memory_space<vmem>>, vector<1x128xf32>
    %c0_114 = arith.constant 0 : index
    %c1920 = arith.constant 1920 : index
    %380 = vector.load %arg5[%c0_114, %c1920] : memref<1x2048xf32, #tpu.memory_space<vmem>>, vector<1x128xf32>
    %381 = tpu.concatenate %379, %379, %380, %380 in 0 : vector<1x128xf32>, vector<1x128xf32>, vector<1x128xf32>, vector<1x128xf32> -> vector<4x128xf32>
    %cst_115 = arith.constant dense<0.000000e+00> : vector<4xf32>
    %382 = vector.multi_reduction <add>, %375, %cst_115 [1] : vector<4x128xf32> to vector<4xf32>
    %383 = vector.shape_cast %382 : vector<4xf32> to vector<4x1xf32>
    %cst_116 = arith.constant 1.280000e+02 : f32
    %384 = vector.broadcast %cst_116 : f32 to vector<4x1xf32>
    %385 = arith.divf %383, %384 : vector<4x1xf32>
    %386 = vector.broadcast %385 : vector<4x1xf32> to vector<4x128xf32>
    %387 = arith.subf %375, %386 : vector<4x128xf32>
    %388 = arith.mulf %387, %387 : vector<4x128xf32>
    %cst_117 = arith.constant dense<0.000000e+00> : vector<4xf32>
    %389 = vector.multi_reduction <add>, %388, %cst_117 [1] : vector<4x128xf32> to vector<4xf32>
    %390 = vector.shape_cast %389 : vector<4xf32> to vector<4x1xf32>
    %cst_118 = arith.constant 1.280000e+02 : f32
    %391 = vector.broadcast %cst_118 : f32 to vector<4x1xf32>
    %392 = arith.divf %390, %391 : vector<4x1xf32>
    %393 = vector.broadcast %385 : vector<4x1xf32> to vector<4x128xf32>
    %394 = arith.subf %375, %393 : vector<4x128xf32>
    %cst_119 = arith.constant 9.99999974E-6 : f32
    %395 = vector.broadcast %cst_119 : f32 to vector<4x1xf32>
    %396 = arith.addf %392, %395 : vector<4x1xf32>
    %397 = math.rsqrt %396 : vector<4x1xf32>
    %398 = vector.broadcast %397 : vector<4x1xf32> to vector<4x128xf32>
    %399 = arith.mulf %394, %398 : vector<4x128xf32>
    %400 = arith.mulf %399, %378 : vector<4x128xf32>
    %401 = arith.addf %400, %381 : vector<4x128xf32>
    %c0_120 = arith.constant 0 : index
    %c0_121 = arith.constant 0 : index
    %402 = vector.load %arg6[%c0_120, %c0_121] : memref<4x128xf32, #tpu.memory_space<vmem>>, vector<4x128xf32>
    tpu.vector_store %arg6[%c0_120, %c0_121], %401 {strides = array<i32>} : memref<4x128xf32, #tpu.memory_space<vmem>>, vector<4x128xf32>,
    return
  }
  func.func @transform_0(%arg0: i32) -> (i32, i32, i32) {
    %c0_i32 = arith.constant 0 : i32
    %c0_i32_0 = arith.constant 0 : i32
    %c0_i32_1 = arith.constant 0 : i32
    %c0_i32_2 = arith.constant 0 : i32
    return %c0_i32, %c0_i32_0, %c0_i32_1 : i32, i32, i32
  }
  func.func @transform_1(%arg0: i32) -> (i32, i32, i32) {
    %c0_i32 = arith.constant 0 : i32
    %c0_i32_0 = arith.constant 0 : i32
    %c0_i32_1 = arith.constant 0 : i32
    %c0_i32_2 = arith.constant 0 : i32
    return %c0_i32, %c0_i32_0, %c0_i32_1 : i32, i32, i32
  }
  func.func @transform_2(%arg0: i32) -> (i32, i32) {
    %c0_i32 = arith.constant 0 : i32
    %c0_i32_0 = arith.constant 0 : i32
    %c0_i32_1 = arith.constant 0 : i32
    return %c0_i32, %c0_i32_0 : i32, i32
  }
  func.func @transform_3(%arg0: i32) -> (i32, i32) {
    %c0_i32 = arith.constant 0 : i32
    %c0_i32_0 = arith.constant 0 : i32
    %c0_i32_1 = arith.constant 0 : i32
    return %c0_i32, %c0_i32_0 : i32, i32
  }
  func.func @transform_4(%arg0: i32) -> (i32, i32) {
    %c0_i32 = arith.constant 0 : i32
    %c0_i32_0 = arith.constant 0 : i32
    %c0_i32_1 = arith.constant 0 : i32
    return %c0_i32, %c0_i32_0 : i32, i32
  }
  func.func @transform_5(%arg0: i32) -> (i32, i32) {
    %c0_i32 = arith.constant 0 : i32
    %c0_i32_0 = arith.constant 0 : i32
    %c0_i32_1 = arith.constant 0 : i32
    return %c0_i32, %c0_i32_0 : i32, i32
  }
}

</mosaic_0001>

<llo_original>
// kernel: event_aware_visual_forward.1
$region0: #{event_aware_visual_forward.1}
  #allocation0 [shape = 'u32[]', space=smem, size = 0x4, offset = 0x4, fixed_abs, tag = 'smem constant byte address 0x4 - core index']
  #allocation1 [shape = 'u32[144,128]{1,0:T(1,128)}', space=vmem, size = 0x12000, scoped, tag = 'internal scratch']
  %s0 = inlined_call_operand.hbm [shape: f32[2,8,512], index: 0, kind: input, shape index: {}]
  %s1 = inlined_call_operand.hbm [shape: f32[2,8,512], index: 1, kind: input, shape index: {}]
  %s2 = inlined_call_operand.hbm [shape: bf16[512,256], index: 2, kind: input, shape index: {}]
  %s3 = inlined_call_operand.hbm [shape: bf16[128,1280], index: 3, kind: input, shape index: {}]
  %s4 = inlined_call_operand.hbm [shape: f32[1,2048], index: 4, kind: input, shape index: {}]
  %s5 = inlined_call_operand.vmem [shape: f32[4,128], index: 5, kind: output, shape index: {}]
  %s6 = sld [smem:[#allocation0]]
  $region50: #{event_aware_visual_forward.1} parent=0
    _
  %s8 = ssub.s32 1, %s6
  %s9 = scalar_select 0, %s8, %s6
  $region1: #{event_aware_visual_forward.1} parent=0
    #allocation2 [shape = 'u8[32768]{0}', space=vmem, size = 0x8000, scoped, tag = 'input window, operand 0, single buffered']
    #allocation3 [shape = 's32[1]{0}', space=sflag, size = 0x4, scoped, tag = 'scoped memory for event_aware_visual_forward.1']
    #allocation4 [shape = 'u8[32768]{0}', space=vmem, size = 0x8000, scoped, tag = 'input window, operand 1, single buffered']
    #allocation5 [shape = 's32[1]{0}', space=sflag, size = 0x4, scoped, tag = 'scoped memory for event_aware_visual_forward.1']
    #allocation6 [shape = 'u8[262144]{0}', space=vmem, size = 0x40000, scoped, tag = 'input window, operand 2, single buffered']
    #allocation7 [shape = 'u8[327680]{0}', space=vmem, size = 0x50000, scoped, tag = 'input window, operand 3, single buffered']
    #allocation8 [shape = 's32[1]{0}', space=sflag, size = 0x4, scoped, tag = 'scoped memory for event_aware_visual_forward.1']
    #allocation9 [shape = 'u8[8192]{0}', space=vmem, size = 0x2000, scoped, tag = 'input window, operand 4, single buffered']
    %10 = vsyncpa [#allocation3], 0
    %11 = vsyncpa [#allocation5], 0
    %12 = vsyncpa [#allocation8], 0
    // Predicated region
    $region2: #{event_aware_visual_forward.1} parent=1 // pred_check
      _
    $region3: #{event_aware_visual_forward.1} parent=1 // pred_check_branch
      %14 = sbr.rel (0) target = $region5
    $region4: #{event_aware_visual_forward.1} parent=1 // pred_region
      %s16 = ssub.s32 1024, 1024
      %17 = vsyncadd [#allocation3], %s16
      %s18 = sshll.u32 [#allocation2], 4
      %s19 = int_to_ptr.vmem [resolvable:$true] %s18
      %24 = dma.hbm_to_vmem [thread:$0]  %s0, 1024, %s19, [#allocation3], 512, 512, 32
    $region5: #{event_aware_visual_forward.1} parent=1 // pred_fallthru
      _
    // Predicated region
    $region6: #{event_aware_visual_forward.1} parent=1 // pred_check
      _
    $region7: #{event_aware_visual_forward.1} parent=1 // pred_check_branch
      %26 = sbr.rel (0) target = $region9
    $region8: #{event_aware_visual_forward.1} parent=1 // pred_region
      %s28 = ssub.s32 1024, 1024
      %29 = vsyncadd [#allocation5], %s28
      %s30 = sshll.u32 [#allocation4], 4
      %s31 = int_to_ptr.vmem [resolvable:$true] %s30
      %36 = dma.hbm_to_vmem [thread:$0]  %s1, 1024, %s31, [#allocation5], 512, 512, 32
    $region9: #{event_aware_visual_forward.1} parent=1 // pred_fallthru
      _
    // Predicated region
    $region10: #{event_aware_visual_forward.1} parent=1 // pred_check
      _
    $region11: #{event_aware_visual_forward.1} parent=1 // pred_check_branch
      %38 = sbr.rel (0) target = $region13
    $region12: #{event_aware_visual_forward.1} parent=1 // pred_region
      %s40 = ssub.s32 8192, 8192
      %41 = vsyncadd [#allocation5], %s40
      %s42 = sshll.u32 [#allocation6], 4
      %s43 = int_to_ptr.vmem [resolvable:$true] %s42
      %48 = dma.hbm_to_vmem [thread:$0]  %s2, 8192, %s43, [#allocation5], 128, 128, 8
    $region13: #{event_aware_visual_forward.1} parent=1 // pred_fallthru
      _
    // Predicated region
    $region14: #{event_aware_visual_forward.1} parent=1 // pred_check
      _
    $region15: #{event_aware_visual_forward.1} parent=1 // pred_check_branch
      %50 = sbr.rel (0) target = $region17
    $region16: #{event_aware_visual_forward.1} parent=1 // pred_region
      %s52 = ssub.s32 10240, 10240
      %53 = vsyncadd [#allocation8], %s52
      %s54 = sshll.u32 [#allocation7], 4
      %s55 = int_to_ptr.vmem [resolvable:$true] %s54
      %60 = dma.hbm_to_vmem [thread:$0]  %s3, 10240, %s55, [#allocation8], 640, 640, 40
    $region17: #{event_aware_visual_forward.1} parent=1 // pred_fallthru
      _
    // Predicated region
    $region18: #{event_aware_visual_forward.1} parent=1 // pred_check
      _
    $region19: #{event_aware_visual_forward.1} parent=1 // pred_check_branch
      %62 = sbr.rel (0) target = $region21
    $region20: #{event_aware_visual_forward.1} parent=1 // pred_region
      %s64 = ssub.s32 256, 256
      %65 = vsyncadd [#allocation8], %s64
      %s67 = sshll.u32 [#allocation9], 4
      %s68 = int_to_ptr.vmem [resolvable:$true] %s67
      %70 = dma.hbm_to_vmem [thread:$0]  %s4, 256, %s68, [#allocation8]
    $region21: #{event_aware_visual_forward.1} parent=1 // pred_fallthru
      _
    // Predicated region
    $region22: #{event_aware_visual_forward.1} parent=1 // pred_check
      _
    $region23: #{event_aware_visual_forward.1} parent=1 // pred_check_branch
      %72 = sbr.rel (0) target = $region25
    $region24: #{event_aware_visual_forward.1} parent=1 // pred_region
      %73 = dma.done [#allocation3], 1024
    $region25: #{event_aware_visual_forward.1} parent=1 // pred_fallthru
      _
    // Predicated region
    $region26: #{event_aware_visual_forward.1} parent=1 // pred_check
      _
    $region27: #{event_aware_visual_forward.1} parent=1 // pred_check_branch
      %75 = sbr.rel (0) target = $region29
    $region28: #{event_aware_visual_forward.1} parent=1 // pred_region
      %76 = dma.done [#allocation5], 1024
    $region29: #{event_aware_visual_forward.1} parent=1 // pred_fallthru
      _
    // Predicated region
    $region30: #{event_aware_visual_forward.1} parent=1 // pred_check
      _
    $region31: #{event_aware_visual_forward.1} parent=1 // pred_check_branch
      %78 = sbr.rel (0) target = $region33
    $region32: #{event_aware_visual_forward.1} parent=1 // pred_region
      %79 = dma.done [#allocation5], 8192
    $region33: #{event_aware_visual_forward.1} parent=1 // pred_fallthru
      _
    // Predicated region
    $region34: #{event_aware_visual_forward.1} parent=1 // pred_check
      _
    $region35: #{event_aware_visual_forward.1} parent=1 // pred_check_branch
      %81 = sbr.rel (0) target = $region37
    $region36: #{event_aware_visual_forward.1} parent=1 // pred_region
      %82 = dma.done [#allocation8], 10240
    $region37: #{event_aware_visual_forward.1} parent=1 // pred_fallthru
      _
    // Predicated region
    $region38: #{event_aware_visual_forward.1} parent=1 // pred_check
      _
    $region39: #{event_aware_visual_forward.1} parent=1 // pred_check_branch
      %84 = sbr.rel (0) target = $region41
    $region40: #{event_aware_visual_forward.1} parent=1 // pred_region
      %85 = dma.done [#allocation8], 256
    $region41: #{event_aware_visual_forward.1} parent=1 // pred_fallthru
      _
    %v87 = vld [vmem:[#allocation2] sm:$0xff]
    %v88 = vld [vmem:[#allocation2 + $0x8] sm:$0xff]
    %v89 = vld [vmem:[#allocation2 + $0x10] sm:$0xff]
    %v90 = vld [vmem:[#allocation2 + $0x18] sm:$0xff]
    %s91 = scalar_lea.vmem [#allocation2], 32
    %v92 = vld [vmem:[%s91] sm:$0xff]
    %v93 = vld [vmem:[%s91 + $0x8] sm:$0xff]
    %v94 = vld [vmem:[%s91 + $0x10] sm:$0xff]
    %v95 = vld [vmem:[%s91 + $0x18] sm:$0xff]
    %v96 = vpack.c.bf16 %v92, %v87
    %v97 = vpack.c.bf16 %v93, %v88
    %v98 = vpack.c.bf16 %v94, %v89
    %v99 = vpack.c.bf16 %v95, %v90
    %v100 = vld [vmem:[#allocation4] sm:$0xff]
    %v101 = vld [vmem:[#allocation4 + $0x8] sm:$0xff]
    %v102 = vld [vmem:[#allocation4 + $0x10] sm:$0xff]
    %v103 = vld [vmem:[#allocation4 + $0x18] sm:$0xff]
    %s104 = scalar_lea.vmem [#allocation4], 32
    %v105 = vld [vmem:[%s104] sm:$0xff]
    %v106 = vld [vmem:[%s104 + $0x8] sm:$0xff]
    %v107 = vld [vmem:[%s104 + $0x10] sm:$0xff]
    %v108 = vld [vmem:[%s104 + $0x18] sm:$0xff]
    %v109 = vpack.c.bf16 %v105, %v100
    %v110 = vpack.c.bf16 %v106, %v101
    %v111 = vpack.c.bf16 %v107, %v102
    %v112 = vpack.c.bf16 %v108, %v103
    %v113 = vld [vmem:[#allocation6] sm:$0xf]
    %v114 = vld [vmem:[#allocation6 + $0x8] sm:$0xf]
    %v115 = vld [vmem:[#allocation6 + $0x10] sm:$0xf]
    %v116 = vld [vmem:[#allocation6 + $0x18] sm:$0xf]
    %v117 = vld [vmem:[#allocation6 + $0x20] sm:$0xf]
    %v118 = vld [vmem:[#allocation6 + $0x28] sm:$0xf]
    %v119 = vld [vmem:[#allocation6 + $0x30] sm:$0xf]
    %v120 = vld [vmem:[#allocation6 + $0x38] sm:$0xf]
    %v121 = vld [vmem:[#allocation6 + $0x40] sm:$0xf]
    %v122 = vld [vmem:[#allocation6 + $0x48] sm:$0xf]
    %v123 = vld [vmem:[#allocation6 + $0x50] sm:$0xf]
    %v124 = vld [vmem:[#allocation6 + $0x58] sm:$0xf]
    %v125 = vld [vmem:[#allocation6 + $0x60] sm:$0xf]
    %v126 = vld [vmem:[#allocation6 + $0x68] sm:$0xf]
    %v127 = vld [vmem:[#allocation6 + $0x70] sm:$0xf]
    %v128 = vld [vmem:[#allocation6 + $0x78] sm:$0xf]
    %v129 = vld [vmem:[#allocation6 + $0x80] sm:$0xf]
    %v130 = vld [vmem:[#allocation6 + $0x88] sm:$0xf]
    %v131 = vld [vmem:[#allocation6 + $0x90] sm:$0xf]
    %v132 = vld [vmem:[#allocation6 + $0x98] sm:$0xf]
    %v133 = vld [vmem:[#allocation6 + $0xa0] sm:$0xf]
    %v134 = vld [vmem:[#allocation6 + $0xa8] sm:$0xf]
    %v135 = vld [vmem:[#allocation6 + $0xb0] sm:$0xf]
    %v136 = vld [vmem:[#allocation6 + $0xb8] sm:$0xf]
    %v137 = vld [vmem:[#allocation6 + $0xc0] sm:$0xf]
    %v138 = vld [vmem:[#allocation6 + $0xc8] sm:$0xf]
    %v139 = vld [vmem:[#allocation6 + $0xd0] sm:$0xf]
    %v140 = vld [vmem:[#allocation6 + $0xd8] sm:$0xf]
    %v141 = vld [vmem:[#allocation6 + $0xe0] sm:$0xf]
    %v142 = vld [vmem:[#allocation6 + $0xe8] sm:$0xf]
    %v143 = vld [vmem:[#allocation6 + $0xf0] sm:$0xf]
    %v144 = vld [vmem:[#allocation6 + $0xf8] sm:$0xf]
    %v145 = vld [vmem:[#allocation6 + $0x100] sm:$0xf]
    %v146 = vld [vmem:[#allocation6 + $0x108] sm:$0xf]
    %v147 = vld [vmem:[#allocation6 + $0x110] sm:$0xf]
    %v148 = vld [vmem:[#allocation6 + $0x118] sm:$0xf]
    %v149 = vld [vmem:[#allocation6 + $0x120] sm:$0xf]
    %v150 = vld [vmem:[#allocation6 + $0x128] sm:$0xf]
    %v151 = vld [vmem:[#allocation6 + $0x130] sm:$0xf]
    %v152 = vld [vmem:[#allocation6 + $0x138] sm:$0xf]
    %v153 = vld [vmem:[#allocation6 + $0x140] sm:$0xf]
    %v154 = vld [vmem:[#allocation6 + $0x148] sm:$0xf]
    %v155 = vld [vmem:[#allocation6 + $0x150] sm:$0xf]
    %v156 = vld [vmem:[#allocation6 + $0x158] sm:$0xf]
    %v157 = vld [vmem:[#allocation6 + $0x160] sm:$0xf]
    %v158 = vld [vmem:[#allocation6 + $0x168] sm:$0xf]
    %v159 = vld [vmem:[#allocation6 + $0x170] sm:$0xf]
    %v160 = vld [vmem:[#allocation6 + $0x178] sm:$0xf]
    %v161 = vld [vmem:[#allocation6 + $0x180] sm:$0xf]
    %v162 = vld [vmem:[#allocation6 + $0x188] sm:$0xf]
    %v163 = vld [vmem:[#allocation6 + $0x190] sm:$0xf]
    %v164 = vld [vmem:[#allocation6 + $0x198] sm:$0xf]
    %v165 = vld [vmem:[#allocation6 + $0x1a0] sm:$0xf]
    %v166 = vld [vmem:[#allocation6 + $0x1a8] sm:$0xf]
    %v167 = vld [vmem:[#allocation6 + $0x1b0] sm:$0xf]
    %v168 = vld [vmem:[#allocation6 + $0x1b8] sm:$0xf]
    %v169 = vld [vmem:[#allocation6 + $0x1c0] sm:$0xf]
    %v170 = vld [vmem:[#allocation6 + $0x1c8] sm:$0xf]
    %v171 = vld [vmem:[#allocation6 + $0x1d0] sm:$0xf]
    %v172 = vld [vmem:[#allocation6 + $0x1d8] sm:$0xf]
    %v173 = vld [vmem:[#allocation6 + $0x1e0] sm:$0xf]
    %v174 = vld [vmem:[#allocation6 + $0x1e8] sm:$0xf]
    %v175 = vld [vmem:[#allocation6 + $0x1f0] sm:$0xf]
    %v176 = vld [vmem:[#allocation6 + $0x1f8] sm:$0xf]
    %v177 = vld [vmem:[#allocation9] sm:$0x1]
    %v179 = vlaneseq
    %v180 = vshrl.u32 %v179, 7
    %v181 = vsub.s32 0, %v180
    %v182 = vrot.slane %v177, %v181
    %v248 = vunpack.c.l.b16 %v113
    %v249 = vunpack.c.l.b16 %v114
    %v250 = vunpack.c.l.b16 %v115
    %v251 = vunpack.c.l.b16 %v116
    %v252 = vunpack.c.l.b16 %v117
    %v253 = vunpack.c.l.b16 %v118
    %v254 = vunpack.c.l.b16 %v119
    %v255 = vunpack.c.l.b16 %v120
    %v256 = vunpack.c.l.b16 %v121
    %v257 = vunpack.c.l.b16 %v122
    %v258 = vunpack.c.l.b16 %v123
    %v259 = vunpack.c.l.b16 %v124
    %v260 = vunpack.c.l.b16 %v125
    %v261 = vunpack.c.l.b16 %v126
    %v262 = vunpack.c.l.b16 %v127
    %v263 = vunpack.c.l.b16 %v128
    %v264 = vunpack.c.l.b16 %v129
    %v265 = vunpack.c.l.b16 %v130
    %v266 = vunpack.c.l.b16 %v131
    %v267 = vunpack.c.l.b16 %v132
    %v268 = vunpack.c.l.b16 %v133
    %v269 = vunpack.c.l.b16 %v134
    %v270 = vunpack.c.l.b16 %v135
    %v271 = vunpack.c.l.b16 %v136
    %v272 = vunpack.c.l.b16 %v137
    %v273 = vunpack.c.l.b16 %v138
    %v274 = vunpack.c.l.b16 %v139
    %v275 = vunpack.c.l.b16 %v140
    %v276 = vunpack.c.l.b16 %v141
    %v277 = vunpack.c.l.b16 %v142
    %v278 = vunpack.c.l.b16 %v143
    %v279 = vunpack.c.l.b16 %v144
    %v280 = vunpack.c.l.b16 %v145
    %v281 = vunpack.c.l.b16 %v146
    %v282 = vunpack.c.l.b16 %v147
    %v283 = vunpack.c.l.b16 %v148
    %v284 = vunpack.c.l.b16 %v149
    %v285 = vunpack.c.l.b16 %v150
    %v286 = vunpack.c.l.b16 %v151
    %v287 = vunpack.c.l.b16 %v152
    %v288 = vunpack.c.l.b16 %v153
    %v289 = vunpack.c.l.b16 %v154
    %v290 = vunpack.c.l.b16 %v155
    %v291 = vunpack.c.l.b16 %v156
    %v292 = vunpack.c.l.b16 %v157
    %v293 = vunpack.c.l.b16 %v158
    %v294 = vunpack.c.l.b16 %v159
    %v295 = vunpack.c.l.b16 %v160
    %v296 = vunpack.c.l.b16 %v161
    %v297 = vunpack.c.l.b16 %v162
    %v298 = vunpack.c.l.b16 %v163
    %v299 = vunpack.c.l.b16 %v164
    %v300 = vunpack.c.l.b16 %v165
    %v301 = vunpack.c.l.b16 %v166
    %v302 = vunpack.c.l.b16 %v167
    %v303 = vunpack.c.l.b16 %v168
    %v304 = vunpack.c.l.b16 %v169
    %v305 = vunpack.c.l.b16 %v170
    %v306 = vunpack.c.l.b16 %v171
    %v307 = vunpack.c.l.b16 %v172
    %v308 = vunpack.c.l.b16 %v173
    %v309 = vunpack.c.l.b16 %v174
    %v310 = vunpack.c.l.b16 %v175
    %v311 = vunpack.c.l.b16 %v176
    %v312 = vpack.c.b16 %v249, %v248
    %v313 = vpack.c.b16 %v251, %v250
    %v314 = vpack.c.b16 %v253, %v252
    %v315 = vpack.c.b16 %v255, %v254
    %v316 = vpack.c.b16 %v257, %v256
    %v317 = vpack.c.b16 %v259, %v258
    %v318 = vpack.c.b16 %v261, %v260
    %v319 = vpack.c.b16 %v263, %v262
    %v320 = vpack.c.b16 %v265, %v264
    %v321 = vpack.c.b16 %v267, %v266
    %v322 = vpack.c.b16 %v269, %v268
    %v323 = vpack.c.b16 %v271, %v270
    %v324 = vpack.c.b16 %v273, %v272
    %v325 = vpack.c.b16 %v275, %v274
    %v326 = vpack.c.b16 %v277, %v276
    %v327 = vpack.c.b16 %v279, %v278
    %v328 = vpack.c.b16 %v281, %v280
    %v329 = vpack.c.b16 %v283, %v282
    %v330 = vpack.c.b16 %v285, %v284
    %v331 = vpack.c.b16 %v287, %v286
    %v332 = vpack.c.b16 %v289, %v288
    %v333 = vpack.c.b16 %v291, %v290
    %v334 = vpack.c.b16 %v293, %v292
    %v335 = vpack.c.b16 %v295, %v294
    %v336 = vpack.c.b16 %v297, %v296
    %v337 = vpack.c.b16 %v299, %v298
    %v338 = vpack.c.b16 %v301, %v300
    %v339 = vpack.c.b16 %v303, %v302
    %v340 = vpack.c.b16 %v305, %v304
    %v341 = vpack.c.b16 %v307, %v306
    %v342 = vpack.c.b16 %v309, %v308
    %v343 = vpack.c.b16 %v311, %v310
    %376 = vmatprep.subr.bf16.mxu0 0
    %377 = vmatpush1.bf16.msra.mxu0 %v312
    %378 = vmatprep.subr.bf16.mxu0 0
    %379 = vmatpush1.bf16.msra.mxu0 %v313
    %380 = vmatprep.subr.bf16.mxu0 0
    %381 = vmatpush1.bf16.msra.mxu0 %v314
    %382 = vmatprep.subr.bf16.mxu0 0
    %383 = vmatpush1.bf16.msra.mxu0 %v315
    %384 = vmatprep.subr.bf16.mxu0 0
    %385 = vmatpush1.bf16.msra.mxu0 %v316
    %386 = vmatprep.subr.bf16.mxu0 0
    %387 = vmatpush1.bf16.msra.mxu0 %v317
    %388 = vmatprep.subr.bf16.mxu0 0
    %389 = vmatpush1.bf16.msra.mxu0 %v318
    %390 = vmatprep.subr.bf16.mxu0 0
    %391 = vmatpush1.bf16.msra.mxu0 %v319
    %392 = vmatprep.subr.bf16.mxu0 0
    %393 = vmatpush1.bf16.msra.mxu0 %v320
    %394 = vmatprep.subr.bf16.mxu0 0
    %395 = vmatpush1.bf16.msra.mxu0 %v321
    %396 = vmatprep.subr.bf16.mxu0 0
    %397 = vmatpush1.bf16.msra.mxu0 %v322
    %398 = vmatprep.subr.bf16.mxu0 0
    %399 = vmatpush1.bf16.msra.mxu0 %v323
    %400 = vmatprep.subr.bf16.mxu0 0
    %401 = vmatpush1.bf16.msra.mxu0 %v324
    %402 = vmatprep.subr.bf16.mxu0 0
    %403 = vmatpush1.bf16.msra.mxu0 %v325
    %404 = vmatprep.subr.bf16.mxu0 0
    %405 = vmatpush1.bf16.msra.mxu0 %v326
    %406 = vmatprep.subr.bf16.mxu0 0
    %407 = vmatpush1.bf16.msra.mxu0 %v327
    %408 = vmatprep.mubr.bf16.mxu0 %v97
    %409 = vmatmul.mubr.bf16.gmra.mrb[0].mxu0 %v96
    %v410 = vpop.f32.mrb[0].mxu0
    %v411 = vadd.f32 %v182, %v410
    %v412 = vpop.f32.mrb[0].mxu0
    %v413 = vpop.f32.mrb[0].mxu0
    %v414 = vadd.f32 %v182, %v413
    %v415 = vpop.f32.mrb[0].mxu0
    %416 = vdwg.mxu0
    %417 = vmatprep.subr.bf16.mxu0 0
    %418 = vmatpush1.bf16.msra.mxu0 %v328
    %419 = vmatprep.subr.bf16.mxu0 0
    %420 = vmatpush1.bf16.msra.mxu0 %v329
    %421 = vmatprep.subr.bf16.mxu0 0
    %422 = vmatpush1.bf16.msra.mxu0 %v330
    %423 = vmatprep.subr.bf16.mxu0 0
    %424 = vmatpush1.bf16.msra.mxu0 %v331
    %425 = vmatprep.subr.bf16.mxu0 0
    %426 = vmatpush1.bf16.msra.mxu0 %v332
    %427 = vmatprep.subr.bf16.mxu0 0
    %428 = vmatpush1.bf16.msra.mxu0 %v333
    %429 = vmatprep.subr.bf16.mxu0 0
    %430 = vmatpush1.bf16.msra.mxu0 %v334
    %431 = vmatprep.subr.bf16.mxu0 0
    %432 = vmatpush1.bf16.msra.mxu0 %v335
    %433 = vmatprep.subr.bf16.mxu0 0
    %434 = vmatpush1.bf16.msra.mxu0 %v336
    %435 = vmatprep.subr.bf16.mxu0 0
    %436 = vmatpush1.bf16.msra.mxu0 %v337
    %437 = vmatprep.subr.bf16.mxu0 0
    %438 = vmatpush1.bf16.msra.mxu0 %v338
    %439 = vmatprep.subr.bf16.mxu0 0
    %440 = vmatpush1.bf16.msra.mxu0 %v339
    %441 = vmatprep.subr.bf16.mxu0 0
    %442 = vmatpush1.bf16.msra.mxu0 %v340
    %443 = vmatprep.subr.bf16.mxu0 0
    %444 = vmatpush1.bf16.msra.mxu0 %v341
    %445 = vmatprep.subr.bf16.mxu0 0
    %446 = vmatpush1.bf16.msra.mxu0 %v342
    %447 = vmatprep.subr.bf16.mxu0 0
    %448 = vmatpush1.bf16.msra.mxu0 %v343
    %449 = vmatprep.mubr.bf16.mxu0 %v99
    %450 = vmatmul.mubr.bf16.gmra.mrb[0].mxu0 %v98
    %v451 = vpop.f32.mrb[0].mxu0
    %v452 = vadd.f32 %v411, %v451
    %v453 = vpop.f32.mrb[0].mxu0
    %v454 = vpop.f32.mrb[0].mxu0
    %v455 = vadd.f32 %v414, %v454
    %v456 = vpop.f32.mrb[0].mxu0
    %457 = vdwg.mxu0
    %v458 = vmax.f32 %v452, 0.0
    %v459 = vmax.f32 %v455, 0.0
    %v460 = vld [vmem:[#allocation6 + $0x4] sm:$0xf]
    %v461 = vld [vmem:[#allocation6 + $0xc] sm:$0xf]
    %v462 = vld [vmem:[#allocation6 + $0x14] sm:$0xf]
    %v463 = vld [vmem:[#allocation6 + $0x1c] sm:$0xf]
    %v464 = vld [vmem:[#allocation6 + $0x24] sm:$0xf]
    %v465 = vld [vmem:[#allocation6 + $0x2c] sm:$0xf]
    %v466 = vld [vmem:[#allocation6 + $0x34] sm:$0xf]
    %v467 = vld [vmem:[#allocation6 + $0x3c] sm:$0xf]
    %v468 = vld [vmem:[#allocation6 + $0x44] sm:$0xf]
    %v469 = vld [vmem:[#allocation6 + $0x4c] sm:$0xf]
    %v470 = vld [vmem:[#allocation6 + $0x54] sm:$0xf]
    %v471 = vld [vmem:[#allocation6 + $0x5c] sm:$0xf]
    %v472 = vld [vmem:[#allocation6 + $0x64] sm:$0xf]
    %v473 = vld [vmem:[#allocation6 + $0x6c] sm:$0xf]
    %v474 = vld [vmem:[#allocation6 + $0x74] sm:$0xf]
    %v475 = vld [vmem:[#allocation6 + $0x7c] sm:$0xf]
    %v476 = vld [vmem:[#allocation6 + $0x84] sm:$0xf]
    %v477 = vld [vmem:[#allocation6 + $0x8c] sm:$0xf]
    %v478 = vld [vmem:[#allocation6 + $0x94] sm:$0xf]
    %v479 = vld [vmem:[#allocation6 + $0x9c] sm:$0xf]
    %v480 = vld [vmem:[#allocation6 + $0xa4] sm:$0xf]
    %v481 = vld [vmem:[#allocation6 + $0xac] sm:$0xf]
    %v482 = vld [vmem:[#allocation6 + $0xb4] sm:$0xf]
    %v483 = vld [vmem:[#allocation6 + $0xbc] sm:$0xf]
    %v484 = vld [vmem:[#allocation6 + $0xc4] sm:$0xf]
    %v485 = vld [vmem:[#allocation6 + $0xcc] sm:$0xf]
    %v486 = vld [vmem:[#allocation6 + $0xd4] sm:$0xf]
    %v487 = vld [vmem:[#allocation6 + $0xdc] sm:$0xf]
    %v488 = vld [vmem:[#allocation6 + $0xe4] sm:$0xf]
    %v489 = vld [vmem:[#allocation6 + $0xec] sm:$0xf]
    %v490 = vld [vmem:[#allocation6 + $0xf4] sm:$0xf]
    %v491 = vld [vmem:[#allocation6 + $0xfc] sm:$0xf]
    %v492 = vld [vmem:[#allocation6 + $0x104] sm:$0xf]
    %v493 = vld [vmem:[#allocation6 + $0x10c] sm:$0xf]
    %v494 = vld [vmem:[#allocation6 + $0x114] sm:$0xf]
    %v495 = vld [vmem:[#allocation6 + $0x11c] sm:$0xf]
    %v496 = vld [vmem:[#allocation6 + $0x124] sm:$0xf]
    %v497 = vld [vmem:[#allocation6 + $0x12c] sm:$0xf]
    %v498 = vld [vmem:[#allocation6 + $0x134] sm:$0xf]
    %v499 = vld [vmem:[#allocation6 + $0x13c] sm:$0xf]
    %v500 = vld [vmem:[#allocation6 + $0x144] sm:$0xf]
    %v501 = vld [vmem:[#allocation6 + $0x14c] sm:$0xf]
    %v502 = vld [vmem:[#allocation6 + $0x154] sm:$0xf]
    %v503 = vld [vmem:[#allocation6 + $0x15c] sm:$0xf]
    %v504 = vld [vmem:[#allocation6 + $0x164] sm:$0xf]
    %v505 = vld [vmem:[#allocation6 + $0x16c] sm:$0xf]
    %v506 = vld [vmem:[#allocation6 + $0x174] sm:$0xf]
    %v507 = vld [vmem:[#allocation6 + $0x17c] sm:$0xf]
    %v508 = vld [vmem:[#allocation6 + $0x184] sm:$0xf]
    %v509 = vld [vmem:[#allocation6 + $0x18c] sm:$0xf]
    %v510 = vld [vmem:[#allocation6 + $0x194] sm:$0xf]
    %v511 = vld [vmem:[#allocation6 + $0x19c] sm:$0xf]
    %v512 = vld [vmem:[#allocation6 + $0x1a4] sm:$0xf]
    %v513 = vld [vmem:[#allocation6 + $0x1ac] sm:$0xf]
    %v514 = vld [vmem:[#allocation6 + $0x1b4] sm:$0xf]
    %v515 = vld [vmem:[#allocation6 + $0x1bc] sm:$0xf]
    %v516 = vld [vmem:[#allocation6 + $0x1c4] sm:$0xf]
    %v517 = vld [vmem:[#allocation6 + $0x1cc] sm:$0xf]
    %v518 = vld [vmem:[#allocation6 + $0x1d4] sm:$0xf]
    %v519 = vld [vmem:[#allocation6 + $0x1dc] sm:$0xf]
    %v520 = vld [vmem:[#allocation6 + $0x1e4] sm:$0xf]
    %v521 = vld [vmem:[#allocation6 + $0x1ec] sm:$0xf]
    %v522 = vld [vmem:[#allocation6 + $0x1f4] sm:$0xf]
    %v523 = vld [vmem:[#allocation6 + $0x1fc] sm:$0xf]
    %v524 = vld [vmem:[#allocation9 + $0x1] sm:$0x1]
    %v526 = vlaneseq
    %v527 = vshrl.u32 %v526, 7
    %v528 = vsub.s32 0, %v527
    %v529 = vrot.slane %v524, %v528
    %v595 = vunpack.c.l.b16 %v460
    %v596 = vunpack.c.l.b16 %v461
    %v597 = vunpack.c.l.b16 %v462
    %v598 = vunpack.c.l.b16 %v463
    %v599 = vunpack.c.l.b16 %v464
    %v600 = vunpack.c.l.b16 %v465
    %v601 = vunpack.c.l.b16 %v466
    %v602 = vunpack.c.l.b16 %v467
    %v603 = vunpack.c.l.b16 %v468
    %v604 = vunpack.c.l.b16 %v469
    %v605 = vunpack.c.l.b16 %v470
    %v606 = vunpack.c.l.b16 %v471
    %v607 = vunpack.c.l.b16 %v472
    %v608 = vunpack.c.l.b16 %v473
    %v609 = vunpack.c.l.b16 %v474
    %v610 = vunpack.c.l.b16 %v475
    %v611 = vunpack.c.l.b16 %v476
    %v612 = vunpack.c.l.b16 %v477
    %v613 = vunpack.c.l.b16 %v478
    %v614 = vunpack.c.l.b16 %v479
    %v615 = vunpack.c.l.b16 %v480
    %v616 = vunpack.c.l.b16 %v481
    %v617 = vunpack.c.l.b16 %v482
    %v618 = vunpack.c.l.b16 %v483
    %v619 = vunpack.c.l.b16 %v484
    %v620 = vunpack.c.l.b16 %v485
    %v621 = vunpack.c.l.b16 %v486
    %v622 = vunpack.c.l.b16 %v487
    %v623 = vunpack.c.l.b16 %v488
    %v624 = vunpack.c.l.b16 %v489
    %v625 = vunpack.c.l.b16 %v490
    %v626 = vunpack.c.l.b16 %v491
    %v627 = vunpack.c.l.b16 %v492
    %v628 = vunpack.c.l.b16 %v493
    %v629 = vunpack.c.l.b16 %v494
    %v630 = vunpack.c.l.b16 %v495
    %v631 = vunpack.c.l.b16 %v496
    %v632 = vunpack.c.l.b16 %v497
    %v633 = vunpack.c.l.b16 %v498
    %v634 = vunpack.c.l.b16 %v499
    %v635 = vunpack.c.l.b16 %v500
    %v636 = vunpack.c.l.b16 %v501
    %v637 = vunpack.c.l.b16 %v502
    %v638 = vunpack.c.l.b16 %v503
    %v639 = vunpack.c.l.b16 %v504
    %v640 = vunpack.c.l.b16 %v505
    %v641 = vunpack.c.l.b16 %v506
    %v642 = vunpack.c.l.b16 %v507
    %v643 = vunpack.c.l.b16 %v508
    %v644 = vunpack.c.l.b16 %v509
    %v645 = vunpack.c.l.b16 %v510
    %v646 = vunpack.c.l.b16 %v511
    %v647 = vunpack.c.l.b16 %v512
    %v648 = vunpack.c.l.b16 %v513
    %v649 = vunpack.c.l.b16 %v514
    %v650 = vunpack.c.l.b16 %v515
    %v651 = vunpack.c.l.b16 %v516
    %v652 = vunpack.c.l.b16 %v517
    %v653 = vunpack.c.l.b16 %v518
    %v654 = vunpack.c.l.b16 %v519
    %v655 = vunpack.c.l.b16 %v520
    %v656 = vunpack.c.l.b16 %v521
    %v657 = vunpack.c.l.b16 %v522
    %v658 = vunpack.c.l.b16 %v523
    %v659 = vpack.c.b16 %v596, %v595
    %v660 = vpack.c.b16 %v598, %v597
    %v661 = vpack.c.b16 %v600, %v599
    %v662 = vpack.c.b16 %v602, %v601
    %v663 = vpack.c.b16 %v604, %v603
    %v664 = vpack.c.b16 %v606, %v605
    %v665 = vpack.c.b16 %v608, %v607
    %v666 = vpack.c.b16 %v610, %v609
    %v667 = vpack.c.b16 %v612, %v611
    %v668 = vpack.c.b16 %v614, %v613
    %v669 = vpack.c.b16 %v616, %v615
    %v670 = vpack.c.b16 %v618, %v617
    %v671 = vpack.c.b16 %v620, %v619
    %v672 = vpack.c.b16 %v622, %v621
    %v673 = vpack.c.b16 %v624, %v623
    %v674 = vpack.c.b16 %v626, %v625
    %v675 = vpack.c.b16 %v628, %v627
    %v676 = vpack.c.b16 %v630, %v629
    %v677 = vpack.c.b16 %v632, %v631
    %v678 = vpack.c.b16 %v634, %v633
    %v679 = vpack.c.b16 %v636, %v635
    %v680 = vpack.c.b16 %v638, %v637
    %v681 = vpack.c.b16 %v640, %v639
    %v682 = vpack.c.b16 %v642, %v641
    %v683 = vpack.c.b16 %v644, %v643
    %v684 = vpack.c.b16 %v646, %v645
    %v685 = vpack.c.b16 %v648, %v647
    %v686 = vpack.c.b16 %v650, %v649
    %v687 = vpack.c.b16 %v652, %v651
    %v688 = vpack.c.b16 %v654, %v653
    %v689 = vpack.c.b16 %v656, %v655
    %v690 = vpack.c.b16 %v658, %v657
    %723 = vmatprep.subr.bf16.mxu0 0
    %724 = vmatpush1.bf16.msra.mxu0 %v659
    %725 = vmatprep.subr.bf16.mxu0 0
    %726 = vmatpush1.bf16.msra.mxu0 %v660
    %727 = vmatprep.subr.bf16.mxu0 0
    %728 = vmatpush1.bf16.msra.mxu0 %v661
    %729 = vmatprep.subr.bf16.mxu0 0
    %730 = vmatpush1.bf16.msra.mxu0 %v662
    %731 = vmatprep.subr.bf16.mxu0 0
    %732 = vmatpush1.bf16.msra.mxu0 %v663
    %733 = vmatprep.subr.bf16.mxu0 0
    %734 = vmatpush1.bf16.msra.mxu0 %v664
    %735 = vmatprep.subr.bf16.mxu0 0
    %736 = vmatpush1.bf16.msra.mxu0 %v665
    %737 = vmatprep.subr.bf16.mxu0 0
    %738 = vmatpush1.bf16.msra.mxu0 %v666
    %739 = vmatprep.subr.bf16.mxu0 0
    %740 = vmatpush1.bf16.msra.mxu0 %v667
    %741 = vmatprep.subr.bf16.mxu0 0
    %742 = vmatpush1.bf16.msra.mxu0 %v668
    %743 = vmatprep.subr.bf16.mxu0 0
    %744 = vmatpush1.bf16.msra.mxu0 %v669
    %745 = vmatprep.subr.bf16.mxu0 0
    %746 = vmatpush1.bf16.msra.mxu0 %v670
    %747 = vmatprep.subr.bf16.mxu0 0
    %748 = vmatpush1.bf16.msra.mxu0 %v671
    %749 = vmatprep.subr.bf16.mxu0 0
    %750 = vmatpush1.bf16.msra.mxu0 %v672
    %751 = vmatprep.subr.bf16.mxu0 0
    %752 = vmatpush1.bf16.msra.mxu0 %v673
    %753 = vmatprep.subr.bf16.mxu0 0
    %754 = vmatpush1.bf16.msra.mxu0 %v674
    %755 = vmatprep.mubr.bf16.mxu0 %v110
    %756 = vmatmul.mubr.bf16.gmra.mrb[0].mxu0 %v109
    %v757 = vpop.f32.mrb[0].mxu0
    %v758 = vadd.f32 %v529, %v757
    %v759 = vpop.f32.mrb[0].mxu0
    %v760 = vpop.f32.mrb[0].mxu0
    %v761 = vadd.f32 %v529, %v760
    %v762 = vpop.f32.mrb[0].mxu0
    %763 = vdwg.mxu0
    %764 = vmatprep.subr.bf16.mxu0 0
    %765 = vmatpush1.bf16.msra.mxu0 %v675
    %766 = vmatprep.subr.bf16.mxu0 0
    %767 = vmatpush1.bf16.msra.mxu0 %v676
    %768 = vmatprep.subr.bf16.mxu0 0
    %769 = vmatpush1.bf16.msra.mxu0 %v677
    %770 = vmatprep.subr.bf16.mxu0 0
    %771 = vmatpush1.bf16.msra.mxu0 %v678
    %772 = vmatprep.subr.bf16.mxu0 0
    %773 = vmatpush1.bf16.msra.mxu0 %v679
    %774 = vmatprep.subr.bf16.mxu0 0
    %775 = vmatpush1.bf16.msra.mxu0 %v680
    %776 = vmatprep.subr.bf16.mxu0 0
    %777 = vmatpush1.bf16.msra.mxu0 %v681
    %778 = vmatprep.subr.bf16.mxu0 0
    %779 = vmatpush1.bf16.msra.mxu0 %v682
    %780 = vmatprep.subr.bf16.mxu0 0
    %781 = vmatpush1.bf16.msra.mxu0 %v683
    %782 = vmatprep.subr.bf16.mxu0 0
    %783 = vmatpush1.bf16.msra.mxu0 %v684
    %784 = vmatprep.subr.bf16.mxu0 0
    %785 = vmatpush1.bf16.msra.mxu0 %v685
    %786 = vmatprep.subr.bf16.mxu0 0
    %787 = vmatpush1.bf16.msra.mxu0 %v686
    %788 = vmatprep.subr.bf16.mxu0 0
    %789 = vmatpush1.bf16.msra.mxu0 %v687
    %790 = vmatprep.subr.bf16.mxu0 0
    %791 = vmatpush1.bf16.msra.mxu0 %v688
    %792 = vmatprep.subr.bf16.mxu0 0
    %793 = vmatpush1.bf16.msra.mxu0 %v689
    %794 = vmatprep.subr.bf16.mxu0 0
    %795 = vmatpush1.bf16.msra.mxu0 %v690
    %796 = vmatprep.mubr.bf16.mxu0 %v112
    %797 = vmatmul.mubr.bf16.gmra.mrb[0].mxu0 %v111
    %v798 = vpop.f32.mrb[0].mxu0
    %v799 = vadd.f32 %v758, %v798
    %v800 = vpop.f32.mrb[0].mxu0
    %v801 = vpop.f32.mrb[0].mxu0
    %v802 = vadd.f32 %v761, %v801
    %v803 = vpop.f32.mrb[0].mxu0
    %804 = vdwg.mxu0
    %v805 = vmax.f32 %v799, 0.0
    %v806 = vmax.f32 %v802, 0.0
    %v807 = vpack.c.bf16 %v805, %v458
    %v808 = vpack.c.bf16 %v806, %v459
    %v809 = vld [vmem:[#allocation7] sm:$0xff]
    %v810 = vld [vmem:[#allocation7 + $0x8] sm:$0xff]
    %v811 = vld [vmem:[#allocation7 + $0x28] sm:$0xff]
    %v812 = vld [vmem:[#allocation7 + $0x30] sm:$0xff]
    %v813 = vld [vmem:[#allocation7 + $0x50] sm:$0xff]
    %v814 = vld [vmem:[#allocation7 + $0x58] sm:$0xff]
    %v815 = vld [vmem:[#allocation7 + $0x78] sm:$0xff]
    %v816 = vld [vmem:[#allocation7 + $0x80] sm:$0xff]
    %v817 = vld [vmem:[#allocation7 + $0xa0] sm:$0xff]
    %v818 = vld [vmem:[#allocation7 + $0xa8] sm:$0xff]
    %v819 = vld [vmem:[#allocation7 + $0xc8] sm:$0xff]
    %v820 = vld [vmem:[#allocation7 + $0xd0] sm:$0xff]
    %v821 = vld [vmem:[#allocation7 + $0xf0] sm:$0xff]
    %v822 = vld [vmem:[#allocation7 + $0xf8] sm:$0xff]
    %v823 = vld [vmem:[#allocation7 + $0x118] sm:$0xff]
    %v824 = vld [vmem:[#allocation7 + $0x120] sm:$0xff]
    %v825 = vld [vmem:[#allocation7 + $0x140] sm:$0xff]
    %v826 = vld [vmem:[#allocation7 + $0x148] sm:$0xff]
    %v827 = vld [vmem:[#allocation7 + $0x168] sm:$0xff]
    %v828 = vld [vmem:[#allocation7 + $0x170] sm:$0xff]
    %v829 = vld [vmem:[#allocation7 + $0x190] sm:$0xff]
    %v830 = vld [vmem:[#allocation7 + $0x198] sm:$0xff]
    %v831 = vld [vmem:[#allocation7 + $0x1b8] sm:$0xff]
    %v832 = vld [vmem:[#allocation7 + $0x1c0] sm:$0xff]
    %v833 = vld [vmem:[#allocation7 + $0x1e0] sm:$0xff]
    %v834 = vld [vmem:[#allocation7 + $0x1e8] sm:$0xff]
    %v835 = vld [vmem:[#allocation7 + $0x208] sm:$0xff]
    %v836 = vld [vmem:[#allocation7 + $0x210] sm:$0xff]
    %v837 = vld [vmem:[#allocation7 + $0x230] sm:$0xff]
    %v838 = vld [vmem:[#allocation7 + $0x238] sm:$0xff]
    %v839 = vld [vmem:[#allocation7 + $0x258] sm:$0xff]
    %v840 = vld [vmem:[#allocation7 + $0x260] sm:$0xff]
    %v841 = vld [vmem:[#allocation9 + $0x2] sm:$0xf]
    %v843 = vlaneseq
    %v844 = vshrl.u32 %v843, 7
    %v845 = vsub.s32 0, %v844
    %v846 = vrot.slane %v841, %v845
    %v847 = vlaneseq
    %v848 = vshrl.u32 %v847, 7
    %v849 = vsub.s32 1, %v848
    %v850 = vrot.slane %v841, %v849
    %v851 = vlaneseq
    %v852 = vshrl.u32 %v851, 7
    %v853 = vsub.s32 2, %v852
    %v854 = vrot.slane %v841, %v853
    %v855 = vlaneseq
    %v856 = vshrl.u32 %v855, 7
    %v857 = vsub.s32 3, %v856
    %v858 = vrot.slane %v841, %v857
    %v895 = vunpack.c.l.b16 %v809
    %v896 = vunpack.c.h.b16 %v809
    %v897 = vunpack.c.l.b16 %v810
    %v898 = vunpack.c.h.b16 %v810
    %v899 = vunpack.c.l.b16 %v811
    %v900 = vunpack.c.h.b16 %v811
    %v901 = vunpack.c.l.b16 %v812
    %v902 = vunpack.c.h.b16 %v812
    %v903 = vunpack.c.l.b16 %v813
    %v904 = vunpack.c.h.b16 %v813
    %v905 = vunpack.c.l.b16 %v814
    %v906 = vunpack.c.h.b16 %v814
    %v907 = vunpack.c.l.b16 %v815
    %v908 = vunpack.c.h.b16 %v815
    %v909 = vunpack.c.l.b16 %v816
    %v910 = vunpack.c.h.b16 %v816
    %v911 = vunpack.c.l.b16 %v817
    %v912 = vunpack.c.h.b16 %v817
    %v913 = vunpack.c.l.b16 %v818
    %v914 = vunpack.c.h.b16 %v818
    %v915 = vunpack.c.l.b16 %v819
    %v916 = vunpack.c.h.b16 %v819
    %v917 = vunpack.c.l.b16 %v820
    %v918 = vunpack.c.h.b16 %v820
    %v919 = vunpack.c.l.b16 %v821
    %v920 = vunpack.c.h.b16 %v821
    %v921 = vunpack.c.l.b16 %v822
    %v922 = vunpack.c.h.b16 %v822
    %v923 = vunpack.c.l.b16 %v823
    %v924 = vunpack.c.h.b16 %v823
    %v925 = vunpack.c.l.b16 %v824
    %v926 = vunpack.c.h.b16 %v824
    %v927 = vunpack.c.l.b16 %v825
    %v928 = vunpack.c.h.b16 %v825
    %v929 = vunpack.c.l.b16 %v826
    %v930 = vunpack.c.h.b16 %v826
    %v931 = vunpack.c.l.b16 %v827
    %v932 = vunpack.c.h.b16 %v827
    %v933 = vunpack.c.l.b16 %v828
    %v934 = vunpack.c.h.b16 %v828
    %v935 = vunpack.c.l.b16 %v829
    %v936 = vunpack.c.h.b16 %v829
    %v937 = vunpack.c.l.b16 %v830
    %v938 = vunpack.c.h.b16 %v830
    %v939 = vunpack.c.l.b16 %v831
    %v940 = vunpack.c.h.b16 %v831
    %v941 = vunpack.c.l.b16 %v832
    %v942 = vunpack.c.h.b16 %v832
    %v943 = vunpack.c.l.b16 %v833
    %v944 = vunpack.c.h.b16 %v833
    %v945 = vunpack.c.l.b16 %v834
    %v946 = vunpack.c.h.b16 %v834
    %v947 = vunpack.c.l.b16 %v835
    %v948 = vunpack.c.h.b16 %v835
    %v949 = vunpack.c.l.b16 %v836
    %v950 = vunpack.c.h.b16 %v836
    %v951 = vunpack.c.l.b16 %v837
    %v952 = vunpack.c.h.b16 %v837
    %v953 = vunpack.c.l.b16 %v838
    %v954 = vunpack.c.h.b16 %v838
    %v955 = vunpack.c.l.b16 %v839
    %v956 = vunpack.c.h.b16 %v839
    %v957 = vunpack.c.l.b16 %v840
    %v958 = vunpack.c.h.b16 %v840
    %v959 = vpack.c.b16 %v899, %v895
    %v960 = vpack.c.b16 %v900, %v896
    %v961 = vpack.c.b16 %v901, %v897
    %v962 = vpack.c.b16 %v902, %v898
    %v963 = vpack.c.b16 %v907, %v903
    %v964 = vpack.c.b16 %v908, %v904
    %v965 = vpack.c.b16 %v909, %v905
    %v966 = vpack.c.b16 %v910, %v906
    %v967 = vpack.c.b16 %v915, %v911
    %v968 = vpack.c.b16 %v916, %v912
    %v969 = vpack.c.b16 %v917, %v913
    %v970 = vpack.c.b16 %v918, %v914
    %v971 = vpack.c.b16 %v923, %v919
    %v972 = vpack.c.b16 %v924, %v920
    %v973 = vpack.c.b16 %v925, %v921
    %v974 = vpack.c.b16 %v926, %v922
    %v975 = vpack.c.b16 %v931, %v927
    %v976 = vpack.c.b16 %v932, %v928
    %v977 = vpack.c.b16 %v933, %v929
    %v978 = vpack.c.b16 %v934, %v930
    %v979 = vpack.c.b16 %v939, %v935
    %v980 = vpack.c.b16 %v940, %v936
    %v981 = vpack.c.b16 %v941, %v937
    %v982 = vpack.c.b16 %v942, %v938
    %v983 = vpack.c.b16 %v947, %v943
    %v984 = vpack.c.b16 %v948, %v944
    %v985 = vpack.c.b16 %v949, %v945
    %v986 = vpack.c.b16 %v950, %v946
    %v987 = vpack.c.b16 %v955, %v951
    %v988 = vpack.c.b16 %v956, %v952
    %v989 = vpack.c.b16 %v957, %v953
    %v990 = vpack.c.b16 %v958, %v954
    %1023 = vmatprep.subr.bf16.mxu0 %v960
    %1024 = vmatpush1.bf16.msra.mxu0 %v959
    %1025 = vmatprep.subr.bf16.mxu0 %v964
    %1026 = vmatpush1.bf16.msra.mxu0 %v963
    %1027 = vmatprep.subr.bf16.mxu0 %v968
    %1028 = vmatpush1.bf16.msra.mxu0 %v967
    %1029 = vmatprep.subr.bf16.mxu0 %v972
    %1030 = vmatpush1.bf16.msra.mxu0 %v971
    %1031 = vmatprep.subr.bf16.mxu0 %v976
    %1032 = vmatpush1.bf16.msra.mxu0 %v975
    %1033 = vmatprep.subr.bf16.mxu0 %v980
    %1034 = vmatpush1.bf16.msra.mxu0 %v979
    %1035 = vmatprep.subr.bf16.mxu0 %v984
    %1036 = vmatpush1.bf16.msra.mxu0 %v983
    %1037 = vmatprep.subr.bf16.mxu0 %v988
    %1038 = vmatpush1.bf16.msra.mxu0 %v987
    %1039 = vmatprep.subr.bf16.mxu0 0
    %1040 = vmatpush1.bf16.msra.mxu0 0
    %1041 = vmatprep.subr.bf16.mxu0 0
    %1042 = vmatpush1.bf16.msra.mxu0 0
    %1043 = vmatprep.subr.bf16.mxu0 0
    %1044 = vmatpush1.bf16.msra.mxu0 0
    %1045 = vmatprep.subr.bf16.mxu0 0
    %1046 = vmatpush1.bf16.msra.mxu0 0
    %1047 = vmatprep.subr.bf16.mxu0 0
    %1048 = vmatpush1.bf16.msra.mxu0 0
    %1049 = vmatprep.subr.bf16.mxu0 0
    %1050 = vmatpush1.bf16.msra.mxu0 0
    %1051 = vmatprep.subr.bf16.mxu0 0
    %1052 = vmatpush1.bf16.msra.mxu0 0
    %1053 = vmatprep.subr.bf16.mxu0 0
    %1054 = vmatpush1.bf16.msra.mxu0 0
    %1055 = vmatprep.mubr.bf16.mxu0 0
    %1056 = vmatmul.mubr.bf16.gmra.mrb[0].mxu0 %v807
    %v1057 = vpop.f32.mrb[0].mxu0
    %v1058 = vadd.f32 %v846, %v1057
    %v1059 = vpop.f32.mrb[0].mxu0
    %v1060 = vadd.f32 %v850, %v1059
    %v1061 = vpop.f32.mrb[0].mxu0
    %v1062 = vadd.f32 %v846, %v1061
    %v1063 = vpop.f32.mrb[0].mxu0
    %v1064 = vadd.f32 %v850, %v1063
    %1065 = vmatprep.mubr.bf16.mxu0 0
    %1066 = vmatmul.mubr.bf16.gmra.mrb[0].mxu0 %v808
    %v1067 = vpop.f32.mrb[0].mxu0
    %v1068 = vadd.f32 %v846, %v1067
    %v1069 = vpop.f32.mrb[0].mxu0
    %v1070 = vadd.f32 %v850, %v1069
    %v1071 = vpop.f32.mrb[0].mxu0
    %v1072 = vadd.f32 %v846, %v1071
    %v1073 = vpop.f32.mrb[0].mxu0
    %v1074 = vadd.f32 %v850, %v1073
    %1075 = vdwg.mxu0
    %1076 = vmatprep.subr.bf16.mxu0 %v962
    %1077 = vmatpush1.bf16.msra.mxu0 %v961
    %1078 = vmatprep.subr.bf16.mxu0 %v966
    %1079 = vmatpush1.bf16.msra.mxu0 %v965
    %1080 = vmatprep.subr.bf16.mxu0 %v970
    %1081 = vmatpush1.bf16.msra.mxu0 %v969
    %1082 = vmatprep.subr.bf16.mxu0 %v974
    %1083 = vmatpush1.bf16.msra.mxu0 %v973
    %1084 = vmatprep.subr.bf16.mxu0 %v978
    %1085 = vmatpush1.bf16.msra.mxu0 %v977
    %1086 = vmatprep.subr.bf16.mxu0 %v982
    %1087 = vmatpush1.bf16.msra.mxu0 %v981
    %1088 = vmatprep.subr.bf16.mxu0 %v986
    %1089 = vmatpush1.bf16.msra.mxu0 %v985
    %1090 = vmatprep.subr.bf16.mxu0 %v990
    %1091 = vmatpush1.bf16.msra.mxu0 %v989
    %1092 = vmatprep.subr.bf16.mxu0 0
    %1093 = vmatpush1.bf16.msra.mxu0 0
    %1094 = vmatprep.subr.bf16.mxu0 0
    %1095 = vmatpush1.bf16.msra.mxu0 0
    %1096 = vmatprep.subr.bf16.mxu0 0
    %1097 = vmatpush1.bf16.msra.mxu0 0
    %1098 = vmatprep.subr.bf16.mxu0 0
    %1099 = vmatpush1.bf16.msra.mxu0 0
    %1100 = vmatprep.subr.bf16.mxu0 0
    %1101 = vmatpush1.bf16.msra.mxu0 0
    %1102 = vmatprep.subr.bf16.mxu0 0
    %1103 = vmatpush1.bf16.msra.mxu0 0
    %1104 = vmatprep.subr.bf16.mxu0 0
    %1105 = vmatpush1.bf16.msra.mxu0 0
    %1106 = vmatprep.subr.bf16.mxu0 0
    %1107 = vmatpush1.bf16.msra.mxu0 0
    %1108 = vmatprep.mubr.bf16.mxu0 0
    %1109 = vmatmul.mubr.bf16.gmra.mrb[0].mxu0 %v807
    %v1110 = vpop.f32.mrb[0].mxu0
    %v1111 = vadd.f32 %v854, %v1110
    %v1112 = vpop.f32.mrb[0].mxu0
    %v1113 = vadd.f32 %v858, %v1112
    %v1114 = vpop.f32.mrb[0].mxu0
    %v1115 = vadd.f32 %v854, %v1114
    %v1116 = vpop.f32.mrb[0].mxu0
    %v1117 = vadd.f32 %v858, %v1116
    %1118 = vmatprep.mubr.bf16.mxu0 0
    %1119 = vmatmul.mubr.bf16.gmra.mrb[0].mxu0 %v808
    %v1120 = vpop.f32.mrb[0].mxu0
    %v1121 = vadd.f32 %v854, %v1120
    %v1122 = vpop.f32.mrb[0].mxu0
    %v1123 = vadd.f32 %v858, %v1122
    %v1124 = vpop.f32.mrb[0].mxu0
    %v1125 = vadd.f32 %v854, %v1124
    %v1126 = vpop.f32.mrb[0].mxu0
    %v1127 = vadd.f32 %v858, %v1126
    %1128 = vdwg.mxu0
    %v1129 = vpack.c.bf16 %v1062, %v1058
    %v1130 = vpack.c.bf16 %v1064, %v1060
    %v1131 = vpack.c.bf16 %v1115, %v1111
    %vm1132 = vcmask 261120
    %v1134 = vsel %vm1132, %v1129, 0
    %v1137 = vsel %vm1132, %v1130, 0
    %1139 = vmatprep.subr.bf16.mxu0 0
    %1140 = vmatpush1.bf16.xpose.msra.mxu0 %v1137
    %1141 = vmatprep.subr.bf16.mxu0 0
    %1142 = vmatpush1.bf16.xpose.msra.mxu0 0
    %1143 = vmatprep.subr.bf16.mxu0 0
    %1144 = vmatpush1.bf16.xpose.msra.mxu0 0
    %1145 = vmatprep.subr.bf16.mxu0 0
    %1146 = vmatpush1.bf16.xpose.msra.mxu0 0
    %1147 = vmatprep.subr.bf16.mxu0 0
    %1148 = vmatpush1.bf16.xpose.msra.mxu0 0
    %1149 = vmatprep.subr.bf16.mxu0 0
    %1150 = vmatpush1.bf16.xpose.msra.mxu0 0
    %1151 = vmatprep.subr.bf16.mxu0 0
    %1152 = vmatpush1.bf16.xpose.msra.mxu0 0
    %1153 = vmatprep.subr.bf16.mxu0 0
    %1154 = vmatpush1.bf16.xpose.msra.mxu0 0
    %1155 = vmatprep.subr.bf16.mxu0 0
    %1156 = vmatpush1.bf16.xpose.msra.mxu0 0
    %1157 = vmatprep.subr.bf16.mxu0 0
    %1158 = vmatpush1.bf16.xpose.msra.mxu0 0
    %1159 = vmatprep.subr.bf16.mxu0 0
    %1160 = vmatpush1.bf16.xpose.msra.mxu0 0
    %1161 = vmatprep.subr.bf16.mxu0 0
    %1162 = vmatpush1.bf16.xpose.msra.mxu0 0
    %1163 = vmatprep.subr.bf16.mxu0 0
    %1164 = vmatpush1.bf16.xpose.msra.mxu0 0
    %1165 = vmatprep.subr.bf16.mxu0 0
    %1166 = vmatpush1.bf16.xpose.msra.mxu0 0
    %1167 = vmatprep.subr.bf16.mxu0 0
    %1168 = vmatpush1.bf16.xpose.msra.mxu0 0
    %1169 = vmatprep.subr.bf16.mxu0 0
    %1170 = vmatpush1.bf16.xpose.msra.mxu0 0
    %1171 = vmatprep.mubr.bf16.mxu0 0
    %1172 = vmatmul.mubr.bf16.gmra.mrb[0].mxu0 %v1134
    %v1173 = vpop.f32.mrb[0].mxu0
    %v1174 = vadd.f32 0.0, %v1173
    %v1175 = vpop.f32.mrb[0].mxu0
    %v1176 = vpop.f32.mrb[0].mxu0
    %v1177 = vadd.f32 0.0, %v1176
    %v1178 = vpop.f32.mrb[0].mxu0
    %1179 = vdwg.mxu0
    %vm1180 = vcmask 130048
    %v1181 = vsel %vm1180, %v1174, -inf
    %1182 = vmax.xlane.f32.xlu0 %v1181
    %v1183 = vpop.xlane.xlu0 %1182
    %v1184 = vsel %vm1180, %v1177, -inf
    %1185 = vmax.xlane.f32.xlu0 %v1184
    %v1186 = vpop.xlane.xlu0 %1185
    %v1187 = vsub.f32 %v1174, %v1183
    %v1188 = vsub.f32 %v1177, %v1186
    %v1189 = vmul.f32 %v1187, 1.442695
    %v1190 = vpow.pop %v1189
    %v1191 = vmul.f32 %v1188, 1.442695
    %v1192 = vpow.pop %v1191
    %v1193 = vsel %vm1180, %v1190, 0.0
    %1194 = vadd.xlane.f32.xlu0 %v1193
    %v1195 = vpop.xlane.xlu0 %1194
    %v1196 = vsel %vm1180, %v1192, 0.0
    %1197 = vadd.xlane.f32.xlu0 %v1196
    %v1198 = vpop.xlane.xlu0 %1197
    %v1199 = vrcp.pop %v1195
    %v1200 = vrcp.pop %v1198
    %v1201 = vmul.f32 %v1190, %v1199
    %v1202 = vmul.f32 %v1192, %v1200
    %v1203 = vpack.c.bf16 %v1202, %v1201
    %v1205 = vsel %vm1180, %v1203, 0
    %1207 = vmatprep.subr.bf16.mxu0 0
    %1208 = vmatpush1.bf16.msra.mxu0 %v1131
    %1209 = vmatprep.subr.bf16.mxu0 0
    %1210 = vmatpush1.bf16.msra.mxu0 0
    %1211 = vmatprep.subr.bf16.mxu0 0
    %1212 = vmatpush1.bf16.msra.mxu0 0
    %1213 = vmatprep.subr.bf16.mxu0 0
    %1214 = vmatpush1.bf16.msra.mxu0 0
    %1215 = vmatprep.subr.bf16.mxu0 0
    %1216 = vmatpush1.bf16.msra.mxu0 0
    %1217 = vmatprep.subr.bf16.mxu0 0
    %1218 = vmatpush1.bf16.msra.mxu0 0
    %1219 = vmatprep.subr.bf16.mxu0 0
    %1220 = vmatpush1.bf16.msra.mxu0 0
    %1221 = vmatprep.subr.bf16.mxu0 0
    %1222 = vmatpush1.bf16.msra.mxu0 0
    %1223 = vmatprep.subr.bf16.mxu0 0
    %1224 = vmatpush1.bf16.msra.mxu0 0
    %1225 = vmatprep.subr.bf16.mxu0 0
    %1226 = vmatpush1.bf16.msra.mxu0 0
    %1227 = vmatprep.subr.bf16.mxu0 0
    %1228 = vmatpush1.bf16.msra.mxu0 0
    %1229 = vmatprep.subr.bf16.mxu0 0
    %1230 = vmatpush1.bf16.msra.mxu0 0
    %1231 = vmatprep.subr.bf16.mxu0 0
    %1232 = vmatpush1.bf16.msra.mxu0 0
    %1233 = vmatprep.subr.bf16.mxu0 0
    %1234 = vmatpush1.bf16.msra.mxu0 0
    %1235 = vmatprep.subr.bf16.mxu0 0
    %1236 = vmatpush1.bf16.msra.mxu0 0
    %1237 = vmatprep.subr.bf16.mxu0 0
    %1238 = vmatpush1.bf16.msra.mxu0 0
    %1239 = vmatprep.mubr.bf16.mxu0 0
    %1240 = vmatmul.mubr.bf16.gmra.mrb[0].mxu0 %v1205
    %v1241 = vpop.f32.mrb[0].mxu0
    %v1242 = vadd.f32 0.0, %v1241
    %v1243 = vpop.f32.mrb[0].mxu0
    %v1244 = vpop.f32.mrb[0].mxu0
    %v1245 = vadd.f32 0.0, %v1244
    %v1246 = vpop.f32.mrb[0].mxu0
    %1247 = vdwg.mxu0
    %1249 = vrot.lane.b32.xlu0 %v1129, 96
    %v1250 = vpop.permute.xlu0 %1249
    %1252 = vrot.lane.b32.xlu0 %v1130, 96
    %v1253 = vpop.permute.xlu0 %1252
    %v1255 = vsel %vm1132, %v1250, 0
    %v1258 = vsel %vm1132, %v1253, 0
    %1260 = vmatprep.subr.bf16.mxu0 0
    %1261 = vmatpush1.bf16.xpose.msra.mxu0 %v1258
    %1262 = vmatprep.subr.bf16.mxu0 0
    %1263 = vmatpush1.bf16.xpose.msra.mxu0 0
    %1264 = vmatprep.subr.bf16.mxu0 0
    %1265 = vmatpush1.bf16.xpose.msra.mxu0 0
    %1266 = vmatprep.subr.bf16.mxu0 0
    %1267 = vmatpush1.bf16.xpose.msra.mxu0 0
    %1268 = vmatprep.subr.bf16.mxu0 0
    %1269 = vmatpush1.bf16.xpose.msra.mxu0 0
    %1270 = vmatprep.subr.bf16.mxu0 0
    %1271 = vmatpush1.bf16.xpose.msra.mxu0 0
    %1272 = vmatprep.subr.bf16.mxu0 0
    %1273 = vmatpush1.bf16.xpose.msra.mxu0 0
    %1274 = vmatprep.subr.bf16.mxu0 0
    %1275 = vmatpush1.bf16.xpose.msra.mxu0 0
    %1276 = vmatprep.subr.bf16.mxu0 0
    %1277 = vmatpush1.bf16.xpose.msra.mxu0 0
    %1278 = vmatprep.subr.bf16.mxu0 0
    %1279 = vmatpush1.bf16.xpose.msra.mxu0 0
    %1280 = vmatprep.subr.bf16.mxu0 0
    %1281 = vmatpush1.bf16.xpose.msra.mxu0 0
    %1282 = vmatprep.subr.bf16.mxu0 0
    %1283 = vmatpush1.bf16.xpose.msra.mxu0 0
    %1284 = vmatprep.subr.bf16.mxu0 0
    %1285 = vmatpush1.bf16.xpose.msra.mxu0 0
    %1286 = vmatprep.subr.bf16.mxu0 0
    %1287 = vmatpush1.bf16.xpose.msra.mxu0 0
    %1288 = vmatprep.subr.bf16.mxu0 0
    %1289 = vmatpush1.bf16.xpose.msra.mxu0 0
    %1290 = vmatprep.subr.bf16.mxu0 0
    %1291 = vmatpush1.bf16.xpose.msra.mxu0 0
    %1292 = vmatprep.mubr.bf16.mxu0 0
    %1293 = vmatmul.mubr.bf16.gmra.mrb[0].mxu0 %v1255
    %v1294 = vpop.f32.mrb[0].mxu0
    %v1295 = vadd.f32 0.0, %v1294
    %v1296 = vpop.f32.mrb[0].mxu0
    %v1297 = vpop.f32.mrb[0].mxu0
    %v1298 = vadd.f32 0.0, %v1297
    %v1299 = vpop.f32.mrb[0].mxu0
    %1300 = vdwg.mxu0
    %v1301 = vsel %vm1180, %v1295, -inf
    %1302 = vmax.xlane.f32.xlu0 %v1301
    %v1303 = vpop.xlane.xlu0 %1302
    %v1304 = vsel %vm1180, %v1298, -inf
    %1305 = vmax.xlane.f32.xlu0 %v1304
    %v1306 = vpop.xlane.xlu0 %1305
    %v1307 = vsub.f32 %v1295, %v1303
    %v1308 = vsub.f32 %v1298, %v1306
    %v1309 = vmul.f32 %v1307, 1.442695
    %v1310 = vpow.pop %v1309
    %v1311 = vmul.f32 %v1308, 1.442695
    %v1312 = vpow.pop %v1311
    %v1313 = vsel %vm1180, %v1310, 0.0
    %1314 = vadd.xlane.f32.xlu0 %v1313
    %v1315 = vpop.xlane.xlu0 %1314
    %v1316 = vsel %vm1180, %v1312, 0.0
    %1317 = vadd.xlane.f32.xlu0 %v1316
    %v1318 = vpop.xlane.xlu0 %1317
    %v1319 = vrcp.pop %v1315
    %v1320 = vrcp.pop %v1318
    %v1321 = vmul.f32 %v1310, %v1319
    %v1322 = vmul.f32 %v1312, %v1320
    %v1323 = vpack.c.bf16 %v1322, %v1321
    %1325 = vrot.lane.b32.xlu0 %v1131, 96
    %v1326 = vpop.permute.xlu0 %1325
    %v1329 = vsel %vm1180, %v1323, 0
    %1331 = vmatprep.subr.bf16.mxu0 0
    %1332 = vmatpush1.bf16.msra.mxu0 %v1326
    %1333 = vmatprep.subr.bf16.mxu0 0
    %1334 = vmatpush1.bf16.msra.mxu0 0
    %1335 = vmatprep.subr.bf16.mxu0 0
    %1336 = vmatpush1.bf16.msra.mxu0 0
    %1337 = vmatprep.subr.bf16.mxu0 0
    %1338 = vmatpush1.bf16.msra.mxu0 0
    %1339 = vmatprep.subr.bf16.mxu0 0
    %1340 = vmatpush1.bf16.msra.mxu0 0
    %1341 = vmatprep.subr.bf16.mxu0 0
    %1342 = vmatpush1.bf16.msra.mxu0 0
    %1343 = vmatprep.subr.bf16.mxu0 0
    %1344 = vmatpush1.bf16.msra.mxu0 0
    %1345 = vmatprep.subr.bf16.mxu0 0
    %1346 = vmatpush1.bf16.msra.mxu0 0
    %1347 = vmatprep.subr.bf16.mxu0 0
    %1348 = vmatpush1.bf16.msra.mxu0 0
    %1349 = vmatprep.subr.bf16.mxu0 0
    %1350 = vmatpush1.bf16.msra.mxu0 0
    %1351 = vmatprep.subr.bf16.mxu0 0
    %1352 = vmatpush1.bf16.msra.mxu0 0
    %1353 = vmatprep.subr.bf16.mxu0 0
    %1354 = vmatpush1.bf16.msra.mxu0 0
    %1355 = vmatprep.subr.bf16.mxu0 0
    %1356 = vmatpush1.bf16.msra.mxu0 0
    %1357 = vmatprep.subr.bf16.mxu0 0
    %1358 = vmatpush1.bf16.msra.mxu0 0
    %1359 = vmatprep.subr.bf16.mxu0 0
    %1360 = vmatpush1.bf16.msra.mxu0 0
    %1361 = vmatprep.subr.bf16.mxu0 0
    %1362 = vmatpush1.bf16.msra.mxu0 0
    %1363 = vmatprep.mubr.bf16.mxu0 0
    %1364 = vmatmul.mubr.bf16.gmra.mrb[0].mxu0 %v1329
    %v1365 = vpop.f32.mrb[0].mxu0
    %v1366 = vadd.f32 0.0, %v1365
    %v1367 = vpop.f32.mrb[0].mxu0
    %v1368 = vpop.f32.mrb[0].mxu0
    %v1369 = vadd.f32 0.0, %v1368
    %v1370 = vpop.f32.mrb[0].mxu0
    %1371 = vdwg.mxu0
    %1372 = vrot.lane.b32.xlu0 %v1129, 64
    %v1373 = vpop.permute.xlu0 %1372
    %1374 = vrot.lane.b32.xlu0 %v1130, 64
    %v1375 = vpop.permute.xlu0 %1374
    %v1377 = vsel %vm1132, %v1373, 0
    %v1380 = vsel %vm1132, %v1375, 0
    %1382 = vmatprep.subr.bf16.mxu0 0
    %1383 = vmatpush1.bf16.xpose.msra.mxu0 %v1380
    %1384 = vmatprep.subr.bf16.mxu0 0
    %1385 = vmatpush1.bf16.xpose.msra.mxu0 0
    %1386 = vmatprep.subr.bf16.mxu0 0
    %1387 = vmatpush1.bf16.xpose.msra.mxu0 0
    %1388 = vmatprep.subr.bf16.mxu0 0
    %1389 = vmatpush1.bf16.xpose.msra.mxu0 0
    %1390 = vmatprep.subr.bf16.mxu0 0
    %1391 = vmatpush1.bf16.xpose.msra.mxu0 0
    %1392 = vmatprep.subr.bf16.mxu0 0
    %1393 = vmatpush1.bf16.xpose.msra.mxu0 0
    %1394 = vmatprep.subr.bf16.mxu0 0
    %1395 = vmatpush1.bf16.xpose.msra.mxu0 0
    %1396 = vmatprep.subr.bf16.mxu0 0
    %1397 = vmatpush1.bf16.xpose.msra.mxu0 0
    %1398 = vmatprep.subr.bf16.mxu0 0
    %1399 = vmatpush1.bf16.xpose.msra.mxu0 0
    %1400 = vmatprep.subr.bf16.mxu0 0
    %1401 = vmatpush1.bf16.xpose.msra.mxu0 0
    %1402 = vmatprep.subr.bf16.mxu0 0
    %1403 = vmatpush1.bf16.xpose.msra.mxu0 0
    %1404 = vmatprep.subr.bf16.mxu0 0
    %1405 = vmatpush1.bf16.xpose.msra.mxu0 0
    %1406 = vmatprep.subr.bf16.mxu0 0
    %1407 = vmatpush1.bf16.xpose.msra.mxu0 0
    %1408 = vmatprep.subr.bf16.mxu0 0
    %1409 = vmatpush1.bf16.xpose.msra.mxu0 0
    %1410 = vmatprep.subr.bf16.mxu0 0
    %1411 = vmatpush1.bf16.xpose.msra.mxu0 0
    %1412 = vmatprep.subr.bf16.mxu0 0
    %1413 = vmatpush1.bf16.xpose.msra.mxu0 0
    %1414 = vmatprep.mubr.bf16.mxu0 0
    %1415 = vmatmul.mubr.bf16.gmra.mrb[0].mxu0 %v1377
    %v1416 = vpop.f32.mrb[0].mxu0
    %v1417 = vadd.f32 0.0, %v1416
    %v1418 = vpop.f32.mrb[0].mxu0
    %v1419 = vpop.f32.mrb[0].mxu0
    %v1420 = vadd.f32 0.0, %v1419
    %v1421 = vpop.f32.mrb[0].mxu0
    %1422 = vdwg.mxu0
    %v1423 = vsel %vm1180, %v1417, -inf
    %1424 = vmax.xlane.f32.xlu0 %v1423
    %v1425 = vpop.xlane.xlu0 %1424
    %v1426 = vsel %vm1180, %v1420, -inf
    %1427 = vmax.xlane.f32.xlu0 %v1426
    %v1428 = vpop.xlane.xlu0 %1427
    %v1429 = vsub.f32 %v1417, %v1425
    %v1430 = vsub.f32 %v1420, %v1428
    %v1431 = vmul.f32 %v1429, 1.442695
    %v1432 = vpow.pop %v1431
    %v1433 = vmul.f32 %v1430, 1.442695
    %v1434 = vpow.pop %v1433
    %v1435 = vsel %vm1180, %v1432, 0.0
    %1436 = vadd.xlane.f32.xlu0 %v1435
    %v1437 = vpop.xlane.xlu0 %1436
    %v1438 = vsel %vm1180, %v1434, 0.0
    %1439 = vadd.xlane.f32.xlu0 %v1438
    %v1440 = vpop.xlane.xlu0 %1439
    %v1441 = vrcp.pop %v1437
    %v1442 = vrcp.pop %v1440
    %v1443 = vmul.f32 %v1432, %v1441
    %v1444 = vmul.f32 %v1434, %v1442
    %v1445 = vpack.c.bf16 %v1444, %v1443
    %1446 = vrot.lane.b32.xlu0 %v1131, 64
    %v1447 = vpop.permute.xlu0 %1446
    %v1450 = vsel %vm1180, %v1445, 0
    %1452 = vmatprep.subr.bf16.mxu0 0
    %1453 = vmatpush1.bf16.msra.mxu0 %v1447
    %1454 = vmatprep.subr.bf16.mxu0 0
    %1455 = vmatpush1.bf16.msra.mxu0 0
    %1456 = vmatprep.subr.bf16.mxu0 0
    %1457 = vmatpush1.bf16.msra.mxu0 0
    %1458 = vmatprep.subr.bf16.mxu0 0
    %1459 = vmatpush1.bf16.msra.mxu0 0
    %1460 = vmatprep.subr.bf16.mxu0 0
    %1461 = vmatpush1.bf16.msra.mxu0 0
    %1462 = vmatprep.subr.bf16.mxu0 0
    %1463 = vmatpush1.bf16.msra.mxu0 0
    %1464 = vmatprep.subr.bf16.mxu0 0
    %1465 = vmatpush1.bf16.msra.mxu0 0
    %1466 = vmatprep.subr.bf16.mxu0 0
    %1467 = vmatpush1.bf16.msra.mxu0 0
    %1468 = vmatprep.subr.bf16.mxu0 0
    %1469 = vmatpush1.bf16.msra.mxu0 0
    %1470 = vmatprep.subr.bf16.mxu0 0
    %1471 = vmatpush1.bf16.msra.mxu0 0
    %1472 = vmatprep.subr.bf16.mxu0 0
    %1473 = vmatpush1.bf16.msra.mxu0 0
    %1474 = vmatprep.subr.bf16.mxu0 0
    %1475 = vmatpush1.bf16.msra.mxu0 0
    %1476 = vmatprep.subr.bf16.mxu0 0
    %1477 = vmatpush1.bf16.msra.mxu0 0
    %1478 = vmatprep.subr.bf16.mxu0 0
    %1479 = vmatpush1.bf16.msra.mxu0 0
    %1480 = vmatprep.subr.bf16.mxu0 0
    %1481 = vmatpush1.bf16.msra.mxu0 0
    %1482 = vmatprep.subr.bf16.mxu0 0
    %1483 = vmatpush1.bf16.msra.mxu0 0
    %1484 = vmatprep.mubr.bf16.mxu0 0
    %1485 = vmatmul.mubr.bf16.gmra.mrb[0].mxu0 %v1450
    %v1486 = vpop.f32.mrb[0].mxu0
    %v1487 = vadd.f32 0.0, %v1486
    %v1488 = vpop.f32.mrb[0].mxu0
    %v1489 = vpop.f32.mrb[0].mxu0
    %v1490 = vadd.f32 0.0, %v1489
    %v1491 = vpop.f32.mrb[0].mxu0
    %1492 = vdwg.mxu0
    %1493 = vrot.lane.b32.xlu0 %v1129, 32
    %v1494 = vpop.permute.xlu0 %1493
    %1495 = vrot.lane.b32.xlu0 %v1130, 32
    %v1496 = vpop.permute.xlu0 %1495
    %v1498 = vsel %vm1132, %v1494, 0
    %v1501 = vsel %vm1132, %v1496, 0
    %1503 = vmatprep.subr.bf16.mxu0 0
    %1504 = vmatpush1.bf16.xpose.msra.mxu0 %v1501
    %1505 = vmatprep.subr.bf16.mxu0 0
    %1506 = vmatpush1.bf16.xpose.msra.mxu0 0
    %1507 = vmatprep.subr.bf16.mxu0 0
    %1508 = vmatpush1.bf16.xpose.msra.mxu0 0
    %1509 = vmatprep.subr.bf16.mxu0 0
    %1510 = vmatpush1.bf16.xpose.msra.mxu0 0
    %1511 = vmatprep.subr.bf16.mxu0 0
    %1512 = vmatpush1.bf16.xpose.msra.mxu0 0
    %1513 = vmatprep.subr.bf16.mxu0 0
    %1514 = vmatpush1.bf16.xpose.msra.mxu0 0
    %1515 = vmatprep.subr.bf16.mxu0 0
    %1516 = vmatpush1.bf16.xpose.msra.mxu0 0
    %1517 = vmatprep.subr.bf16.mxu0 0
    %1518 = vmatpush1.bf16.xpose.msra.mxu0 0
    %1519 = vmatprep.subr.bf16.mxu0 0
    %1520 = vmatpush1.bf16.xpose.msra.mxu0 0
    %1521 = vmatprep.subr.bf16.mxu0 0
    %1522 = vmatpush1.bf16.xpose.msra.mxu0 0
    %1523 = vmatprep.subr.bf16.mxu0 0
    %1524 = vmatpush1.bf16.xpose.msra.mxu0 0
    %1525 = vmatprep.subr.bf16.mxu0 0
    %1526 = vmatpush1.bf16.xpose.msra.mxu0 0
    %1527 = vmatprep.subr.bf16.mxu0 0
    %1528 = vmatpush1.bf16.xpose.msra.mxu0 0
    %1529 = vmatprep.subr.bf16.mxu0 0
    %1530 = vmatpush1.bf16.xpose.msra.mxu0 0
    %1531 = vmatprep.subr.bf16.mxu0 0
    %1532 = vmatpush1.bf16.xpose.msra.mxu0 0
    %1533 = vmatprep.subr.bf16.mxu0 0
    %1534 = vmatpush1.bf16.xpose.msra.mxu0 0
    %1535 = vmatprep.mubr.bf16.mxu0 0
    %1536 = vmatmul.mubr.bf16.gmra.mrb[0].mxu0 %v1498
    %v1537 = vpop.f32.mrb[0].mxu0
    %v1538 = vadd.f32 0.0, %v1537
    %v1539 = vpop.f32.mrb[0].mxu0
    %v1540 = vpop.f32.mrb[0].mxu0
    %v1541 = vadd.f32 0.0, %v1540
    %v1542 = vpop.f32.mrb[0].mxu0
    %1543 = vdwg.mxu0
    %v1544 = vsel %vm1180, %v1538, -inf
    %1545 = vmax.xlane.f32.xlu0 %v1544
    %v1546 = vpop.xlane.xlu0 %1545
    %v1547 = vsel %vm1180, %v1541, -inf
    %1548 = vmax.xlane.f32.xlu0 %v1547
    %v1549 = vpop.xlane.xlu0 %1548
    %v1550 = vsub.f32 %v1538, %v1546
    %v1551 = vsub.f32 %v1541, %v1549
    %v1552 = vmul.f32 %v1550, 1.442695
    %v1553 = vpow.pop %v1552
    %v1554 = vmul.f32 %v1551, 1.442695
    %v1555 = vpow.pop %v1554
    %v1556 = vsel %vm1180, %v1553, 0.0
    %1557 = vadd.xlane.f32.xlu0 %v1556
    %v1558 = vpop.xlane.xlu0 %1557
    %v1559 = vsel %vm1180, %v1555, 0.0
    %1560 = vadd.xlane.f32.xlu0 %v1559
    %v1561 = vpop.xlane.xlu0 %1560
    %v1562 = vrcp.pop %v1558
    %v1563 = vrcp.pop %v1561
    %v1564 = vmul.f32 %v1553, %v1562
    %v1565 = vmul.f32 %v1555, %v1563
    %v1566 = vpack.c.bf16 %v1565, %v1564
    %1567 = vrot.lane.b32.xlu0 %v1131, 32
    %v1568 = vpop.permute.xlu0 %1567
    %v1571 = vsel %vm1180, %v1566, 0
    %1573 = vmatprep.subr.bf16.mxu0 0
    %1574 = vmatpush1.bf16.msra.mxu0 %v1568
    %1575 = vmatprep.subr.bf16.mxu0 0
    %1576 = vmatpush1.bf16.msra.mxu0 0
    %1577 = vmatprep.subr.bf16.mxu0 0
    %1578 = vmatpush1.bf16.msra.mxu0 0
    %1579 = vmatprep.subr.bf16.mxu0 0
    %1580 = vmatpush1.bf16.msra.mxu0 0
    %1581 = vmatprep.subr.bf16.mxu0 0
    %1582 = vmatpush1.bf16.msra.mxu0 0
    %1583 = vmatprep.subr.bf16.mxu0 0
    %1584 = vmatpush1.bf16.msra.mxu0 0
    %1585 = vmatprep.subr.bf16.mxu0 0
    %1586 = vmatpush1.bf16.msra.mxu0 0
    %1587 = vmatprep.subr.bf16.mxu0 0
    %1588 = vmatpush1.bf16.msra.mxu0 0
    %1589 = vmatprep.subr.bf16.mxu0 0
    %1590 = vmatpush1.bf16.msra.mxu0 0
    %1591 = vmatprep.subr.bf16.mxu0 0
    %1592 = vmatpush1.bf16.msra.mxu0 0
    %1593 = vmatprep.subr.bf16.mxu0 0
    %1594 = vmatpush1.bf16.msra.mxu0 0
    %1595 = vmatprep.subr.bf16.mxu0 0
    %1596 = vmatpush1.bf16.msra.mxu0 0
    %1597 = vmatprep.subr.bf16.mxu0 0
    %1598 = vmatpush1.bf16.msra.mxu0 0
    %1599 = vmatprep.subr.bf16.mxu0 0
    %1600 = vmatpush1.bf16.msra.mxu0 0
    %1601 = vmatprep.subr.bf16.mxu0 0
    %1602 = vmatpush1.bf16.msra.mxu0 0
    %1603 = vmatprep.subr.bf16.mxu0 0
    %1604 = vmatpush1.bf16.msra.mxu0 0
    %1605 = vmatprep.mubr.bf16.mxu0 0
    %1606 = vmatmul.mubr.bf16.gmra.mrb[0].mxu0 %v1571
    %v1607 = vpop.f32.mrb[0].mxu0
    %v1608 = vadd.f32 0.0, %v1607
    %v1609 = vpop.f32.mrb[0].mxu0
    %v1610 = vpop.f32.mrb[0].mxu0
    %v1611 = vadd.f32 0.0, %v1610
    %v1612 = vpop.f32.mrb[0].mxu0
    %1613 = vdwg.mxu0
    %1616 = vrot.lane.b32.xlu0 %v1366, 32
    %v1617 = vpop.permute.xlu0 %1616
    %1618 = vrot.lane.b32.xlu0 %v1369, 32
    %v1619 = vpop.permute.xlu0 %1618
    %1624 = vrot.lane.b32.xlu0 %v1487, 64
    %v1625 = vpop.permute.xlu0 %1624
    %1626 = vrot.lane.b32.xlu0 %v1490, 64
    %v1627 = vpop.permute.xlu0 %1626
    %1632 = vrot.lane.b32.xlu0 %v1608, 96
    %v1633 = vpop.permute.xlu0 %1632
    %1634 = vrot.lane.b32.xlu0 %v1611, 96
    %v1635 = vpop.permute.xlu0 %1634
    %v1638 = vsel %vm1132, %v1242, %v1617
    %v1639 = vsel %vm1132, %v1245, %v1619
    %vm1640 = vcmask 523264
    %v1641 = vsel %vm1640, %v1638, %v1625
    %v1642 = vsel %vm1640, %v1639, %v1627
    %vm1643 = vcmask 785408
    %v1644 = vsel %vm1643, %v1641, %v1633
    %v1645 = vsel %vm1643, %v1642, %v1635
    %v1646 = vpack.c.bf16 %v1072, %v1068
    %v1647 = vpack.c.bf16 %v1074, %v1070
    %v1648 = vpack.c.bf16 %v1125, %v1121
    %v1650 = vsel %vm1132, %v1646, 0
    %v1653 = vsel %vm1132, %v1647, 0
    %1655 = vmatprep.subr.bf16.mxu0 0
    %1656 = vmatpush1.bf16.xpose.msra.mxu0 %v1653
    %1657 = vmatprep.subr.bf16.mxu0 0
    %1658 = vmatpush1.bf16.xpose.msra.mxu0 0
    %1659 = vmatprep.subr.bf16.mxu0 0
    %1660 = vmatpush1.bf16.xpose.msra.mxu0 0
    %1661 = vmatprep.subr.bf16.mxu0 0
    %1662 = vmatpush1.bf16.xpose.msra.mxu0 0
    %1663 = vmatprep.subr.bf16.mxu0 0
    %1664 = vmatpush1.bf16.xpose.msra.mxu0 0
    %1665 = vmatprep.subr.bf16.mxu0 0
    %1666 = vmatpush1.bf16.xpose.msra.mxu0 0
    %1667 = vmatprep.subr.bf16.mxu0 0
    %1668 = vmatpush1.bf16.xpose.msra.mxu0 0
    %1669 = vmatprep.subr.bf16.mxu0 0
    %1670 = vmatpush1.bf16.xpose.msra.mxu0 0
    %1671 = vmatprep.subr.bf16.mxu0 0
    %1672 = vmatpush1.bf16.xpose.msra.mxu0 0
    %1673 = vmatprep.subr.bf16.mxu0 0
    %1674 = vmatpush1.bf16.xpose.msra.mxu0 0
    %1675 = vmatprep.subr.bf16.mxu0 0
    %1676 = vmatpush1.bf16.xpose.msra.mxu0 0
    %1677 = vmatprep.subr.bf16.mxu0 0
    %1678 = vmatpush1.bf16.xpose.msra.mxu0 0
    %1679 = vmatprep.subr.bf16.mxu0 0
    %1680 = vmatpush1.bf16.xpose.msra.mxu0 0
    %1681 = vmatprep.subr.bf16.mxu0 0
    %1682 = vmatpush1.bf16.xpose.msra.mxu0 0
    %1683 = vmatprep.subr.bf16.mxu0 0
    %1684 = vmatpush1.bf16.xpose.msra.mxu0 0
    %1685 = vmatprep.subr.bf16.mxu0 0
    %1686 = vmatpush1.bf16.xpose.msra.mxu0 0
    %1687 = vmatprep.mubr.bf16.mxu0 0
    %1688 = vmatmul.mubr.bf16.gmra.mrb[0].mxu0 %v1650
    %v1689 = vpop.f32.mrb[0].mxu0
    %v1690 = vadd.f32 0.0, %v1689
    %v1691 = vpop.f32.mrb[0].mxu0
    %v1692 = vpop.f32.mrb[0].mxu0
    %v1693 = vadd.f32 0.0, %v1692
    %v1694 = vpop.f32.mrb[0].mxu0
    %1695 = vdwg.mxu0
    %v1696 = vsel %vm1180, %v1690, -inf
    %1697 = vmax.xlane.f32.xlu0 %v1696
    %v1698 = vpop.xlane.xlu0 %1697
    %v1699 = vsel %vm1180, %v1693, -inf
    %1700 = vmax.xlane.f32.xlu0 %v1699
    %v1701 = vpop.xlane.xlu0 %1700
    %v1702 = vsub.f32 %v1690, %v1698
    %v1703 = vsub.f32 %v1693, %v1701
    %v1704 = vmul.f32 %v1702, 1.442695
    %v1705 = vpow.pop %v1704
    %v1706 = vmul.f32 %v1703, 1.442695
    %v1707 = vpow.pop %v1706
    %v1708 = vsel %vm1180, %v1705, 0.0
    %1709 = vadd.xlane.f32.xlu0 %v1708
    %v1710 = vpop.xlane.xlu0 %1709
    %v1711 = vsel %vm1180, %v1707, 0.0
    %1712 = vadd.xlane.f32.xlu0 %v1711
    %v1713 = vpop.xlane.xlu0 %1712
    %v1714 = vrcp.pop %v1710
    %v1715 = vrcp.pop %v1713
    %v1716 = vmul.f32 %v1705, %v1714
    %v1717 = vmul.f32 %v1707, %v1715
    %v1718 = vpack.c.bf16 %v1717, %v1716
    %v1720 = vsel %vm1180, %v1718, 0
    %1722 = vmatprep.subr.bf16.mxu0 0
    %1723 = vmatpush1.bf16.msra.mxu0 %v1648
    %1724 = vmatprep.subr.bf16.mxu0 0
    %1725 = vmatpush1.bf16.msra.mxu0 0
    %1726 = vmatprep.subr.bf16.mxu0 0
    %1727 = vmatpush1.bf16.msra.mxu0 0
    %1728 = vmatprep.subr.bf16.mxu0 0
    %1729 = vmatpush1.bf16.msra.mxu0 0
    %1730 = vmatprep.subr.bf16.mxu0 0
    %1731 = vmatpush1.bf16.msra.mxu0 0
    %1732 = vmatprep.subr.bf16.mxu0 0
    %1733 = vmatpush1.bf16.msra.mxu0 0
    %1734 = vmatprep.subr.bf16.mxu0 0
    %1735 = vmatpush1.bf16.msra.mxu0 0
    %1736 = vmatprep.subr.bf16.mxu0 0
    %1737 = vmatpush1.bf16.msra.mxu0 0
    %1738 = vmatprep.subr.bf16.mxu0 0
    %1739 = vmatpush1.bf16.msra.mxu0 0
    %1740 = vmatprep.subr.bf16.mxu0 0
    %1741 = vmatpush1.bf16.msra.mxu0 0
    %1742 = vmatprep.subr.bf16.mxu0 0
    %1743 = vmatpush1.bf16.msra.mxu0 0
    %1744 = vmatprep.subr.bf16.mxu0 0
    %1745 = vmatpush1.bf16.msra.mxu0 0
    %1746 = vmatprep.subr.bf16.mxu0 0
    %1747 = vmatpush1.bf16.msra.mxu0 0
    %1748 = vmatprep.subr.bf16.mxu0 0
    %1749 = vmatpush1.bf16.msra.mxu0 0
    %1750 = vmatprep.subr.bf16.mxu0 0
    %1751 = vmatpush1.bf16.msra.mxu0 0
    %1752 = vmatprep.subr.bf16.mxu0 0
    %1753 = vmatpush1.bf16.msra.mxu0 0
    %1754 = vmatprep.mubr.bf16.mxu0 0
    %1755 = vmatmul.mubr.bf16.gmra.mrb[0].mxu0 %v1720
    %v1756 = vpop.f32.mrb[0].mxu0
    %v1757 = vadd.f32 0.0, %v1756
    %v1758 = vpop.f32.mrb[0].mxu0
    %v1759 = vpop.f32.mrb[0].mxu0
    %v1760 = vadd.f32 0.0, %v1759
    %v1761 = vpop.f32.mrb[0].mxu0
    %1762 = vdwg.mxu0
    %1764 = vrot.lane.b32.xlu0 %v1646, 96
    %v1765 = vpop.permute.xlu0 %1764
    %1767 = vrot.lane.b32.xlu0 %v1647, 96
    %v1768 = vpop.permute.xlu0 %1767
    %v1770 = vsel %vm1132, %v1765, 0
    %v1773 = vsel %vm1132, %v1768, 0
    %1775 = vmatprep.subr.bf16.mxu0 0
    %1776 = vmatpush1.bf16.xpose.msra.mxu0 %v1773
    %1777 = vmatprep.subr.bf16.mxu0 0
    %1778 = vmatpush1.bf16.xpose.msra.mxu0 0
    %1779 = vmatprep.subr.bf16.mxu0 0
    %1780 = vmatpush1.bf16.xpose.msra.mxu0 0
    %1781 = vmatprep.subr.bf16.mxu0 0
    %1782 = vmatpush1.bf16.xpose.msra.mxu0 0
    %1783 = vmatprep.subr.bf16.mxu0 0
    %1784 = vmatpush1.bf16.xpose.msra.mxu0 0
    %1785 = vmatprep.subr.bf16.mxu0 0
    %1786 = vmatpush1.bf16.xpose.msra.mxu0 0
    %1787 = vmatprep.subr.bf16.mxu0 0
    %1788 = vmatpush1.bf16.xpose.msra.mxu0 0
    %1789 = vmatprep.subr.bf16.mxu0 0
    %1790 = vmatpush1.bf16.xpose.msra.mxu0 0
    %1791 = vmatprep.subr.bf16.mxu0 0
    %1792 = vmatpush1.bf16.xpose.msra.mxu0 0
    %1793 = vmatprep.subr.bf16.mxu0 0
    %1794 = vmatpush1.bf16.xpose.msra.mxu0 0
    %1795 = vmatprep.subr.bf16.mxu0 0
    %1796 = vmatpush1.bf16.xpose.msra.mxu0 0
    %1797 = vmatprep.subr.bf16.mxu0 0
    %1798 = vmatpush1.bf16.xpose.msra.mxu0 0
    %1799 = vmatprep.subr.bf16.mxu0 0
    %1800 = vmatpush1.bf16.xpose.msra.mxu0 0
    %1801 = vmatprep.subr.bf16.mxu0 0
    %1802 = vmatpush1.bf16.xpose.msra.mxu0 0
    %1803 = vmatprep.subr.bf16.mxu0 0
    %1804 = vmatpush1.bf16.xpose.msra.mxu0 0
    %1805 = vmatprep.subr.bf16.mxu0 0
    %1806 = vmatpush1.bf16.xpose.msra.mxu0 0
    %1807 = vmatprep.mubr.bf16.mxu0 0
    %1808 = vmatmul.mubr.bf16.gmra.mrb[0].mxu0 %v1770
    %v1809 = vpop.f32.mrb[0].mxu0
    %v1810 = vadd.f32 0.0, %v1809
    %v1811 = vpop.f32.mrb[0].mxu0
    %v1812 = vpop.f32.mrb[0].mxu0
    %v1813 = vadd.f32 0.0, %v1812
    %v1814 = vpop.f32.mrb[0].mxu0
    %1815 = vdwg.mxu0
    %v1816 = vsel %vm1180, %v1810, -inf
    %1817 = vmax.xlane.f32.xlu0 %v1816
    %v1818 = vpop.xlane.xlu0 %1817
    %v1819 = vsel %vm1180, %v1813, -inf
    %1820 = vmax.xlane.f32.xlu0 %v1819
    %v1821 = vpop.xlane.xlu0 %1820
    %v1822 = vsub.f32 %v1810, %v1818
    %v1823 = vsub.f32 %v1813, %v1821
    %v1824 = vmul.f32 %v1822, 1.442695
    %v1825 = vpow.pop %v1824
    %v1826 = vmul.f32 %v1823, 1.442695
    %v1827 = vpow.pop %v1826
    %v1828 = vsel %vm1180, %v1825, 0.0
    %1829 = vadd.xlane.f32.xlu0 %v1828
    %v1830 = vpop.xlane.xlu0 %1829
    %v1831 = vsel %vm1180, %v1827, 0.0
    %1832 = vadd.xlane.f32.xlu0 %v1831
    %v1833 = vpop.xlane.xlu0 %1832
    %v1834 = vrcp.pop %v1830
    %v1835 = vrcp.pop %v1833
    %v1836 = vmul.f32 %v1825, %v1834
    %v1837 = vmul.f32 %v1827, %v1835
    %v1838 = vpack.c.bf16 %v1837, %v1836
    %1840 = vrot.lane.b32.xlu0 %v1648, 96
    %v1841 = vpop.permute.xlu0 %1840
    %v1844 = vsel %vm1180, %v1838, 0
    %1846 = vmatprep.subr.bf16.mxu0 0
    %1847 = vmatpush1.bf16.msra.mxu0 %v1841
    %1848 = vmatprep.subr.bf16.mxu0 0
    %1849 = vmatpush1.bf16.msra.mxu0 0
    %1850 = vmatprep.subr.bf16.mxu0 0
    %1851 = vmatpush1.bf16.msra.mxu0 0
    %1852 = vmatprep.subr.bf16.mxu0 0
    %1853 = vmatpush1.bf16.msra.mxu0 0
    %1854 = vmatprep.subr.bf16.mxu0 0
    %1855 = vmatpush1.bf16.msra.mxu0 0
    %1856 = vmatprep.subr.bf16.mxu0 0
    %1857 = vmatpush1.bf16.msra.mxu0 0
    %1858 = vmatprep.subr.bf16.mxu0 0
    %1859 = vmatpush1.bf16.msra.mxu0 0
    %1860 = vmatprep.subr.bf16.mxu0 0
    %1861 = vmatpush1.bf16.msra.mxu0 0
    %1862 = vmatprep.subr.bf16.mxu0 0
    %1863 = vmatpush1.bf16.msra.mxu0 0
    %1864 = vmatprep.subr.bf16.mxu0 0
    %1865 = vmatpush1.bf16.msra.mxu0 0
    %1866 = vmatprep.subr.bf16.mxu0 0
    %1867 = vmatpush1.bf16.msra.mxu0 0
    %1868 = vmatprep.subr.bf16.mxu0 0
    %1869 = vmatpush1.bf16.msra.mxu0 0
    %1870 = vmatprep.subr.bf16.mxu0 0
    %1871 = vmatpush1.bf16.msra.mxu0 0
    %1872 = vmatprep.subr.bf16.mxu0 0
    %1873 = vmatpush1.bf16.msra.mxu0 0
    %1874 = vmatprep.subr.bf16.mxu0 0
    %1875 = vmatpush1.bf16.msra.mxu0 0
    %1876 = vmatprep.subr.bf16.mxu0 0
    %1877 = vmatpush1.bf16.msra.mxu0 0
    %1878 = vmatprep.mubr.bf16.mxu0 0
    %1879 = vmatmul.mubr.bf16.gmra.mrb[0].mxu0 %v1844
    %v1880 = vpop.f32.mrb[0].mxu0
    %v1881 = vadd.f32 0.0, %v1880
    %v1882 = vpop.f32.mrb[0].mxu0
    %v1883 = vpop.f32.mrb[0].mxu0
    %v1884 = vadd.f32 0.0, %v1883
    %v1885 = vpop.f32.mrb[0].mxu0
    %1886 = vdwg.mxu0
    %1887 = vrot.lane.b32.xlu0 %v1646, 64
    %v1888 = vpop.permute.xlu0 %1887
    %1889 = vrot.lane.b32.xlu0 %v1647, 64
    %v1890 = vpop.permute.xlu0 %1889
    %v1892 = vsel %vm1132, %v1888, 0
    %v1895 = vsel %vm1132, %v1890, 0
    %1897 = vmatprep.subr.bf16.mxu0 0
    %1898 = vmatpush1.bf16.xpose.msra.mxu0 %v1895
    %1899 = vmatprep.subr.bf16.mxu0 0
    %1900 = vmatpush1.bf16.xpose.msra.mxu0 0
    %1901 = vmatprep.subr.bf16.mxu0 0
    %1902 = vmatpush1.bf16.xpose.msra.mxu0 0
    %1903 = vmatprep.subr.bf16.mxu0 0
    %1904 = vmatpush1.bf16.xpose.msra.mxu0 0
    %1905 = vmatprep.subr.bf16.mxu0 0
    %1906 = vmatpush1.bf16.xpose.msra.mxu0 0
    %1907 = vmatprep.subr.bf16.mxu0 0
    %1908 = vmatpush1.bf16.xpose.msra.mxu0 0
    %1909 = vmatprep.subr.bf16.mxu0 0
    %1910 = vmatpush1.bf16.xpose.msra.mxu0 0
    %1911 = vmatprep.subr.bf16.mxu0 0
    %1912 = vmatpush1.bf16.xpose.msra.mxu0 0
    %1913 = vmatprep.subr.bf16.mxu0 0
    %1914 = vmatpush1.bf16.xpose.msra.mxu0 0
    %1915 = vmatprep.subr.bf16.mxu0 0
    %1916 = vmatpush1.bf16.xpose.msra.mxu0 0
    %1917 = vmatprep.subr.bf16.mxu0 0
    %1918 = vmatpush1.bf16.xpose.msra.mxu0 0
    %1919 = vmatprep.subr.bf16.mxu0 0
    %1920 = vmatpush1.bf16.xpose.msra.mxu0 0
    %1921 = vmatprep.subr.bf16.mxu0 0
    %1922 = vmatpush1.bf16.xpose.msra.mxu0 0
    %1923 = vmatprep.subr.bf16.mxu0 0
    %1924 = vmatpush1.bf16.xpose.msra.mxu0 0
    %1925 = vmatprep.subr.bf16.mxu0 0
    %1926 = vmatpush1.bf16.xpose.msra.mxu0 0
    %1927 = vmatprep.subr.bf16.mxu0 0
    %1928 = vmatpush1.bf16.xpose.msra.mxu0 0
    %1929 = vmatprep.mubr.bf16.mxu0 0
    %1930 = vmatmul.mubr.bf16.gmra.mrb[0].mxu0 %v1892
    %v1931 = vpop.f32.mrb[0].mxu0
    %v1932 = vadd.f32 0.0, %v1931
    %v1933 = vpop.f32.mrb[0].mxu0
    %v1934 = vpop.f32.mrb[0].mxu0
    %v1935 = vadd.f32 0.0, %v1934
    %v1936 = vpop.f32.mrb[0].mxu0
    %1937 = vdwg.mxu0
    %v1938 = vsel %vm1180, %v1932, -inf
    %1939 = vmax.xlane.f32.xlu0 %v1938
    %v1940 = vpop.xlane.xlu0 %1939
    %v1941 = vsel %vm1180, %v1935, -inf
    %1942 = vmax.xlane.f32.xlu0 %v1941
    %v1943 = vpop.xlane.xlu0 %1942
    %v1944 = vsub.f32 %v1932, %v1940
    %v1945 = vsub.f32 %v1935, %v1943
    %v1946 = vmul.f32 %v1944, 1.442695
    %v1947 = vpow.pop %v1946
    %v1948 = vmul.f32 %v1945, 1.442695
    %v1949 = vpow.pop %v1948
    %v1950 = vsel %vm1180, %v1947, 0.0
    %1951 = vadd.xlane.f32.xlu0 %v1950
    %v1952 = vpop.xlane.xlu0 %1951
    %v1953 = vsel %vm1180, %v1949, 0.0
    %1954 = vadd.xlane.f32.xlu0 %v1953
    %v1955 = vpop.xlane.xlu0 %1954
    %v1956 = vrcp.pop %v1952
    %v1957 = vrcp.pop %v1955
    %v1958 = vmul.f32 %v1947, %v1956
    %v1959 = vmul.f32 %v1949, %v1957
    %v1960 = vpack.c.bf16 %v1959, %v1958
    %1961 = vrot.lane.b32.xlu0 %v1648, 64
    %v1962 = vpop.permute.xlu0 %1961
    %v1965 = vsel %vm1180, %v1960, 0
    %1967 = vmatprep.subr.bf16.mxu0 0
    %1968 = vmatpush1.bf16.msra.mxu0 %v1962
    %1969 = vmatprep.subr.bf16.mxu0 0
    %1970 = vmatpush1.bf16.msra.mxu0 0
    %1971 = vmatprep.subr.bf16.mxu0 0
    %1972 = vmatpush1.bf16.msra.mxu0 0
    %1973 = vmatprep.subr.bf16.mxu0 0
    %1974 = vmatpush1.bf16.msra.mxu0 0
    %1975 = vmatprep.subr.bf16.mxu0 0
    %1976 = vmatpush1.bf16.msra.mxu0 0
    %1977 = vmatprep.subr.bf16.mxu0 0
    %1978 = vmatpush1.bf16.msra.mxu0 0
    %1979 = vmatprep.subr.bf16.mxu0 0
    %1980 = vmatpush1.bf16.msra.mxu0 0
    %1981 = vmatprep.subr.bf16.mxu0 0
    %1982 = vmatpush1.bf16.msra.mxu0 0
    %1983 = vmatprep.subr.bf16.mxu0 0
    %1984 = vmatpush1.bf16.msra.mxu0 0
    %1985 = vmatprep.subr.bf16.mxu0 0
    %1986 = vmatpush1.bf16.msra.mxu0 0
    %1987 = vmatprep.subr.bf16.mxu0 0
    %1988 = vmatpush1.bf16.msra.mxu0 0
    %1989 = vmatprep.subr.bf16.mxu0 0
    %1990 = vmatpush1.bf16.msra.mxu0 0
    %1991 = vmatprep.subr.bf16.mxu0 0
    %1992 = vmatpush1.bf16.msra.mxu0 0
    %1993 = vmatprep.subr.bf16.mxu0 0
    %1994 = vmatpush1.bf16.msra.mxu0 0
    %1995 = vmatprep.subr.bf16.mxu0 0
    %1996 = vmatpush1.bf16.msra.mxu0 0
    %1997 = vmatprep.subr.bf16.mxu0 0
    %1998 = vmatpush1.bf16.msra.mxu0 0
    %1999 = vmatprep.mubr.bf16.mxu0 0
    %2000 = vmatmul.mubr.bf16.gmra.mrb[0].mxu0 %v1965
    %v2001 = vpop.f32.mrb[0].mxu0
    %v2002 = vadd.f32 0.0, %v2001
    %v2003 = vpop.f32.mrb[0].mxu0
    %v2004 = vpop.f32.mrb[0].mxu0
    %v2005 = vadd.f32 0.0, %v2004
    %v2006 = vpop.f32.mrb[0].mxu0
    %2007 = vdwg.mxu0
    %2008 = vrot.lane.b32.xlu0 %v1646, 32
    %v2009 = vpop.permute.xlu0 %2008
    %2010 = vrot.lane.b32.xlu0 %v1647, 32
    %v2011 = vpop.permute.xlu0 %2010
    %v2013 = vsel %vm1132, %v2009, 0
    %v2016 = vsel %vm1132, %v2011, 0
    %2018 = vmatprep.subr.bf16.mxu0 0
    %2019 = vmatpush1.bf16.xpose.msra.mxu0 %v2016
    %2020 = vmatprep.subr.bf16.mxu0 0
    %2021 = vmatpush1.bf16.xpose.msra.mxu0 0
    %2022 = vmatprep.subr.bf16.mxu0 0
    %2023 = vmatpush1.bf16.xpose.msra.mxu0 0
    %2024 = vmatprep.subr.bf16.mxu0 0
    %2025 = vmatpush1.bf16.xpose.msra.mxu0 0
    %2026 = vmatprep.subr.bf16.mxu0 0
    %2027 = vmatpush1.bf16.xpose.msra.mxu0 0
    %2028 = vmatprep.subr.bf16.mxu0 0
    %2029 = vmatpush1.bf16.xpose.msra.mxu0 0
    %2030 = vmatprep.subr.bf16.mxu0 0
    %2031 = vmatpush1.bf16.xpose.msra.mxu0 0
    %2032 = vmatprep.subr.bf16.mxu0 0
    %2033 = vmatpush1.bf16.xpose.msra.mxu0 0
    %2034 = vmatprep.subr.bf16.mxu0 0
    %2035 = vmatpush1.bf16.xpose.msra.mxu0 0
    %2036 = vmatprep.subr.bf16.mxu0 0
    %2037 = vmatpush1.bf16.xpose.msra.mxu0 0
    %2038 = vmatprep.subr.bf16.mxu0 0
    %2039 = vmatpush1.bf16.xpose.msra.mxu0 0
    %2040 = vmatprep.subr.bf16.mxu0 0
    %2041 = vmatpush1.bf16.xpose.msra.mxu0 0
    %2042 = vmatprep.subr.bf16.mxu0 0
    %2043 = vmatpush1.bf16.xpose.msra.mxu0 0
    %2044 = vmatprep.subr.bf16.mxu0 0
    %2045 = vmatpush1.bf16.xpose.msra.mxu0 0
    %2046 = vmatprep.subr.bf16.mxu0 0
    %2047 = vmatpush1.bf16.xpose.msra.mxu0 0
    %2048 = vmatprep.subr.bf16.mxu0 0
    %2049 = vmatpush1.bf16.xpose.msra.mxu0 0
    %2050 = vmatprep.mubr.bf16.mxu0 0
    %2051 = vmatmul.mubr.bf16.gmra.mrb[0].mxu0 %v2013
    %v2052 = vpop.f32.mrb[0].mxu0
    %v2053 = vadd.f32 0.0, %v2052
    %v2054 = vpop.f32.mrb[0].mxu0
    %v2055 = vpop.f32.mrb[0].mxu0
    %v2056 = vadd.f32 0.0, %v2055
    %v2057 = vpop.f32.mrb[0].mxu0
    %2058 = vdwg.mxu0
    %v2059 = vsel %vm1180, %v2053, -inf
    %2060 = vmax.xlane.f32.xlu0 %v2059
    %v2061 = vpop.xlane.xlu0 %2060
    %v2062 = vsel %vm1180, %v2056, -inf
    %2063 = vmax.xlane.f32.xlu0 %v2062
    %v2064 = vpop.xlane.xlu0 %2063
    %v2065 = vsub.f32 %v2053, %v2061
    %v2066 = vsub.f32 %v2056, %v2064
    %v2067 = vmul.f32 %v2065, 1.442695
    %v2068 = vpow.pop %v2067
    %v2069 = vmul.f32 %v2066, 1.442695
    %v2070 = vpow.pop %v2069
    %v2071 = vsel %vm1180, %v2068, 0.0
    %2072 = vadd.xlane.f32.xlu0 %v2071
    %v2073 = vpop.xlane.xlu0 %2072
    %v2074 = vsel %vm1180, %v2070, 0.0
    %2075 = vadd.xlane.f32.xlu0 %v2074
    %v2076 = vpop.xlane.xlu0 %2075
    %v2077 = vrcp.pop %v2073
    %v2078 = vrcp.pop %v2076
    %v2079 = vmul.f32 %v2068, %v2077
    %v2080 = vmul.f32 %v2070, %v2078
    %v2081 = vpack.c.bf16 %v2080, %v2079
    %2082 = vrot.lane.b32.xlu0 %v1648, 32
    %v2083 = vpop.permute.xlu0 %2082
    %v2086 = vsel %vm1180, %v2081, 0
    %2088 = vmatprep.subr.bf16.mxu0 0
    %2089 = vmatpush1.bf16.msra.mxu0 %v2083
    %2090 = vmatprep.subr.bf16.mxu0 0
    %2091 = vmatpush1.bf16.msra.mxu0 0
    %2092 = vmatprep.subr.bf16.mxu0 0
    %2093 = vmatpush1.bf16.msra.mxu0 0
    %2094 = vmatprep.subr.bf16.mxu0 0
    %2095 = vmatpush1.bf16.msra.mxu0 0
    %2096 = vmatprep.subr.bf16.mxu0 0
    %2097 = vmatpush1.bf16.msra.mxu0 0
    %2098 = vmatprep.subr.bf16.mxu0 0
    %2099 = vmatpush1.bf16.msra.mxu0 0
    %2100 = vmatprep.subr.bf16.mxu0 0
    %2101 = vmatpush1.bf16.msra.mxu0 0
    %2102 = vmatprep.subr.bf16.mxu0 0
    %2103 = vmatpush1.bf16.msra.mxu0 0
    %2104 = vmatprep.subr.bf16.mxu0 0
    %2105 = vmatpush1.bf16.msra.mxu0 0
    %2106 = vmatprep.subr.bf16.mxu0 0
    %2107 = vmatpush1.bf16.msra.mxu0 0
    %2108 = vmatprep.subr.bf16.mxu0 0
    %2109 = vmatpush1.bf16.msra.mxu0 0
    %2110 = vmatprep.subr.bf16.mxu0 0
    %2111 = vmatpush1.bf16.msra.mxu0 0
    %2112 = vmatprep.subr.bf16.mxu0 0
    %2113 = vmatpush1.bf16.msra.mxu0 0
    %2114 = vmatprep.subr.bf16.mxu0 0
    %2115 = vmatpush1.bf16.msra.mxu0 0
    %2116 = vmatprep.subr.bf16.mxu0 0
    %2117 = vmatpush1.bf16.msra.mxu0 0
    %2118 = vmatprep.subr.bf16.mxu0 0
    %2119 = vmatpush1.bf16.msra.mxu0 0
    %2120 = vmatprep.mubr.bf16.mxu0 0
    %2121 = vmatmul.mubr.bf16.gmra.mrb[0].mxu0 %v2086
    %v2122 = vpop.f32.mrb[0].mxu0
    %v2123 = vadd.f32 0.0, %v2122
    %v2124 = vpop.f32.mrb[0].mxu0
    %v2125 = vpop.f32.mrb[0].mxu0
    %v2126 = vadd.f32 0.0, %v2125
    %v2127 = vpop.f32.mrb[0].mxu0
    %2128 = vdwg.mxu0
    %2131 = vrot.lane.b32.xlu0 %v1881, 32
    %v2132 = vpop.permute.xlu0 %2131
    %2133 = vrot.lane.b32.xlu0 %v1884, 32
    %v2134 = vpop.permute.xlu0 %2133
    %2139 = vrot.lane.b32.xlu0 %v2002, 64
    %v2140 = vpop.permute.xlu0 %2139
    %2141 = vrot.lane.b32.xlu0 %v2005, 64
    %v2142 = vpop.permute.xlu0 %2141
    %2147 = vrot.lane.b32.xlu0 %v2123, 96
    %v2148 = vpop.permute.xlu0 %2147
    %2149 = vrot.lane.b32.xlu0 %v2126, 96
    %v2150 = vpop.permute.xlu0 %2149
    %v2153 = vsel %vm1132, %v1757, %v2132
    %v2154 = vsel %vm1132, %v1760, %v2134
    %v2155 = vsel %vm1640, %v2153, %v2140
    %v2156 = vsel %vm1640, %v2154, %v2142
    %v2157 = vsel %vm1643, %v2155, %v2148
    %v2158 = vsel %vm1643, %v2156, %v2150
    %v2159 = vpack.c.bf16 %v1645, %v1644
    %v2160 = vpack.c.bf16 %v2158, %v2157
    %v2161 = vld [vmem:[#allocation7 + $0x18] sm:$0xf]
    %v2162 = vld [vmem:[#allocation7 + $0x40] sm:$0xf]
    %v2163 = vld [vmem:[#allocation7 + $0x68] sm:$0xf]
    %v2164 = vld [vmem:[#allocation7 + $0x90] sm:$0xf]
    %v2165 = vld [vmem:[#allocation7 + $0xb8] sm:$0xf]
    %v2166 = vld [vmem:[#allocation7 + $0xe0] sm:$0xf]
    %v2167 = vld [vmem:[#allocation7 + $0x108] sm:$0xf]
    %v2168 = vld [vmem:[#allocation7 + $0x130] sm:$0xf]
    %v2169 = vld [vmem:[#allocation7 + $0x158] sm:$0xf]
    %v2170 = vld [vmem:[#allocation7 + $0x180] sm:$0xf]
    %v2171 = vld [vmem:[#allocation7 + $0x1a8] sm:$0xf]
    %v2172 = vld [vmem:[#allocation7 + $0x1d0] sm:$0xf]
    %v2173 = vld [vmem:[#allocation7 + $0x1f8] sm:$0xf]
    %v2174 = vld [vmem:[#allocation7 + $0x220] sm:$0xf]
    %v2175 = vld [vmem:[#allocation7 + $0x248] sm:$0xf]
    %v2176 = vld [vmem:[#allocation7 + $0x270] sm:$0xf]
    %v2177 = vld [vmem:[#allocation9 + $0x8] sm:$0x1]
    %v2179 = vlaneseq
    %v2180 = vshrl.u32 %v2179, 7
    %v2181 = vsub.s32 0, %v2180
    %v2182 = vrot.slane %v2177, %v2181
    %v2200 = vunpack.c.l.b16 %v2161
    %v2201 = vunpack.c.l.b16 %v2162
    %v2202 = vunpack.c.l.b16 %v2163
    %v2203 = vunpack.c.l.b16 %v2164
    %v2204 = vunpack.c.l.b16 %v2165
    %v2205 = vunpack.c.l.b16 %v2166
    %v2206 = vunpack.c.l.b16 %v2167
    %v2207 = vunpack.c.l.b16 %v2168
    %v2208 = vunpack.c.l.b16 %v2169
    %v2209 = vunpack.c.l.b16 %v2170
    %v2210 = vunpack.c.l.b16 %v2171
    %v2211 = vunpack.c.l.b16 %v2172
    %v2212 = vunpack.c.l.b16 %v2173
    %v2213 = vunpack.c.l.b16 %v2174
    %v2214 = vunpack.c.l.b16 %v2175
    %v2215 = vunpack.c.l.b16 %v2176
    %v2216 = vpack.c.b16 %v2201, %v2200
    %v2217 = vpack.c.b16 %v2203, %v2202
    %v2218 = vpack.c.b16 %v2205, %v2204
    %v2219 = vpack.c.b16 %v2207, %v2206
    %v2220 = vpack.c.b16 %v2209, %v2208
    %v2221 = vpack.c.b16 %v2211, %v2210
    %v2222 = vpack.c.b16 %v2213, %v2212
    %v2223 = vpack.c.b16 %v2215, %v2214
    %2232 = vmatprep.subr.bf16.mxu0 0
    %2233 = vmatpush1.bf16.msra.mxu0 %v2216
    %2234 = vmatprep.subr.bf16.mxu0 0
    %2235 = vmatpush1.bf16.msra.mxu0 %v2217
    %2236 = vmatprep.subr.bf16.mxu0 0
    %2237 = vmatpush1.bf16.msra.mxu0 %v2218
    %2238 = vmatprep.subr.bf16.mxu0 0
    %2239 = vmatpush1.bf16.msra.mxu0 %v2219
    %2240 = vmatprep.subr.bf16.mxu0 0
    %2241 = vmatpush1.bf16.msra.mxu0 %v2220
    %2242 = vmatprep.subr.bf16.mxu0 0
    %2243 = vmatpush1.bf16.msra.mxu0 %v2221
    %2244 = vmatprep.subr.bf16.mxu0 0
    %2245 = vmatpush1.bf16.msra.mxu0 %v2222
    %2246 = vmatprep.subr.bf16.mxu0 0
    %2247 = vmatpush1.bf16.msra.mxu0 %v2223
    %2248 = vmatprep.subr.bf16.mxu0 0
    %2249 = vmatpush1.bf16.msra.mxu0 0
    %2250 = vmatprep.subr.bf16.mxu0 0
    %2251 = vmatpush1.bf16.msra.mxu0 0
    %2252 = vmatprep.subr.bf16.mxu0 0
    %2253 = vmatpush1.bf16.msra.mxu0 0
    %2254 = vmatprep.subr.bf16.mxu0 0
    %2255 = vmatpush1.bf16.msra.mxu0 0
    %2256 = vmatprep.subr.bf16.mxu0 0
    %2257 = vmatpush1.bf16.msra.mxu0 0
    %2258 = vmatprep.subr.bf16.mxu0 0
    %2259 = vmatpush1.bf16.msra.mxu0 0
    %2260 = vmatprep.subr.bf16.mxu0 0
    %2261 = vmatpush1.bf16.msra.mxu0 0
    %2262 = vmatprep.subr.bf16.mxu0 0
    %2263 = vmatpush1.bf16.msra.mxu0 0
    %2264 = vmatprep.mubr.bf16.mxu0 0
    %2265 = vmatmul.mubr.bf16.gmra.mrb[0].mxu0 %v2159
    %v2266 = vpop.f32.mrb[0].mxu0
    %v2267 = vadd.f32 %v2182, %v2266
    %v2268 = vpop.f32.mrb[0].mxu0
    %v2269 = vpop.f32.mrb[0].mxu0
    %v2270 = vadd.f32 %v2182, %v2269
    %v2271 = vpop.f32.mrb[0].mxu0
    %2272 = vmatprep.mubr.bf16.mxu0 0
    %2273 = vmatmul.mubr.bf16.gmra.mrb[0].mxu0 %v2160
    %v2274 = vpop.f32.mrb[0].mxu0
    %v2275 = vadd.f32 %v2182, %v2274
    %v2276 = vpop.f32.mrb[0].mxu0
    %v2277 = vpop.f32.mrb[0].mxu0
    %v2278 = vadd.f32 %v2182, %v2277
    %v2279 = vpop.f32.mrb[0].mxu0
    %2280 = vdwg.mxu0
    %v2281 = vpack.c.bf16 %v2270, %v2267
    %v2282 = vpack.c.bf16 %v2278, %v2275
    %v2283 = vld [vmem:[#allocation7 + $0x10] sm:$0xff]
    %v2284 = vld [vmem:[#allocation7 + $0x38] sm:$0xff]
    %v2285 = vld [vmem:[#allocation7 + $0x60] sm:$0xff]
    %v2286 = vld [vmem:[#allocation7 + $0x88] sm:$0xff]
    %v2287 = vld [vmem:[#allocation7 + $0xb0] sm:$0xff]
    %v2288 = vld [vmem:[#allocation7 + $0xd8] sm:$0xff]
    %v2289 = vld [vmem:[#allocation7 + $0x100] sm:$0xff]
    %v2290 = vld [vmem:[#allocation7 + $0x128] sm:$0xff]
    %v2291 = vld [vmem:[#allocation7 + $0x150] sm:$0xff]
    %v2292 = vld [vmem:[#allocation7 + $0x178] sm:$0xff]
    %v2293 = vld [vmem:[#allocation7 + $0x1a0] sm:$0xff]
    %v2294 = vld [vmem:[#allocation7 + $0x1c8] sm:$0xff]
    %v2295 = vld [vmem:[#allocation7 + $0x1f0] sm:$0xff]
    %v2296 = vld [vmem:[#allocation7 + $0x218] sm:$0xff]
    %v2297 = vld [vmem:[#allocation7 + $0x240] sm:$0xff]
    %v2298 = vld [vmem:[#allocation7 + $0x268] sm:$0xff]
    %v2299 = vld [vmem:[#allocation9 + $0x6] sm:$0x3]
    %v2301 = vlaneseq
    %v2302 = vshrl.u32 %v2301, 7
    %v2303 = vsub.s32 0, %v2302
    %v2304 = vrot.slane %v2299, %v2303
    %v2305 = vlaneseq
    %v2306 = vshrl.u32 %v2305, 7
    %v2307 = vsub.s32 1, %v2306
    %v2308 = vrot.slane %v2299, %v2307
    %v2327 = vunpack.c.l.b16 %v2283
    %v2328 = vunpack.c.h.b16 %v2283
    %v2329 = vunpack.c.l.b16 %v2284
    %v2330 = vunpack.c.h.b16 %v2284
    %v2331 = vunpack.c.l.b16 %v2285
    %v2332 = vunpack.c.h.b16 %v2285
    %v2333 = vunpack.c.l.b16 %v2286
    %v2334 = vunpack.c.h.b16 %v2286
    %v2335 = vunpack.c.l.b16 %v2287
    %v2336 = vunpack.c.h.b16 %v2287
    %v2337 = vunpack.c.l.b16 %v2288
    %v2338 = vunpack.c.h.b16 %v2288
    %v2339 = vunpack.c.l.b16 %v2289
    %v2340 = vunpack.c.h.b16 %v2289
    %v2341 = vunpack.c.l.b16 %v2290
    %v2342 = vunpack.c.h.b16 %v2290
    %v2343 = vunpack.c.l.b16 %v2291
    %v2344 = vunpack.c.h.b16 %v2291
    %v2345 = vunpack.c.l.b16 %v2292
    %v2346 = vunpack.c.h.b16 %v2292
    %v2347 = vunpack.c.l.b16 %v2293
    %v2348 = vunpack.c.h.b16 %v2293
    %v2349 = vunpack.c.l.b16 %v2294
    %v2350 = vunpack.c.h.b16 %v2294
    %v2351 = vunpack.c.l.b16 %v2295
    %v2352 = vunpack.c.h.b16 %v2295
    %v2353 = vunpack.c.l.b16 %v2296
    %v2354 = vunpack.c.h.b16 %v2296
    %v2355 = vunpack.c.l.b16 %v2297
    %v2356 = vunpack.c.h.b16 %v2297
    %v2357 = vunpack.c.l.b16 %v2298
    %v2358 = vunpack.c.h.b16 %v2298
    %v2359 = vpack.c.b16 %v2329, %v2327
    %v2360 = vpack.c.b16 %v2330, %v2328
    %v2361 = vpack.c.b16 %v2333, %v2331
    %v2362 = vpack.c.b16 %v2334, %v2332
    %v2363 = vpack.c.b16 %v2337, %v2335
    %v2364 = vpack.c.b16 %v2338, %v2336
    %v2365 = vpack.c.b16 %v2341, %v2339
    %v2366 = vpack.c.b16 %v2342, %v2340
    %v2367 = vpack.c.b16 %v2345, %v2343
    %v2368 = vpack.c.b16 %v2346, %v2344
    %v2369 = vpack.c.b16 %v2349, %v2347
    %v2370 = vpack.c.b16 %v2350, %v2348
    %v2371 = vpack.c.b16 %v2353, %v2351
    %v2372 = vpack.c.b16 %v2354, %v2352
    %v2373 = vpack.c.b16 %v2357, %v2355
    %v2374 = vpack.c.b16 %v2358, %v2356
    %2391 = vmatprep.subr.bf16.mxu0 %v2360
    %2392 = vmatpush1.bf16.msra.mxu0 %v2359
    %2393 = vmatprep.subr.bf16.mxu0 %v2362
    %2394 = vmatpush1.bf16.msra.mxu0 %v2361
    %2395 = vmatprep.subr.bf16.mxu0 %v2364
    %2396 = vmatpush1.bf16.msra.mxu0 %v2363
    %2397 = vmatprep.subr.bf16.mxu0 %v2366
    %2398 = vmatpush1.bf16.msra.mxu0 %v2365
    %2399 = vmatprep.subr.bf16.mxu0 %v2368
    %2400 = vmatpush1.bf16.msra.mxu0 %v2367
    %2401 = vmatprep.subr.bf16.mxu0 %v2370
    %2402 = vmatpush1.bf16.msra.mxu0 %v2369
    %2403 = vmatprep.subr.bf16.mxu0 %v2372
    %2404 = vmatpush1.bf16.msra.mxu0 %v2371
    %2405 = vmatprep.subr.bf16.mxu0 %v2374
    %2406 = vmatpush1.bf16.msra.mxu0 %v2373
    %2407 = vmatprep.subr.bf16.mxu0 0
    %2408 = vmatpush1.bf16.msra.mxu0 0
    %2409 = vmatprep.subr.bf16.mxu0 0
    %2410 = vmatpush1.bf16.msra.mxu0 0
    %2411 = vmatprep.subr.bf16.mxu0 0
    %2412 = vmatpush1.bf16.msra.mxu0 0
    %2413 = vmatprep.subr.bf16.mxu0 0
    %2414 = vmatpush1.bf16.msra.mxu0 0
    %2415 = vmatprep.subr.bf16.mxu0 0
    %2416 = vmatpush1.bf16.msra.mxu0 0
    %2417 = vmatprep.subr.bf16.mxu0 0
    %2418 = vmatpush1.bf16.msra.mxu0 0
    %2419 = vmatprep.subr.bf16.mxu0 0
    %2420 = vmatpush1.bf16.msra.mxu0 0
    %2421 = vmatprep.subr.bf16.mxu0 0
    %2422 = vmatpush1.bf16.msra.mxu0 0
    %2423 = vmatprep.mubr.bf16.mxu0 0
    %2424 = vmatmul.mubr.bf16.gmra.mrb[0].mxu0 %v2281
    %v2425 = vpop.f32.mrb[0].mxu0
    %v2426 = vadd.f32 %v2304, %v2425
    %v2427 = vpop.f32.mrb[0].mxu0
    %v2428 = vadd.f32 %v2308, %v2427
    %v2429 = vpop.f32.mrb[0].mxu0
    %v2430 = vadd.f32 %v2304, %v2429
    %v2431 = vpop.f32.mrb[0].mxu0
    %v2432 = vadd.f32 %v2308, %v2431
    %2433 = vmatprep.mubr.bf16.mxu0 0
    %2434 = vmatmul.mubr.bf16.gmra.mrb[0].mxu0 %v2282
    %v2435 = vpop.f32.mrb[0].mxu0
    %v2436 = vadd.f32 %v2304, %v2435
    %v2437 = vpop.f32.mrb[0].mxu0
    %v2438 = vadd.f32 %v2308, %v2437
    %v2439 = vpop.f32.mrb[0].mxu0
    %v2440 = vadd.f32 %v2304, %v2439
    %v2441 = vpop.f32.mrb[0].mxu0
    %v2442 = vadd.f32 %v2308, %v2441
    %2443 = vdwg.mxu0
    %v2444 = vpack.c.bf16 %v1117, %v1113
    %v2445 = vpack.c.bf16 %v2430, %v2426
    %v2446 = vpack.c.bf16 %v2432, %v2428
    %v2448 = vsel %vm1132, %v2444, 0
    %v2451 = vsel %vm1132, %v2445, 0
    %2453 = vmatprep.subr.bf16.mxu0 0
    %2454 = vmatpush1.bf16.xpose.msra.mxu0 %v2451
    %2455 = vmatprep.subr.bf16.mxu0 0
    %2456 = vmatpush1.bf16.xpose.msra.mxu0 0
    %2457 = vmatprep.subr.bf16.mxu0 0
    %2458 = vmatpush1.bf16.xpose.msra.mxu0 0
    %2459 = vmatprep.subr.bf16.mxu0 0
    %2460 = vmatpush1.bf16.xpose.msra.mxu0 0
    %2461 = vmatprep.subr.bf16.mxu0 0
    %2462 = vmatpush1.bf16.xpose.msra.mxu0 0
    %2463 = vmatprep.subr.bf16.mxu0 0
    %2464 = vmatpush1.bf16.xpose.msra.mxu0 0
    %2465 = vmatprep.subr.bf16.mxu0 0
    %2466 = vmatpush1.bf16.xpose.msra.mxu0 0
    %2467 = vmatprep.subr.bf16.mxu0 0
    %2468 = vmatpush1.bf16.xpose.msra.mxu0 0
    %2469 = vmatprep.subr.bf16.mxu0 0
    %2470 = vmatpush1.bf16.xpose.msra.mxu0 0
    %2471 = vmatprep.subr.bf16.mxu0 0
    %2472 = vmatpush1.bf16.xpose.msra.mxu0 0
    %2473 = vmatprep.subr.bf16.mxu0 0
    %2474 = vmatpush1.bf16.xpose.msra.mxu0 0
    %2475 = vmatprep.subr.bf16.mxu0 0
    %2476 = vmatpush1.bf16.xpose.msra.mxu0 0
    %2477 = vmatprep.subr.bf16.mxu0 0
    %2478 = vmatpush1.bf16.xpose.msra.mxu0 0
    %2479 = vmatprep.subr.bf16.mxu0 0
    %2480 = vmatpush1.bf16.xpose.msra.mxu0 0
    %2481 = vmatprep.subr.bf16.mxu0 0
    %2482 = vmatpush1.bf16.xpose.msra.mxu0 0
    %2483 = vmatprep.subr.bf16.mxu0 0
    %2484 = vmatpush1.bf16.xpose.msra.mxu0 0
    %2485 = vmatprep.mubr.bf16.mxu0 0
    %2486 = vmatmul.mubr.bf16.gmra.mrb[0].mxu0 %v2448
    %v2487 = vpop.f32.mrb[0].mxu0
    %v2488 = vadd.f32 0.0, %v2487
    %v2489 = vpop.f32.mrb[0].mxu0
    %v2490 = vpop.f32.mrb[0].mxu0
    %v2491 = vadd.f32 0.0, %v2490
    %v2492 = vpop.f32.mrb[0].mxu0
    %2493 = vdwg.mxu0
    %v2494 = vsel %vm1180, %v2488, -inf
    %2495 = vmax.xlane.f32.xlu0 %v2494
    %v2496 = vpop.xlane.xlu0 %2495
    %v2497 = vsel %vm1180, %v2491, -inf
    %2498 = vmax.xlane.f32.xlu0 %v2497
    %v2499 = vpop.xlane.xlu0 %2498
    %v2500 = vsub.f32 %v2488, %v2496
    %v2501 = vsub.f32 %v2491, %v2499
    %v2502 = vmul.f32 %v2500, 1.442695
    %v2503 = vpow.pop %v2502
    %v2504 = vmul.f32 %v2501, 1.442695
    %v2505 = vpow.pop %v2504
    %v2506 = vsel %vm1180, %v2503, 0.0
    %2507 = vadd.xlane.f32.xlu0 %v2506
    %v2508 = vpop.xlane.xlu0 %2507
    %v2509 = vsel %vm1180, %v2505, 0.0
    %2510 = vadd.xlane.f32.xlu0 %v2509
    %v2511 = vpop.xlane.xlu0 %2510
    %v2512 = vrcp.pop %v2508
    %v2513 = vrcp.pop %v2511
    %v2514 = vmul.f32 %v2503, %v2512
    %v2515 = vmul.f32 %v2505, %v2513
    %v2516 = vpack.c.bf16 %v2515, %v2514
    %v2518 = vsel %vm1180, %v2516, 0
    %2520 = vmatprep.subr.bf16.mxu0 0
    %2521 = vmatpush1.bf16.msra.mxu0 %v2446
    %2522 = vmatprep.subr.bf16.mxu0 0
    %2523 = vmatpush1.bf16.msra.mxu0 0
    %2524 = vmatprep.subr.bf16.mxu0 0
    %2525 = vmatpush1.bf16.msra.mxu0 0
    %2526 = vmatprep.subr.bf16.mxu0 0
    %2527 = vmatpush1.bf16.msra.mxu0 0
    %2528 = vmatprep.subr.bf16.mxu0 0
    %2529 = vmatpush1.bf16.msra.mxu0 0
    %2530 = vmatprep.subr.bf16.mxu0 0
    %2531 = vmatpush1.bf16.msra.mxu0 0
    %2532 = vmatprep.subr.bf16.mxu0 0
    %2533 = vmatpush1.bf16.msra.mxu0 0
    %2534 = vmatprep.subr.bf16.mxu0 0
    %2535 = vmatpush1.bf16.msra.mxu0 0
    %2536 = vmatprep.subr.bf16.mxu0 0
    %2537 = vmatpush1.bf16.msra.mxu0 0
    %2538 = vmatprep.subr.bf16.mxu0 0
    %2539 = vmatpush1.bf16.msra.mxu0 0
    %2540 = vmatprep.subr.bf16.mxu0 0
    %2541 = vmatpush1.bf16.msra.mxu0 0
    %2542 = vmatprep.subr.bf16.mxu0 0
    %2543 = vmatpush1.bf16.msra.mxu0 0
    %2544 = vmatprep.subr.bf16.mxu0 0
    %2545 = vmatpush1.bf16.msra.mxu0 0
    %2546 = vmatprep.subr.bf16.mxu0 0
    %2547 = vmatpush1.bf16.msra.mxu0 0
    %2548 = vmatprep.subr.bf16.mxu0 0
    %2549 = vmatpush1.bf16.msra.mxu0 0
    %2550 = vmatprep.subr.bf16.mxu0 0
    %2551 = vmatpush1.bf16.msra.mxu0 0
    %2552 = vmatprep.mubr.bf16.mxu0 0
    %2553 = vmatmul.mubr.bf16.gmra.mrb[0].mxu0 %v2518
    %v2554 = vpop.f32.mrb[0].mxu0
    %v2555 = vadd.f32 0.0, %v2554
    %v2556 = vpop.f32.mrb[0].mxu0
    %v2557 = vpop.f32.mrb[0].mxu0
    %v2558 = vadd.f32 0.0, %v2557
    %v2559 = vpop.f32.mrb[0].mxu0
    %2560 = vdwg.mxu0
    %2562 = vrot.lane.b32.xlu0 %v2444, 96
    %v2563 = vpop.permute.xlu0 %2562
    %2565 = vrot.lane.b32.xlu0 %v2445, 96
    %v2566 = vpop.permute.xlu0 %2565
    %v2568 = vsel %vm1132, %v2563, 0
    %v2571 = vsel %vm1132, %v2566, 0
    %2573 = vmatprep.subr.bf16.mxu0 0
    %2574 = vmatpush1.bf16.xpose.msra.mxu0 %v2571
    %2575 = vmatprep.subr.bf16.mxu0 0
    %2576 = vmatpush1.bf16.xpose.msra.mxu0 0
    %2577 = vmatprep.subr.bf16.mxu0 0
    %2578 = vmatpush1.bf16.xpose.msra.mxu0 0
    %2579 = vmatprep.subr.bf16.mxu0 0
    %2580 = vmatpush1.bf16.xpose.msra.mxu0 0
    %2581 = vmatprep.subr.bf16.mxu0 0
    %2582 = vmatpush1.bf16.xpose.msra.mxu0 0
    %2583 = vmatprep.subr.bf16.mxu0 0
    %2584 = vmatpush1.bf16.xpose.msra.mxu0 0
    %2585 = vmatprep.subr.bf16.mxu0 0
    %2586 = vmatpush1.bf16.xpose.msra.mxu0 0
    %2587 = vmatprep.subr.bf16.mxu0 0
    %2588 = vmatpush1.bf16.xpose.msra.mxu0 0
    %2589 = vmatprep.subr.bf16.mxu0 0
    %2590 = vmatpush1.bf16.xpose.msra.mxu0 0
    %2591 = vmatprep.subr.bf16.mxu0 0
    %2592 = vmatpush1.bf16.xpose.msra.mxu0 0
    %2593 = vmatprep.subr.bf16.mxu0 0
    %2594 = vmatpush1.bf16.xpose.msra.mxu0 0
    %2595 = vmatprep.subr.bf16.mxu0 0
    %2596 = vmatpush1.bf16.xpose.msra.mxu0 0
    %2597 = vmatprep.subr.bf16.mxu0 0
    %2598 = vmatpush1.bf16.xpose.msra.mxu0 0
    %2599 = vmatprep.subr.bf16.mxu0 0
    %2600 = vmatpush1.bf16.xpose.msra.mxu0 0
    %2601 = vmatprep.subr.bf16.mxu0 0
    %2602 = vmatpush1.bf16.xpose.msra.mxu0 0
    %2603 = vmatprep.subr.bf16.mxu0 0
    %2604 = vmatpush1.bf16.xpose.msra.mxu0 0
    %2605 = vmatprep.mubr.bf16.mxu0 0
    %2606 = vmatmul.mubr.bf16.gmra.mrb[0].mxu0 %v2568
    %v2607 = vpop.f32.mrb[0].mxu0
    %v2608 = vadd.f32 0.0, %v2607
    %v2609 = vpop.f32.mrb[0].mxu0
    %v2610 = vpop.f32.mrb[0].mxu0
    %v2611 = vadd.f32 0.0, %v2610
    %v2612 = vpop.f32.mrb[0].mxu0
    %2613 = vdwg.mxu0
    %v2614 = vsel %vm1180, %v2608, -inf
    %2615 = vmax.xlane.f32.xlu0 %v2614
    %v2616 = vpop.xlane.xlu0 %2615
    %v2617 = vsel %vm1180, %v2611, -inf
    %2618 = vmax.xlane.f32.xlu0 %v2617
    %v2619 = vpop.xlane.xlu0 %2618
    %v2620 = vsub.f32 %v2608, %v2616
    %v2621 = vsub.f32 %v2611, %v2619
    %v2622 = vmul.f32 %v2620, 1.442695
    %v2623 = vpow.pop %v2622
    %v2624 = vmul.f32 %v2621, 1.442695
    %v2625 = vpow.pop %v2624
    %v2626 = vsel %vm1180, %v2623, 0.0
    %2627 = vadd.xlane.f32.xlu0 %v2626
    %v2628 = vpop.xlane.xlu0 %2627
    %v2629 = vsel %vm1180, %v2625, 0.0
    %2630 = vadd.xlane.f32.xlu0 %v2629
    %v2631 = vpop.xlane.xlu0 %2630
    %v2632 = vrcp.pop %v2628
    %v2633 = vrcp.pop %v2631
    %v2634 = vmul.f32 %v2623, %v2632
    %v2635 = vmul.f32 %v2625, %v2633
    %v2636 = vpack.c.bf16 %v2635, %v2634
    %2638 = vrot.lane.b32.xlu0 %v2446, 96
    %v2639 = vpop.permute.xlu0 %2638
    %v2642 = vsel %vm1180, %v2636, 0
    %2644 = vmatprep.subr.bf16.mxu0 0
    %2645 = vmatpush1.bf16.msra.mxu0 %v2639
    %2646 = vmatprep.subr.bf16.mxu0 0
    %2647 = vmatpush1.bf16.msra.mxu0 0
    %2648 = vmatprep.subr.bf16.mxu0 0
    %2649 = vmatpush1.bf16.msra.mxu0 0
    %2650 = vmatprep.subr.bf16.mxu0 0
    %2651 = vmatpush1.bf16.msra.mxu0 0
    %2652 = vmatprep.subr.bf16.mxu0 0
    %2653 = vmatpush1.bf16.msra.mxu0 0
    %2654 = vmatprep.subr.bf16.mxu0 0
    %2655 = vmatpush1.bf16.msra.mxu0 0
    %2656 = vmatprep.subr.bf16.mxu0 0
    %2657 = vmatpush1.bf16.msra.mxu0 0
    %2658 = vmatprep.subr.bf16.mxu0 0
    %2659 = vmatpush1.bf16.msra.mxu0 0
    %2660 = vmatprep.subr.bf16.mxu0 0
    %2661 = vmatpush1.bf16.msra.mxu0 0
    %2662 = vmatprep.subr.bf16.mxu0 0
    %2663 = vmatpush1.bf16.msra.mxu0 0
    %2664 = vmatprep.subr.bf16.mxu0 0
    %2665 = vmatpush1.bf16.msra.mxu0 0
    %2666 = vmatprep.subr.bf16.mxu0 0
    %2667 = vmatpush1.bf16.msra.mxu0 0
    %2668 = vmatprep.subr.bf16.mxu0 0
    %2669 = vmatpush1.bf16.msra.mxu0 0
    %2670 = vmatprep.subr.bf16.mxu0 0
    %2671 = vmatpush1.bf16.msra.mxu0 0
    %2672 = vmatprep.subr.bf16.mxu0 0
    %2673 = vmatpush1.bf16.msra.mxu0 0
    %2674 = vmatprep.subr.bf16.mxu0 0
    %2675 = vmatpush1.bf16.msra.mxu0 0
    %2676 = vmatprep.mubr.bf16.mxu0 0
    %2677 = vmatmul.mubr.bf16.gmra.mrb[0].mxu0 %v2642
    %v2678 = vpop.f32.mrb[0].mxu0
    %v2679 = vadd.f32 0.0, %v2678
    %v2680 = vpop.f32.mrb[0].mxu0
    %v2681 = vpop.f32.mrb[0].mxu0
    %v2682 = vadd.f32 0.0, %v2681
    %v2683 = vpop.f32.mrb[0].mxu0
    %2684 = vdwg.mxu0
    %2685 = vrot.lane.b32.xlu0 %v2444, 64
    %v2686 = vpop.permute.xlu0 %2685
    %2687 = vrot.lane.b32.xlu0 %v2445, 64
    %v2688 = vpop.permute.xlu0 %2687
    %v2690 = vsel %vm1132, %v2686, 0
    %v2693 = vsel %vm1132, %v2688, 0
    %2695 = vmatprep.subr.bf16.mxu0 0
    %2696 = vmatpush1.bf16.xpose.msra.mxu0 %v2693
    %2697 = vmatprep.subr.bf16.mxu0 0
    %2698 = vmatpush1.bf16.xpose.msra.mxu0 0
    %2699 = vmatprep.subr.bf16.mxu0 0
    %2700 = vmatpush1.bf16.xpose.msra.mxu0 0
    %2701 = vmatprep.subr.bf16.mxu0 0
    %2702 = vmatpush1.bf16.xpose.msra.mxu0 0
    %2703 = vmatprep.subr.bf16.mxu0 0
    %2704 = vmatpush1.bf16.xpose.msra.mxu0 0
    %2705 = vmatprep.subr.bf16.mxu0 0
    %2706 = vmatpush1.bf16.xpose.msra.mxu0 0
    %2707 = vmatprep.subr.bf16.mxu0 0
    %2708 = vmatpush1.bf16.xpose.msra.mxu0 0
    %2709 = vmatprep.subr.bf16.mxu0 0
    %2710 = vmatpush1.bf16.xpose.msra.mxu0 0
    %2711 = vmatprep.subr.bf16.mxu0 0
    %2712 = vmatpush1.bf16.xpose.msra.mxu0 0
    %2713 = vmatprep.subr.bf16.mxu0 0
    %2714 = vmatpush1.bf16.xpose.msra.mxu0 0
    %2715 = vmatprep.subr.bf16.mxu0 0
    %2716 = vmatpush1.bf16.xpose.msra.mxu0 0
    %2717 = vmatprep.subr.bf16.mxu0 0
    %2718 = vmatpush1.bf16.xpose.msra.mxu0 0
    %2719 = vmatprep.subr.bf16.mxu0 0
    %2720 = vmatpush1.bf16.xpose.msra.mxu0 0
    %2721 = vmatprep.subr.bf16.mxu0 0
    %2722 = vmatpush1.bf16.xpose.msra.mxu0 0
    %2723 = vmatprep.subr.bf16.mxu0 0
    %2724 = vmatpush1.bf16.xpose.msra.mxu0 0
    %2725 = vmatprep.subr.bf16.mxu0 0
    %2726 = vmatpush1.bf16.xpose.msra.mxu0 0
    %2727 = vmatprep.mubr.bf16.mxu0 0
    %2728 = vmatmul.mubr.bf16.gmra.mrb[0].mxu0 %v2690
    %v2729 = vpop.f32.mrb[0].mxu0
    %v2730 = vadd.f32 0.0, %v2729
    %v2731 = vpop.f32.mrb[0].mxu0
    %v2732 = vpop.f32.mrb[0].mxu0
    %v2733 = vadd.f32 0.0, %v2732
    %v2734 = vpop.f32.mrb[0].mxu0
    %2735 = vdwg.mxu0
    %v2736 = vsel %vm1180, %v2730, -inf
    %2737 = vmax.xlane.f32.xlu0 %v2736
    %v2738 = vpop.xlane.xlu0 %2737
    %v2739 = vsel %vm1180, %v2733, -inf
    %2740 = vmax.xlane.f32.xlu0 %v2739
    %v2741 = vpop.xlane.xlu0 %2740
    %v2742 = vsub.f32 %v2730, %v2738
    %v2743 = vsub.f32 %v2733, %v2741
    %v2744 = vmul.f32 %v2742, 1.442695
    %v2745 = vpow.pop %v2744
    %v2746 = vmul.f32 %v2743, 1.442695
    %v2747 = vpow.pop %v2746
    %v2748 = vsel %vm1180, %v2745, 0.0
    %2749 = vadd.xlane.f32.xlu0 %v2748
    %v2750 = vpop.xlane.xlu0 %2749
    %v2751 = vsel %vm1180, %v2747, 0.0
    %2752 = vadd.xlane.f32.xlu0 %v2751
    %v2753 = vpop.xlane.xlu0 %2752
    %v2754 = vrcp.pop %v2750
    %v2755 = vrcp.pop %v2753
    %v2756 = vmul.f32 %v2745, %v2754
    %v2757 = vmul.f32 %v2747, %v2755
    %v2758 = vpack.c.bf16 %v2757, %v2756
    %2759 = vrot.lane.b32.xlu0 %v2446, 64
    %v2760 = vpop.permute.xlu0 %2759
    %v2763 = vsel %vm1180, %v2758, 0
    %2765 = vmatprep.subr.bf16.mxu0 0
    %2766 = vmatpush1.bf16.msra.mxu0 %v2760
    %2767 = vmatprep.subr.bf16.mxu0 0
    %2768 = vmatpush1.bf16.msra.mxu0 0
    %2769 = vmatprep.subr.bf16.mxu0 0
    %2770 = vmatpush1.bf16.msra.mxu0 0
    %2771 = vmatprep.subr.bf16.mxu0 0
    %2772 = vmatpush1.bf16.msra.mxu0 0
    %2773 = vmatprep.subr.bf16.mxu0 0
    %2774 = vmatpush1.bf16.msra.mxu0 0
    %2775 = vmatprep.subr.bf16.mxu0 0
    %2776 = vmatpush1.bf16.msra.mxu0 0
    %2777 = vmatprep.subr.bf16.mxu0 0
    %2778 = vmatpush1.bf16.msra.mxu0 0
    %2779 = vmatprep.subr.bf16.mxu0 0
    %2780 = vmatpush1.bf16.msra.mxu0 0
    %2781 = vmatprep.subr.bf16.mxu0 0
    %2782 = vmatpush1.bf16.msra.mxu0 0
    %2783 = vmatprep.subr.bf16.mxu0 0
    %2784 = vmatpush1.bf16.msra.mxu0 0
    %2785 = vmatprep.subr.bf16.mxu0 0
    %2786 = vmatpush1.bf16.msra.mxu0 0
    %2787 = vmatprep.subr.bf16.mxu0 0
    %2788 = vmatpush1.bf16.msra.mxu0 0
    %2789 = vmatprep.subr.bf16.mxu0 0
    %2790 = vmatpush1.bf16.msra.mxu0 0
    %2791 = vmatprep.subr.bf16.mxu0 0
    %2792 = vmatpush1.bf16.msra.mxu0 0
    %2793 = vmatprep.subr.bf16.mxu0 0
    %2794 = vmatpush1.bf16.msra.mxu0 0
    %2795 = vmatprep.subr.bf16.mxu0 0
    %2796 = vmatpush1.bf16.msra.mxu0 0
    %2797 = vmatprep.mubr.bf16.mxu0 0
    %2798 = vmatmul.mubr.bf16.gmra.mrb[0].mxu0 %v2763
    %v2799 = vpop.f32.mrb[0].mxu0
    %v2800 = vadd.f32 0.0, %v2799
    %v2801 = vpop.f32.mrb[0].mxu0
    %v2802 = vpop.f32.mrb[0].mxu0
    %v2803 = vadd.f32 0.0, %v2802
    %v2804 = vpop.f32.mrb[0].mxu0
    %2805 = vdwg.mxu0
    %2806 = vrot.lane.b32.xlu0 %v2444, 32
    %v2807 = vpop.permute.xlu0 %2806
    %2808 = vrot.lane.b32.xlu0 %v2445, 32
    %v2809 = vpop.permute.xlu0 %2808
    %v2811 = vsel %vm1132, %v2807, 0
    %v2814 = vsel %vm1132, %v2809, 0
    %2816 = vmatprep.subr.bf16.mxu0 0
    %2817 = vmatpush1.bf16.xpose.msra.mxu0 %v2814
    %2818 = vmatprep.subr.bf16.mxu0 0
    %2819 = vmatpush1.bf16.xpose.msra.mxu0 0
    %2820 = vmatprep.subr.bf16.mxu0 0
    %2821 = vmatpush1.bf16.xpose.msra.mxu0 0
    %2822 = vmatprep.subr.bf16.mxu0 0
    %2823 = vmatpush1.bf16.xpose.msra.mxu0 0
    %2824 = vmatprep.subr.bf16.mxu0 0
    %2825 = vmatpush1.bf16.xpose.msra.mxu0 0
    %2826 = vmatprep.subr.bf16.mxu0 0
    %2827 = vmatpush1.bf16.xpose.msra.mxu0 0
    %2828 = vmatprep.subr.bf16.mxu0 0
    %2829 = vmatpush1.bf16.xpose.msra.mxu0 0
    %2830 = vmatprep.subr.bf16.mxu0 0
    %2831 = vmatpush1.bf16.xpose.msra.mxu0 0
    %2832 = vmatprep.subr.bf16.mxu0 0
    %2833 = vmatpush1.bf16.xpose.msra.mxu0 0
    %2834 = vmatprep.subr.bf16.mxu0 0
    %2835 = vmatpush1.bf16.xpose.msra.mxu0 0
    %2836 = vmatprep.subr.bf16.mxu0 0
    %2837 = vmatpush1.bf16.xpose.msra.mxu0 0
    %2838 = vmatprep.subr.bf16.mxu0 0
    %2839 = vmatpush1.bf16.xpose.msra.mxu0 0
    %2840 = vmatprep.subr.bf16.mxu0 0
    %2841 = vmatpush1.bf16.xpose.msra.mxu0 0
    %2842 = vmatprep.subr.bf16.mxu0 0
    %2843 = vmatpush1.bf16.xpose.msra.mxu0 0
    %2844 = vmatprep.subr.bf16.mxu0 0
    %2845 = vmatpush1.bf16.xpose.msra.mxu0 0
    %2846 = vmatprep.subr.bf16.mxu0 0
    %2847 = vmatpush1.bf16.xpose.msra.mxu0 0
    %2848 = vmatprep.mubr.bf16.mxu0 0
    %2849 = vmatmul.mubr.bf16.gmra.mrb[0].mxu0 %v2811
    %v2850 = vpop.f32.mrb[0].mxu0
    %v2851 = vadd.f32 0.0, %v2850
    %v2852 = vpop.f32.mrb[0].mxu0
    %v2853 = vpop.f32.mrb[0].mxu0
    %v2854 = vadd.f32 0.0, %v2853
    %v2855 = vpop.f32.mrb[0].mxu0
    %2856 = vdwg.mxu0
    %v2857 = vsel %vm1180, %v2851, -inf
    %2858 = vmax.xlane.f32.xlu0 %v2857
    %v2859 = vpop.xlane.xlu0 %2858
    %v2860 = vsel %vm1180, %v2854, -inf
    %2861 = vmax.xlane.f32.xlu0 %v2860
    %v2862 = vpop.xlane.xlu0 %2861
    %v2863 = vsub.f32 %v2851, %v2859
    %v2864 = vsub.f32 %v2854, %v2862
    %v2865 = vmul.f32 %v2863, 1.442695
    %v2866 = vpow.pop %v2865
    %v2867 = vmul.f32 %v2864, 1.442695
    %v2868 = vpow.pop %v2867
    %v2869 = vsel %vm1180, %v2866, 0.0
    %2870 = vadd.xlane.f32.xlu0 %v2869
    %v2871 = vpop.xlane.xlu0 %2870
    %v2872 = vsel %vm1180, %v2868, 0.0
    %2873 = vadd.xlane.f32.xlu0 %v2872
    %v2874 = vpop.xlane.xlu0 %2873
    %v2875 = vrcp.pop %v2871
    %v2876 = vrcp.pop %v2874
    %v2877 = vmul.f32 %v2866, %v2875
    %v2878 = vmul.f32 %v2868, %v2876
    %v2879 = vpack.c.bf16 %v2878, %v2877
    %2880 = vrot.lane.b32.xlu0 %v2446, 32
    %v2881 = vpop.permute.xlu0 %2880
    %v2884 = vsel %vm1180, %v2879, 0
    %2886 = vmatprep.subr.bf16.mxu0 0
    %2887 = vmatpush1.bf16.msra.mxu0 %v2881
    %2888 = vmatprep.subr.bf16.mxu0 0
    %2889 = vmatpush1.bf16.msra.mxu0 0
    %2890 = vmatprep.subr.bf16.mxu0 0
    %2891 = vmatpush1.bf16.msra.mxu0 0
    %2892 = vmatprep.subr.bf16.mxu0 0
    %2893 = vmatpush1.bf16.msra.mxu0 0
    %2894 = vmatprep.subr.bf16.mxu0 0
    %2895 = vmatpush1.bf16.msra.mxu0 0
    %2896 = vmatprep.subr.bf16.mxu0 0
    %2897 = vmatpush1.bf16.msra.mxu0 0
    %2898 = vmatprep.subr.bf16.mxu0 0
    %2899 = vmatpush1.bf16.msra.mxu0 0
    %2900 = vmatprep.subr.bf16.mxu0 0
    %2901 = vmatpush1.bf16.msra.mxu0 0
    %2902 = vmatprep.subr.bf16.mxu0 0
    %2903 = vmatpush1.bf16.msra.mxu0 0
    %2904 = vmatprep.subr.bf16.mxu0 0
    %2905 = vmatpush1.bf16.msra.mxu0 0
    %2906 = vmatprep.subr.bf16.mxu0 0
    %2907 = vmatpush1.bf16.msra.mxu0 0
    %2908 = vmatprep.subr.bf16.mxu0 0
    %2909 = vmatpush1.bf16.msra.mxu0 0
    %2910 = vmatprep.subr.bf16.mxu0 0
    %2911 = vmatpush1.bf16.msra.mxu0 0
    %2912 = vmatprep.subr.bf16.mxu0 0
    %2913 = vmatpush1.bf16.msra.mxu0 0
    %2914 = vmatprep.subr.bf16.mxu0 0
    %2915 = vmatpush1.bf16.msra.mxu0 0
    %2916 = vmatprep.subr.bf16.mxu0 0
    %2917 = vmatpush1.bf16.msra.mxu0 0
    %2918 = vmatprep.mubr.bf16.mxu0 0
    %2919 = vmatmul.mubr.bf16.gmra.mrb[0].mxu0 %v2884
    %v2920 = vpop.f32.mrb[0].mxu0
    %v2921 = vadd.f32 0.0, %v2920
    %v2922 = vpop.f32.mrb[0].mxu0
    %v2923 = vpop.f32.mrb[0].mxu0
    %v2924 = vadd.f32 0.0, %v2923
    %v2925 = vpop.f32.mrb[0].mxu0
    %2926 = vdwg.mxu0
    %2929 = vrot.lane.b32.xlu0 %v2679, 32
    %v2930 = vpop.permute.xlu0 %2929
    %2931 = vrot.lane.b32.xlu0 %v2682, 32
    %v2932 = vpop.permute.xlu0 %2931
    %2937 = vrot.lane.b32.xlu0 %v2800, 64
    %v2938 = vpop.permute.xlu0 %2937
    %2939 = vrot.lane.b32.xlu0 %v2803, 64
    %v2940 = vpop.permute.xlu0 %2939
    %2945 = vrot.lane.b32.xlu0 %v2921, 96
    %v2946 = vpop.permute.xlu0 %2945
    %2947 = vrot.lane.b32.xlu0 %v2924, 96
    %v2948 = vpop.permute.xlu0 %2947
    %v2951 = vsel %vm1132, %v2555, %v2930
    %v2952 = vsel %vm1132, %v2558, %v2932
    %v2953 = vsel %vm1640, %v2951, %v2938
    %v2954 = vsel %vm1640, %v2952, %v2940
    %v2955 = vsel %vm1643, %v2953, %v2946
    %v2956 = vsel %vm1643, %v2954, %v2948
    %v2957 = vpack.c.bf16 %v1127, %v1123
    %v2958 = vpack.c.bf16 %v2440, %v2436
    %v2959 = vpack.c.bf16 %v2442, %v2438
    %v2961 = vsel %vm1132, %v2957, 0
    %v2964 = vsel %vm1132, %v2958, 0
    %2966 = vmatprep.subr.bf16.mxu0 0
    %2967 = vmatpush1.bf16.xpose.msra.mxu0 %v2964
    %2968 = vmatprep.subr.bf16.mxu0 0
    %2969 = vmatpush1.bf16.xpose.msra.mxu0 0
    %2970 = vmatprep.subr.bf16.mxu0 0
    %2971 = vmatpush1.bf16.xpose.msra.mxu0 0
    %2972 = vmatprep.subr.bf16.mxu0 0
    %2973 = vmatpush1.bf16.xpose.msra.mxu0 0
    %2974 = vmatprep.subr.bf16.mxu0 0
    %2975 = vmatpush1.bf16.xpose.msra.mxu0 0
    %2976 = vmatprep.subr.bf16.mxu0 0
    %2977 = vmatpush1.bf16.xpose.msra.mxu0 0
    %2978 = vmatprep.subr.bf16.mxu0 0
    %2979 = vmatpush1.bf16.xpose.msra.mxu0 0
    %2980 = vmatprep.subr.bf16.mxu0 0
    %2981 = vmatpush1.bf16.xpose.msra.mxu0 0
    %2982 = vmatprep.subr.bf16.mxu0 0
    %2983 = vmatpush1.bf16.xpose.msra.mxu0 0
    %2984 = vmatprep.subr.bf16.mxu0 0
    %2985 = vmatpush1.bf16.xpose.msra.mxu0 0
    %2986 = vmatprep.subr.bf16.mxu0 0
    %2987 = vmatpush1.bf16.xpose.msra.mxu0 0
    %2988 = vmatprep.subr.bf16.mxu0 0
    %2989 = vmatpush1.bf16.xpose.msra.mxu0 0
    %2990 = vmatprep.subr.bf16.mxu0 0
    %2991 = vmatpush1.bf16.xpose.msra.mxu0 0
    %2992 = vmatprep.subr.bf16.mxu0 0
    %2993 = vmatpush1.bf16.xpose.msra.mxu0 0
    %2994 = vmatprep.subr.bf16.mxu0 0
    %2995 = vmatpush1.bf16.xpose.msra.mxu0 0
    %2996 = vmatprep.subr.bf16.mxu0 0
    %2997 = vmatpush1.bf16.xpose.msra.mxu0 0
    %2998 = vmatprep.mubr.bf16.mxu0 0
    %2999 = vmatmul.mubr.bf16.gmra.mrb[0].mxu0 %v2961
    %v3000 = vpop.f32.mrb[0].mxu0
    %v3001 = vadd.f32 0.0, %v3000
    %v3002 = vpop.f32.mrb[0].mxu0
    %v3003 = vpop.f32.mrb[0].mxu0
    %v3004 = vadd.f32 0.0, %v3003
    %v3005 = vpop.f32.mrb[0].mxu0
    %3006 = vdwg.mxu0
    %v3007 = vsel %vm1180, %v3001, -inf
    %3008 = vmax.xlane.f32.xlu0 %v3007
    %v3009 = vpop.xlane.xlu0 %3008
    %v3010 = vsel %vm1180, %v3004, -inf
    %3011 = vmax.xlane.f32.xlu0 %v3010
    %v3012 = vpop.xlane.xlu0 %3011
    %v3013 = vsub.f32 %v3001, %v3009
    %v3014 = vsub.f32 %v3004, %v3012
    %v3015 = vmul.f32 %v3013, 1.442695
    %v3016 = vpow.pop %v3015
    %v3017 = vmul.f32 %v3014, 1.442695
    %v3018 = vpow.pop %v3017
    %v3019 = vsel %vm1180, %v3016, 0.0
    %3020 = vadd.xlane.f32.xlu0 %v3019
    %v3021 = vpop.xlane.xlu0 %3020
    %v3022 = vsel %vm1180, %v3018, 0.0
    %3023 = vadd.xlane.f32.xlu0 %v3022
    %v3024 = vpop.xlane.xlu0 %3023
    %v3025 = vrcp.pop %v3021
    %v3026 = vrcp.pop %v3024
    %v3027 = vmul.f32 %v3016, %v3025
    %v3028 = vmul.f32 %v3018, %v3026
    %v3029 = vpack.c.bf16 %v3028, %v3027
    %v3031 = vsel %vm1180, %v3029, 0
    %3033 = vmatprep.subr.bf16.mxu0 0
    %3034 = vmatpush1.bf16.msra.mxu0 %v2959
    %3035 = vmatprep.subr.bf16.mxu0 0
    %3036 = vmatpush1.bf16.msra.mxu0 0
    %3037 = vmatprep.subr.bf16.mxu0 0
    %3038 = vmatpush1.bf16.msra.mxu0 0
    %3039 = vmatprep.subr.bf16.mxu0 0
    %3040 = vmatpush1.bf16.msra.mxu0 0
    %3041 = vmatprep.subr.bf16.mxu0 0
    %3042 = vmatpush1.bf16.msra.mxu0 0
    %3043 = vmatprep.subr.bf16.mxu0 0
    %3044 = vmatpush1.bf16.msra.mxu0 0
    %3045 = vmatprep.subr.bf16.mxu0 0
    %3046 = vmatpush1.bf16.msra.mxu0 0
    %3047 = vmatprep.subr.bf16.mxu0 0
    %3048 = vmatpush1.bf16.msra.mxu0 0
    %3049 = vmatprep.subr.bf16.mxu0 0
    %3050 = vmatpush1.bf16.msra.mxu0 0
    %3051 = vmatprep.subr.bf16.mxu0 0
    %3052 = vmatpush1.bf16.msra.mxu0 0
    %3053 = vmatprep.subr.bf16.mxu0 0
    %3054 = vmatpush1.bf16.msra.mxu0 0
    %3055 = vmatprep.subr.bf16.mxu0 0
    %3056 = vmatpush1.bf16.msra.mxu0 0
    %3057 = vmatprep.subr.bf16.mxu0 0
    %3058 = vmatpush1.bf16.msra.mxu0 0
    %3059 = vmatprep.subr.bf16.mxu0 0
    %3060 = vmatpush1.bf16.msra.mxu0 0
    %3061 = vmatprep.subr.bf16.mxu0 0
    %3062 = vmatpush1.bf16.msra.mxu0 0
    %3063 = vmatprep.subr.bf16.mxu0 0
    %3064 = vmatpush1.bf16.msra.mxu0 0
    %3065 = vmatprep.mubr.bf16.mxu0 0
    %3066 = vmatmul.mubr.bf16.gmra.mrb[0].mxu0 %v3031
    %v3067 = vpop.f32.mrb[0].mxu0
    %v3068 = vadd.f32 0.0, %v3067
    %v3069 = vpop.f32.mrb[0].mxu0
    %v3070 = vpop.f32.mrb[0].mxu0
    %v3071 = vadd.f32 0.0, %v3070
    %v3072 = vpop.f32.mrb[0].mxu0
    %3073 = vdwg.mxu0
    %3075 = vrot.lane.b32.xlu0 %v2957, 96
    %v3076 = vpop.permute.xlu0 %3075
    %3078 = vrot.lane.b32.xlu0 %v2958, 96
    %v3079 = vpop.permute.xlu0 %3078
    %v3081 = vsel %vm1132, %v3076, 0
    %v3084 = vsel %vm1132, %v3079, 0
    %3086 = vmatprep.subr.bf16.mxu0 0
    %3087 = vmatpush1.bf16.xpose.msra.mxu0 %v3084
    %3088 = vmatprep.subr.bf16.mxu0 0
    %3089 = vmatpush1.bf16.xpose.msra.mxu0 0
    %3090 = vmatprep.subr.bf16.mxu0 0
    %3091 = vmatpush1.bf16.xpose.msra.mxu0 0
    %3092 = vmatprep.subr.bf16.mxu0 0
    %3093 = vmatpush1.bf16.xpose.msra.mxu0 0
    %3094 = vmatprep.subr.bf16.mxu0 0
    %3095 = vmatpush1.bf16.xpose.msra.mxu0 0
    %3096 = vmatprep.subr.bf16.mxu0 0
    %3097 = vmatpush1.bf16.xpose.msra.mxu0 0
    %3098 = vmatprep.subr.bf16.mxu0 0
    %3099 = vmatpush1.bf16.xpose.msra.mxu0 0
    %3100 = vmatprep.subr.bf16.mxu0 0
    %3101 = vmatpush1.bf16.xpose.msra.mxu0 0
    %3102 = vmatprep.subr.bf16.mxu0 0
    %3103 = vmatpush1.bf16.xpose.msra.mxu0 0
    %3104 = vmatprep.subr.bf16.mxu0 0
    %3105 = vmatpush1.bf16.xpose.msra.mxu0 0
    %3106 = vmatprep.subr.bf16.mxu0 0
    %3107 = vmatpush1.bf16.xpose.msra.mxu0 0
    %3108 = vmatprep.subr.bf16.mxu0 0
    %3109 = vmatpush1.bf16.xpose.msra.mxu0 0
    %3110 = vmatprep.subr.bf16.mxu0 0
    %3111 = vmatpush1.bf16.xpose.msra.mxu0 0
    %3112 = vmatprep.subr.bf16.mxu0 0
    %3113 = vmatpush1.bf16.xpose.msra.mxu0 0
    %3114 = vmatprep.subr.bf16.mxu0 0
    %3115 = vmatpush1.bf16.xpose.msra.mxu0 0
    %3116 = vmatprep.subr.bf16.mxu0 0
    %3117 = vmatpush1.bf16.xpose.msra.mxu0 0
    %3118 = vmatprep.mubr.bf16.mxu0 0
    %3119 = vmatmul.mubr.bf16.gmra.mrb[0].mxu0 %v3081
    %v3120 = vpop.f32.mrb[0].mxu0
    %v3121 = vadd.f32 0.0, %v3120
    %v3122 = vpop.f32.mrb[0].mxu0
    %v3123 = vpop.f32.mrb[0].mxu0
    %v3124 = vadd.f32 0.0, %v3123
    %v3125 = vpop.f32.mrb[0].mxu0
    %3126 = vdwg.mxu0
    %v3127 = vsel %vm1180, %v3121, -inf
    %3128 = vmax.xlane.f32.xlu0 %v3127
    %v3129 = vpop.xlane.xlu0 %3128
    %v3130 = vsel %vm1180, %v3124, -inf
    %3131 = vmax.xlane.f32.xlu0 %v3130
    %v3132 = vpop.xlane.xlu0 %3131
    %v3133 = vsub.f32 %v3121, %v3129
    %v3134 = vsub.f32 %v3124, %v3132
    %v3135 = vmul.f32 %v3133, 1.442695
    %v3136 = vpow.pop %v3135
    %v3137 = vmul.f32 %v3134, 1.442695
    %v3138 = vpow.pop %v3137
    %v3139 = vsel %vm1180, %v3136, 0.0
    %3140 = vadd.xlane.f32.xlu0 %v3139
    %v3141 = vpop.xlane.xlu0 %3140
    %v3142 = vsel %vm1180, %v3138, 0.0
    %3143 = vadd.xlane.f32.xlu0 %v3142
    %v3144 = vpop.xlane.xlu0 %3143
    %v3145 = vrcp.pop %v3141
    %v3146 = vrcp.pop %v3144
    %v3147 = vmul.f32 %v3136, %v3145
    %v3148 = vmul.f32 %v3138, %v3146
    %v3149 = vpack.c.bf16 %v3148, %v3147
    %3151 = vrot.lane.b32.xlu0 %v2959, 96
    %v3152 = vpop.permute.xlu0 %3151
    %v3155 = vsel %vm1180, %v3149, 0
    %3157 = vmatprep.subr.bf16.mxu0 0
    %3158 = vmatpush1.bf16.msra.mxu0 %v3152
    %3159 = vmatprep.subr.bf16.mxu0 0
    %3160 = vmatpush1.bf16.msra.mxu0 0
    %3161 = vmatprep.subr.bf16.mxu0 0
    %3162 = vmatpush1.bf16.msra.mxu0 0
    %3163 = vmatprep.subr.bf16.mxu0 0
    %3164 = vmatpush1.bf16.msra.mxu0 0
    %3165 = vmatprep.subr.bf16.mxu0 0
    %3166 = vmatpush1.bf16.msra.mxu0 0
    %3167 = vmatprep.subr.bf16.mxu0 0
    %3168 = vmatpush1.bf16.msra.mxu0 0
    %3169 = vmatprep.subr.bf16.mxu0 0
    %3170 = vmatpush1.bf16.msra.mxu0 0
    %3171 = vmatprep.subr.bf16.mxu0 0
    %3172 = vmatpush1.bf16.msra.mxu0 0
    %3173 = vmatprep.subr.bf16.mxu0 0
    %3174 = vmatpush1.bf16.msra.mxu0 0
    %3175 = vmatprep.subr.bf16.mxu0 0
    %3176 = vmatpush1.bf16.msra.mxu0 0
    %3177 = vmatprep.subr.bf16.mxu0 0
    %3178 = vmatpush1.bf16.msra.mxu0 0
    %3179 = vmatprep.subr.bf16.mxu0 0
    %3180 = vmatpush1.bf16.msra.mxu0 0
    %3181 = vmatprep.subr.bf16.mxu0 0
    %3182 = vmatpush1.bf16.msra.mxu0 0
    %3183 = vmatprep.subr.bf16.mxu0 0
    %3184 = vmatpush1.bf16.msra.mxu0 0
    %3185 = vmatprep.subr.bf16.mxu0 0
    %3186 = vmatpush1.bf16.msra.mxu0 0
    %3187 = vmatprep.subr.bf16.mxu0 0
    %3188 = vmatpush1.bf16.msra.mxu0 0
    %3189 = vmatprep.mubr.bf16.mxu0 0
    %3190 = vmatmul.mubr.bf16.gmra.mrb[0].mxu0 %v3155
    %v3191 = vpop.f32.mrb[0].mxu0
    %v3192 = vadd.f32 0.0, %v3191
    %v3193 = vpop.f32.mrb[0].mxu0
    %v3194 = vpop.f32.mrb[0].mxu0
    %v3195 = vadd.f32 0.0, %v3194
    %v3196 = vpop.f32.mrb[0].mxu0
    %3197 = vdwg.mxu0
    %3198 = vrot.lane.b32.xlu0 %v2957, 64
    %v3199 = vpop.permute.xlu0 %3198
    %3200 = vrot.lane.b32.xlu0 %v2958, 64
    %v3201 = vpop.permute.xlu0 %3200
    %v3203 = vsel %vm1132, %v3199, 0
    %v3206 = vsel %vm1132, %v3201, 0
    %3208 = vmatprep.subr.bf16.mxu0 0
    %3209 = vmatpush1.bf16.xpose.msra.mxu0 %v3206
    %3210 = vmatprep.subr.bf16.mxu0 0
    %3211 = vmatpush1.bf16.xpose.msra.mxu0 0
    %3212 = vmatprep.subr.bf16.mxu0 0
    %3213 = vmatpush1.bf16.xpose.msra.mxu0 0
    %3214 = vmatprep.subr.bf16.mxu0 0
    %3215 = vmatpush1.bf16.xpose.msra.mxu0 0
    %3216 = vmatprep.subr.bf16.mxu0 0
    %3217 = vmatpush1.bf16.xpose.msra.mxu0 0
    %3218 = vmatprep.subr.bf16.mxu0 0
    %3219 = vmatpush1.bf16.xpose.msra.mxu0 0
    %3220 = vmatprep.subr.bf16.mxu0 0
    %3221 = vmatpush1.bf16.xpose.msra.mxu0 0
    %3222 = vmatprep.subr.bf16.mxu0 0
    %3223 = vmatpush1.bf16.xpose.msra.mxu0 0
    %3224 = vmatprep.subr.bf16.mxu0 0
    %3225 = vmatpush1.bf16.xpose.msra.mxu0 0
    %3226 = vmatprep.subr.bf16.mxu0 0
    %3227 = vmatpush1.bf16.xpose.msra.mxu0 0
    %3228 = vmatprep.subr.bf16.mxu0 0
    %3229 = vmatpush1.bf16.xpose.msra.mxu0 0
    %3230 = vmatprep.subr.bf16.mxu0 0
    %3231 = vmatpush1.bf16.xpose.msra.mxu0 0
    %3232 = vmatprep.subr.bf16.mxu0 0
    %3233 = vmatpush1.bf16.xpose.msra.mxu0 0
    %3234 = vmatprep.subr.bf16.mxu0 0
    %3235 = vmatpush1.bf16.xpose.msra.mxu0 0
    %3236 = vmatprep.subr.bf16.mxu0 0
    %3237 = vmatpush1.bf16.xpose.msra.mxu0 0
    %3238 = vmatprep.subr.bf16.mxu0 0
    %3239 = vmatpush1.bf16.xpose.msra.mxu0 0
    %3240 = vmatprep.mubr.bf16.mxu0 0
    %3241 = vmatmul.mubr.bf16.gmra.mrb[0].mxu0 %v3203
    %v3242 = vpop.f32.mrb[0].mxu0
    %v3243 = vadd.f32 0.0, %v3242
    %v3244 = vpop.f32.mrb[0].mxu0
    %v3245 = vpop.f32.mrb[0].mxu0
    %v3246 = vadd.f32 0.0, %v3245
    %v3247 = vpop.f32.mrb[0].mxu0
    %3248 = vdwg.mxu0
    %v3249 = vsel %vm1180, %v3243, -inf
    %3250 = vmax.xlane.f32.xlu0 %v3249
    %v3251 = vpop.xlane.xlu0 %3250
    %v3252 = vsel %vm1180, %v3246, -inf
    %3253 = vmax.xlane.f32.xlu0 %v3252
    %v3254 = vpop.xlane.xlu0 %3253
    %v3255 = vsub.f32 %v3243, %v3251
    %v3256 = vsub.f32 %v3246, %v3254
    %v3257 = vmul.f32 %v3255, 1.442695
    %v3258 = vpow.pop %v3257
    %v3259 = vmul.f32 %v3256, 1.442695
    %v3260 = vpow.pop %v3259
    %v3261 = vsel %vm1180, %v3258, 0.0
    %3262 = vadd.xlane.f32.xlu0 %v3261
    %v3263 = vpop.xlane.xlu0 %3262
    %v3264 = vsel %vm1180, %v3260, 0.0
    %3265 = vadd.xlane.f32.xlu0 %v3264
    %v3266 = vpop.xlane.xlu0 %3265
    %v3267 = vrcp.pop %v3263
    %v3268 = vrcp.pop %v3266
    %v3269 = vmul.f32 %v3258, %v3267
    %v3270 = vmul.f32 %v3260, %v3268
    %v3271 = vpack.c.bf16 %v3270, %v3269
    %3272 = vrot.lane.b32.xlu0 %v2959, 64
    %v3273 = vpop.permute.xlu0 %3272
    %v3276 = vsel %vm1180, %v3271, 0
    %3278 = vmatprep.subr.bf16.mxu0 0
    %3279 = vmatpush1.bf16.msra.mxu0 %v3273
    %3280 = vmatprep.subr.bf16.mxu0 0
    %3281 = vmatpush1.bf16.msra.mxu0 0
    %3282 = vmatprep.subr.bf16.mxu0 0
    %3283 = vmatpush1.bf16.msra.mxu0 0
    %3284 = vmatprep.subr.bf16.mxu0 0
    %3285 = vmatpush1.bf16.msra.mxu0 0
    %3286 = vmatprep.subr.bf16.mxu0 0
    %3287 = vmatpush1.bf16.msra.mxu0 0
    %3288 = vmatprep.subr.bf16.mxu0 0
    %3289 = vmatpush1.bf16.msra.mxu0 0
    %3290 = vmatprep.subr.bf16.mxu0 0
    %3291 = vmatpush1.bf16.msra.mxu0 0
    %3292 = vmatprep.subr.bf16.mxu0 0
    %3293 = vmatpush1.bf16.msra.mxu0 0
    %3294 = vmatprep.subr.bf16.mxu0 0
    %3295 = vmatpush1.bf16.msra.mxu0 0
    %3296 = vmatprep.subr.bf16.mxu0 0
    %3297 = vmatpush1.bf16.msra.mxu0 0
    %3298 = vmatprep.subr.bf16.mxu0 0
    %3299 = vmatpush1.bf16.msra.mxu0 0
    %3300 = vmatprep.subr.bf16.mxu0 0
    %3301 = vmatpush1.bf16.msra.mxu0 0
    %3302 = vmatprep.subr.bf16.mxu0 0
    %3303 = vmatpush1.bf16.msra.mxu0 0
    %3304 = vmatprep.subr.bf16.mxu0 0
    %3305 = vmatpush1.bf16.msra.mxu0 0
    %3306 = vmatprep.subr.bf16.mxu0 0
    %3307 = vmatpush1.bf16.msra.mxu0 0
    %3308 = vmatprep.subr.bf16.mxu0 0
    %3309 = vmatpush1.bf16.msra.mxu0 0
    %3310 = vmatprep.mubr.bf16.mxu0 0
    %3311 = vmatmul.mubr.bf16.gmra.mrb[0].mxu0 %v3276
    %v3312 = vpop.f32.mrb[0].mxu0
    %v3313 = vadd.f32 0.0, %v3312
    %v3314 = vpop.f32.mrb[0].mxu0
    %v3315 = vpop.f32.mrb[0].mxu0
    %v3316 = vadd.f32 0.0, %v3315
    %v3317 = vpop.f32.mrb[0].mxu0
    %3318 = vdwg.mxu0
    %3319 = vrot.lane.b32.xlu0 %v2957, 32
    %v3320 = vpop.permute.xlu0 %3319
    %3321 = vrot.lane.b32.xlu0 %v2958, 32
    %v3322 = vpop.permute.xlu0 %3321
    %v3324 = vsel %vm1132, %v3320, 0
    %v3327 = vsel %vm1132, %v3322, 0
    %3329 = vmatprep.subr.bf16.mxu0 0
    %3330 = vmatpush1.bf16.xpose.msra.mxu0 %v3327
    %3331 = vmatprep.subr.bf16.mxu0 0
    %3332 = vmatpush1.bf16.xpose.msra.mxu0 0
    %3333 = vmatprep.subr.bf16.mxu0 0
    %3334 = vmatpush1.bf16.xpose.msra.mxu0 0
    %3335 = vmatprep.subr.bf16.mxu0 0
    %3336 = vmatpush1.bf16.xpose.msra.mxu0 0
    %3337 = vmatprep.subr.bf16.mxu0 0
    %3338 = vmatpush1.bf16.xpose.msra.mxu0 0
    %3339 = vmatprep.subr.bf16.mxu0 0
    %3340 = vmatpush1.bf16.xpose.msra.mxu0 0
    %3341 = vmatprep.subr.bf16.mxu0 0
    %3342 = vmatpush1.bf16.xpose.msra.mxu0 0
    %3343 = vmatprep.subr.bf16.mxu0 0
    %3344 = vmatpush1.bf16.xpose.msra.mxu0 0
    %3345 = vmatprep.subr.bf16.mxu0 0
    %3346 = vmatpush1.bf16.xpose.msra.mxu0 0
    %3347 = vmatprep.subr.bf16.mxu0 0
    %3348 = vmatpush1.bf16.xpose.msra.mxu0 0
    %3349 = vmatprep.subr.bf16.mxu0 0
    %3350 = vmatpush1.bf16.xpose.msra.mxu0 0
    %3351 = vmatprep.subr.bf16.mxu0 0
    %3352 = vmatpush1.bf16.xpose.msra.mxu0 0
    %3353 = vmatprep.subr.bf16.mxu0 0
    %3354 = vmatpush1.bf16.xpose.msra.mxu0 0
    %3355 = vmatprep.subr.bf16.mxu0 0
    %3356 = vmatpush1.bf16.xpose.msra.mxu0 0
    %3357 = vmatprep.subr.bf16.mxu0 0
    %3358 = vmatpush1.bf16.xpose.msra.mxu0 0
    %3359 = vmatprep.subr.bf16.mxu0 0
    %3360 = vmatpush1.bf16.xpose.msra.mxu0 0
    %3361 = vmatprep.mubr.bf16.mxu0 0
    %3362 = vmatmul.mubr.bf16.gmra.mrb[0].mxu0 %v3324
    %v3363 = vpop.f32.mrb[0].mxu0
    %v3364 = vadd.f32 0.0, %v3363
    %v3365 = vpop.f32.mrb[0].mxu0
    %v3366 = vpop.f32.mrb[0].mxu0
    %v3367 = vadd.f32 0.0, %v3366
    %v3368 = vpop.f32.mrb[0].mxu0
    %3369 = vdwg.mxu0
    %v3370 = vsel %vm1180, %v3364, -inf
    %3371 = vmax.xlane.f32.xlu0 %v3370
    %v3372 = vpop.xlane.xlu0 %3371
    %v3373 = vsel %vm1180, %v3367, -inf
    %3374 = vmax.xlane.f32.xlu0 %v3373
    %v3375 = vpop.xlane.xlu0 %3374
    %v3376 = vsub.f32 %v3364, %v3372
    %v3377 = vsub.f32 %v3367, %v3375
    %v3378 = vmul.f32 %v3376, 1.442695
    %v3379 = vpow.pop %v3378
    %v3380 = vmul.f32 %v3377, 1.442695
    %v3381 = vpow.pop %v3380
    %v3382 = vsel %vm1180, %v3379, 0.0
    %3383 = vadd.xlane.f32.xlu0 %v3382
    %v3384 = vpop.xlane.xlu0 %3383
    %v3385 = vsel %vm1180, %v3381, 0.0
    %3386 = vadd.xlane.f32.xlu0 %v3385
    %v3387 = vpop.xlane.xlu0 %3386
    %v3388 = vrcp.pop %v3384
    %v3389 = vrcp.pop %v3387
    %v3390 = vmul.f32 %v3379, %v3388
    %v3391 = vmul.f32 %v3381, %v3389
    %v3392 = vpack.c.bf16 %v3391, %v3390
    %3393 = vrot.lane.b32.xlu0 %v2959, 32
    %v3394 = vpop.permute.xlu0 %3393
    %v3397 = vsel %vm1180, %v3392, 0
    %3399 = vmatprep.subr.bf16.mxu0 0
    %3400 = vmatpush1.bf16.msra.mxu0 %v3394
    %3401 = vmatprep.subr.bf16.mxu0 0
    %3402 = vmatpush1.bf16.msra.mxu0 0
    %3403 = vmatprep.subr.bf16.mxu0 0
    %3404 = vmatpush1.bf16.msra.mxu0 0
    %3405 = vmatprep.subr.bf16.mxu0 0
    %3406 = vmatpush1.bf16.msra.mxu0 0
    %3407 = vmatprep.subr.bf16.mxu0 0
    %3408 = vmatpush1.bf16.msra.mxu0 0
    %3409 = vmatprep.subr.bf16.mxu0 0
    %3410 = vmatpush1.bf16.msra.mxu0 0
    %3411 = vmatprep.subr.bf16.mxu0 0
    %3412 = vmatpush1.bf16.msra.mxu0 0
    %3413 = vmatprep.subr.bf16.mxu0 0
    %3414 = vmatpush1.bf16.msra.mxu0 0
    %3415 = vmatprep.subr.bf16.mxu0 0
    %3416 = vmatpush1.bf16.msra.mxu0 0
    %3417 = vmatprep.subr.bf16.mxu0 0
    %3418 = vmatpush1.bf16.msra.mxu0 0
    %3419 = vmatprep.subr.bf16.mxu0 0
    %3420 = vmatpush1.bf16.msra.mxu0 0
    %3421 = vmatprep.subr.bf16.mxu0 0
    %3422 = vmatpush1.bf16.msra.mxu0 0
    %3423 = vmatprep.subr.bf16.mxu0 0
    %3424 = vmatpush1.bf16.msra.mxu0 0
    %3425 = vmatprep.subr.bf16.mxu0 0
    %3426 = vmatpush1.bf16.msra.mxu0 0
    %3427 = vmatprep.subr.bf16.mxu0 0
    %3428 = vmatpush1.bf16.msra.mxu0 0
    %3429 = vmatprep.subr.bf16.mxu0 0
    %3430 = vmatpush1.bf16.msra.mxu0 0
    %3431 = vmatprep.mubr.bf16.mxu0 0
    %3432 = vmatmul.mubr.bf16.gmra.mrb[0].mxu0 %v3397
    %v3433 = vpop.f32.mrb[0].mxu0
    %v3434 = vadd.f32 0.0, %v3433
    %v3435 = vpop.f32.mrb[0].mxu0
    %v3436 = vpop.f32.mrb[0].mxu0
    %v3437 = vadd.f32 0.0, %v3436
    %v3438 = vpop.f32.mrb[0].mxu0
    %3439 = vdwg.mxu0
    %3442 = vrot.lane.b32.xlu0 %v3192, 32
    %v3443 = vpop.permute.xlu0 %3442
    %3444 = vrot.lane.b32.xlu0 %v3195, 32
    %v3445 = vpop.permute.xlu0 %3444
    %3450 = vrot.lane.b32.xlu0 %v3313, 64
    %v3451 = vpop.permute.xlu0 %3450
    %3452 = vrot.lane.b32.xlu0 %v3316, 64
    %v3453 = vpop.permute.xlu0 %3452
    %3458 = vrot.lane.b32.xlu0 %v3434, 96
    %v3459 = vpop.permute.xlu0 %3458
    %3460 = vrot.lane.b32.xlu0 %v3437, 96
    %v3461 = vpop.permute.xlu0 %3460
    %v3464 = vsel %vm1132, %v3068, %v3443
    %v3465 = vsel %vm1132, %v3071, %v3445
    %v3466 = vsel %vm1640, %v3464, %v3451
    %v3467 = vsel %vm1640, %v3465, %v3453
    %v3468 = vsel %vm1643, %v3466, %v3459
    %v3469 = vsel %vm1643, %v3467, %v3461
    %v3470 = vpack.c.bf16 %v2956, %v2955
    %v3471 = vpack.c.bf16 %v3469, %v3468
    %v3472 = vld [vmem:[#allocation7 + $0x1c] sm:$0xf]
    %v3473 = vld [vmem:[#allocation7 + $0x44] sm:$0xf]
    %v3474 = vld [vmem:[#allocation7 + $0x6c] sm:$0xf]
    %v3475 = vld [vmem:[#allocation7 + $0x94] sm:$0xf]
    %v3476 = vld [vmem:[#allocation7 + $0xbc] sm:$0xf]
    %v3477 = vld [vmem:[#allocation7 + $0xe4] sm:$0xf]
    %v3478 = vld [vmem:[#allocation7 + $0x10c] sm:$0xf]
    %v3479 = vld [vmem:[#allocation7 + $0x134] sm:$0xf]
    %v3480 = vld [vmem:[#allocation7 + $0x15c] sm:$0xf]
    %v3481 = vld [vmem:[#allocation7 + $0x184] sm:$0xf]
    %v3482 = vld [vmem:[#allocation7 + $0x1ac] sm:$0xf]
    %v3483 = vld [vmem:[#allocation7 + $0x1d4] sm:$0xf]
    %v3484 = vld [vmem:[#allocation7 + $0x1fc] sm:$0xf]
    %v3485 = vld [vmem:[#allocation7 + $0x224] sm:$0xf]
    %v3486 = vld [vmem:[#allocation7 + $0x24c] sm:$0xf]
    %v3487 = vld [vmem:[#allocation7 + $0x274] sm:$0xf]
    %v3488 = vld [vmem:[#allocation9 + $0x9] sm:$0x1]
    %v3490 = vlaneseq
    %v3491 = vshrl.u32 %v3490, 7
    %v3492 = vsub.s32 0, %v3491
    %v3493 = vrot.slane %v3488, %v3492
    %v3511 = vunpack.c.l.b16 %v3472
    %v3512 = vunpack.c.l.b16 %v3473
    %v3513 = vunpack.c.l.b16 %v3474
    %v3514 = vunpack.c.l.b16 %v3475
    %v3515 = vunpack.c.l.b16 %v3476
    %v3516 = vunpack.c.l.b16 %v3477
    %v3517 = vunpack.c.l.b16 %v3478
    %v3518 = vunpack.c.l.b16 %v3479
    %v3519 = vunpack.c.l.b16 %v3480
    %v3520 = vunpack.c.l.b16 %v3481
    %v3521 = vunpack.c.l.b16 %v3482
    %v3522 = vunpack.c.l.b16 %v3483
    %v3523 = vunpack.c.l.b16 %v3484
    %v3524 = vunpack.c.l.b16 %v3485
    %v3525 = vunpack.c.l.b16 %v3486
    %v3526 = vunpack.c.l.b16 %v3487
    %v3527 = vpack.c.b16 %v3512, %v3511
    %v3528 = vpack.c.b16 %v3514, %v3513
    %v3529 = vpack.c.b16 %v3516, %v3515
    %v3530 = vpack.c.b16 %v3518, %v3517
    %v3531 = vpack.c.b16 %v3520, %v3519
    %v3532 = vpack.c.b16 %v3522, %v3521
    %v3533 = vpack.c.b16 %v3524, %v3523
    %v3534 = vpack.c.b16 %v3526, %v3525
    %3543 = vmatprep.subr.bf16.mxu0 0
    %3544 = vmatpush1.bf16.msra.mxu0 %v3527
    %3545 = vmatprep.subr.bf16.mxu0 0
    %3546 = vmatpush1.bf16.msra.mxu0 %v3528
    %3547 = vmatprep.subr.bf16.mxu0 0
    %3548 = vmatpush1.bf16.msra.mxu0 %v3529
    %3549 = vmatprep.subr.bf16.mxu0 0
    %3550 = vmatpush1.bf16.msra.mxu0 %v3530
    %3551 = vmatprep.subr.bf16.mxu0 0
    %3552 = vmatpush1.bf16.msra.mxu0 %v3531
    %3553 = vmatprep.subr.bf16.mxu0 0
    %3554 = vmatpush1.bf16.msra.mxu0 %v3532
    %3555 = vmatprep.subr.bf16.mxu0 0
    %3556 = vmatpush1.bf16.msra.mxu0 %v3533
    %3557 = vmatprep.subr.bf16.mxu0 0
    %3558 = vmatpush1.bf16.msra.mxu0 %v3534
    %3559 = vmatprep.subr.bf16.mxu0 0
    %3560 = vmatpush1.bf16.msra.mxu0 0
    %3561 = vmatprep.subr.bf16.mxu0 0
    %3562 = vmatpush1.bf16.msra.mxu0 0
    %3563 = vmatprep.subr.bf16.mxu0 0
    %3564 = vmatpush1.bf16.msra.mxu0 0
    %3565 = vmatprep.subr.bf16.mxu0 0
    %3566 = vmatpush1.bf16.msra.mxu0 0
    %3567 = vmatprep.subr.bf16.mxu0 0
    %3568 = vmatpush1.bf16.msra.mxu0 0
    %3569 = vmatprep.subr.bf16.mxu0 0
    %3570 = vmatpush1.bf16.msra.mxu0 0
    %3571 = vmatprep.subr.bf16.mxu0 0
    %3572 = vmatpush1.bf16.msra.mxu0 0
    %3573 = vmatprep.subr.bf16.mxu0 0
    %3574 = vmatpush1.bf16.msra.mxu0 0
    %3575 = vmatprep.mubr.bf16.mxu0 0
    %3576 = vmatmul.mubr.bf16.gmra.mrb[0].mxu0 %v3470
    %v3577 = vpop.f32.mrb[0].mxu0
    %v3578 = vadd.f32 %v3493, %v3577
    %v3579 = vpop.f32.mrb[0].mxu0
    %v3580 = vpop.f32.mrb[0].mxu0
    %v3581 = vadd.f32 %v3493, %v3580
    %v3582 = vpop.f32.mrb[0].mxu0
    %3583 = vmatprep.mubr.bf16.mxu0 0
    %3584 = vmatmul.mubr.bf16.gmra.mrb[0].mxu0 %v3471
    %v3585 = vpop.f32.mrb[0].mxu0
    %v3586 = vadd.f32 %v3493, %v3585
    %v3587 = vpop.f32.mrb[0].mxu0
    %v3588 = vpop.f32.mrb[0].mxu0
    %v3589 = vadd.f32 %v3493, %v3588
    %v3590 = vpop.f32.mrb[0].mxu0
    %3591 = vdwg.mxu0
    %v3592 = vrot.slane %v3578, 4
    %v3593 = vadd.f32 %v3578, %v3592
    %v3594 = vrot.slane %v3593, 2
    %v3595 = vadd.f32 %v3593, %v3594
    %v3596 = vrot.slane %v3595, 1
    %v3597 = vadd.f32 %v3595, %v3596
    %v3598 = vrcp.pop 8.0
    %v3599 = vmul.f32 %v3597, %v3598
    %v3600 = vrot.slane %v3581, 4
    %v3601 = vadd.f32 %v3581, %v3600
    %v3602 = vrot.slane %v3601, 2
    %v3603 = vadd.f32 %v3601, %v3602
    %v3604 = vrot.slane %v3603, 1
    %v3605 = vadd.f32 %v3603, %v3604
    %v3606 = vmul.f32 %v3605, %v3598
    %v3607 = vrot.slane %v3586, 4
    %v3608 = vadd.f32 %v3586, %v3607
    %v3609 = vrot.slane %v3608, 2
    %v3610 = vadd.f32 %v3608, %v3609
    %v3611 = vrot.slane %v3610, 1
    %v3612 = vadd.f32 %v3610, %v3611
    %v3613 = vmul.f32 %v3612, %v3598
    %v3614 = vrot.slane %v3589, 4
    %v3615 = vadd.f32 %v3589, %v3614
    %v3616 = vrot.slane %v3615, 2
    %v3617 = vadd.f32 %v3615, %v3616
    %v3618 = vrot.slane %v3617, 1
    %v3619 = vadd.f32 %v3617, %v3618
    %v3620 = vmul.f32 %v3619, %v3598
    %vm3621 = vcmask 1040384
    %v3622 = vsel %vm3621, %v3599, %v3613
    %vm3623 = vcmask 1041408
    %v3624 = vsel %vm3623, %v3622, %v3606
    %vm3625 = vcmask 1042432
    %v3626 = vsel %vm3625, %v3624, %v3620
    %v3627 = vpack.c.bf16 %v3626, %v3626
    %v3628 = vld [vmem:[#allocation7 + $0x20] sm:$0xff]
    %v3629 = vld [vmem:[#allocation7 + $0x48] sm:$0xff]
    %v3630 = vld [vmem:[#allocation7 + $0x70] sm:$0xff]
    %v3631 = vld [vmem:[#allocation7 + $0x98] sm:$0xff]
    %v3632 = vld [vmem:[#allocation7 + $0xc0] sm:$0xff]
    %v3633 = vld [vmem:[#allocation7 + $0xe8] sm:$0xff]
    %v3634 = vld [vmem:[#allocation7 + $0x110] sm:$0xff]
    %v3635 = vld [vmem:[#allocation7 + $0x138] sm:$0xff]
    %v3636 = vld [vmem:[#allocation7 + $0x160] sm:$0xff]
    %v3637 = vld [vmem:[#allocation7 + $0x188] sm:$0xff]
    %v3638 = vld [vmem:[#allocation7 + $0x1b0] sm:$0xff]
    %v3639 = vld [vmem:[#allocation7 + $0x1d8] sm:$0xff]
    %v3640 = vld [vmem:[#allocation7 + $0x200] sm:$0xff]
    %v3641 = vld [vmem:[#allocation7 + $0x228] sm:$0xff]
    %v3642 = vld [vmem:[#allocation7 + $0x250] sm:$0xff]
    %v3643 = vld [vmem:[#allocation7 + $0x278] sm:$0xff]
    %v3644 = vld [vmem:[#allocation9 + $0xa] sm:$0x3]
    %v3646 = vlaneseq
    %v3647 = vshrl.u32 %v3646, 7
    %v3648 = vsub.s32 0, %v3647
    %v3649 = vrot.slane %v3644, %v3648
    %v3650 = vlaneseq
    %v3651 = vshrl.u32 %v3650, 7
    %v3652 = vsub.s32 1, %v3651
    %v3653 = vrot.slane %v3644, %v3652
    %v3672 = vunpack.c.l.b16 %v3628
    %v3673 = vunpack.c.h.b16 %v3628
    %v3674 = vunpack.c.l.b16 %v3629
    %v3675 = vunpack.c.h.b16 %v3629
    %v3676 = vunpack.c.l.b16 %v3630
    %v3677 = vunpack.c.h.b16 %v3630
    %v3678 = vunpack.c.l.b16 %v3631
    %v3679 = vunpack.c.h.b16 %v3631
    %v3680 = vunpack.c.l.b16 %v3632
    %v3681 = vunpack.c.h.b16 %v3632
    %v3682 = vunpack.c.l.b16 %v3633
    %v3683 = vunpack.c.h.b16 %v3633
    %v3684 = vunpack.c.l.b16 %v3634
    %v3685 = vunpack.c.h.b16 %v3634
    %v3686 = vunpack.c.l.b16 %v3635
    %v3687 = vunpack.c.h.b16 %v3635
    %v3688 = vunpack.c.l.b16 %v3636
    %v3689 = vunpack.c.h.b16 %v3636
    %v3690 = vunpack.c.l.b16 %v3637
    %v3691 = vunpack.c.h.b16 %v3637
    %v3692 = vunpack.c.l.b16 %v3638
    %v3693 = vunpack.c.h.b16 %v3638
    %v3694 = vunpack.c.l.b16 %v3639
    %v3695 = vunpack.c.h.b16 %v3639
    %v3696 = vunpack.c.l.b16 %v3640
    %v3697 = vunpack.c.h.b16 %v3640
    %v3698 = vunpack.c.l.b16 %v3641
    %v3699 = vunpack.c.h.b16 %v3641
    %v3700 = vunpack.c.l.b16 %v3642
    %v3701 = vunpack.c.h.b16 %v3642
    %v3702 = vunpack.c.l.b16 %v3643
    %v3703 = vunpack.c.h.b16 %v3643
    %v3704 = vpack.c.b16 %v3674, %v3672
    %v3705 = vpack.c.b16 %v3675, %v3673
    %v3706 = vpack.c.b16 %v3678, %v3676
    %v3707 = vpack.c.b16 %v3679, %v3677
    %v3708 = vpack.c.b16 %v3682, %v3680
    %v3709 = vpack.c.b16 %v3683, %v3681
    %v3710 = vpack.c.b16 %v3686, %v3684
    %v3711 = vpack.c.b16 %v3687, %v3685
    %v3712 = vpack.c.b16 %v3690, %v3688
    %v3713 = vpack.c.b16 %v3691, %v3689
    %v3714 = vpack.c.b16 %v3694, %v3692
    %v3715 = vpack.c.b16 %v3695, %v3693
    %v3716 = vpack.c.b16 %v3698, %v3696
    %v3717 = vpack.c.b16 %v3699, %v3697
    %v3718 = vpack.c.b16 %v3702, %v3700
    %v3719 = vpack.c.b16 %v3703, %v3701
    %3736 = vmatprep.subr.bf16.mxu0 %v3705
    %3737 = vmatpush1.bf16.msra.mxu0 %v3704
    %3738 = vmatprep.subr.bf16.mxu0 %v3707
    %3739 = vmatpush1.bf16.msra.mxu0 %v3706
    %3740 = vmatprep.subr.bf16.mxu0 %v3709
    %3741 = vmatpush1.bf16.msra.mxu0 %v3708
    %3742 = vmatprep.subr.bf16.mxu0 %v3711
    %3743 = vmatpush1.bf16.msra.mxu0 %v3710
    %3744 = vmatprep.subr.bf16.mxu0 %v3713
    %3745 = vmatpush1.bf16.msra.mxu0 %v3712
    %3746 = vmatprep.subr.bf16.mxu0 %v3715
    %3747 = vmatpush1.bf16.msra.mxu0 %v3714
    %3748 = vmatprep.subr.bf16.mxu0 %v3717
    %3749 = vmatpush1.bf16.msra.mxu0 %v3716
    %3750 = vmatprep.subr.bf16.mxu0 %v3719
    %3751 = vmatpush1.bf16.msra.mxu0 %v3718
    %3752 = vmatprep.subr.bf16.mxu0 0
    %3753 = vmatpush1.bf16.msra.mxu0 0
    %3754 = vmatprep.subr.bf16.mxu0 0
    %3755 = vmatpush1.bf16.msra.mxu0 0
    %3756 = vmatprep.subr.bf16.mxu0 0
    %3757 = vmatpush1.bf16.msra.mxu0 0
    %3758 = vmatprep.subr.bf16.mxu0 0
    %3759 = vmatpush1.bf16.msra.mxu0 0
    %3760 = vmatprep.subr.bf16.mxu0 0
    %3761 = vmatpush1.bf16.msra.mxu0 0
    %3762 = vmatprep.subr.bf16.mxu0 0
    %3763 = vmatpush1.bf16.msra.mxu0 0
    %3764 = vmatprep.subr.bf16.mxu0 0
    %3765 = vmatpush1.bf16.msra.mxu0 0
    %3766 = vmatprep.subr.bf16.mxu0 0
    %3767 = vmatpush1.bf16.msra.mxu0 0
    %3768 = vmatprep.mubr.bf16.mxu0 0
    %3769 = vmatmul.mubr.bf16.gmra.mrb[0].mxu0 %v3627
    %v3770 = vpop.f32.mrb[0].mxu0
    %v3771 = vadd.f32 %v3649, %v3770
    %v3772 = vpop.f32.mrb[0].mxu0
    %v3773 = vadd.f32 %v3653, %v3772
    %v3774 = vpop.f32.mrb[0].mxu0
    %v3775 = vpop.f32.mrb[0].mxu0
    %3776 = vdwg.mxu0
    %v3777 = vlaneseq
    %v3778 = vshrl.u32 %v3777, 7
    %vm3779 = vcmp.lt.s32.totalorder %v3778, 2
    %v3780 = vsel %vm3779, %v3771, %v3773
    %v3781 = vmax.f32 %v3780, 0.0
    %v3782 = vld [vmem:[#allocation9 + $0xc] sm:$0x1]
    %v3783 = vld [vmem:[#allocation9 + $0xe] sm:$0x1]
    %v3785 = vlaneseq
    %v3786 = vshrl.u32 %v3785, 7
    %v3787 = vsub.s32 0, %v3786
    %v3788 = vrot.slane %v3782, %v3787
    %v3791 = vlaneseq
    %v3792 = vshrl.u32 %v3791, 7
    %v3793 = vsub.s32 0, %v3792
    %v3794 = vrot.slane %v3783, %v3793
    %v3796 = vsel %vm3621, %v3782, %v3788
    %v3797 = vsel %vm3623, %v3796, %v3794
    %v3798 = vsel %vm3625, %v3797, %v3794
    %v3799 = vld [vmem:[#allocation9 + $0xd] sm:$0x1]
    %v3800 = vld [vmem:[#allocation9 + $0xf] sm:$0x1]
    %v3802 = vlaneseq
    %v3803 = vshrl.u32 %v3802, 7
    %v3804 = vsub.s32 0, %v3803
    %v3805 = vrot.slane %v3799, %v3804
    %v3808 = vlaneseq
    %v3809 = vshrl.u32 %v3808, 7
    %v3810 = vsub.s32 0, %v3809
    %v3811 = vrot.slane %v3800, %v3810
    %v3813 = vsel %vm3621, %v3799, %v3805
    %v3814 = vsel %vm3623, %v3813, %v3811
    %v3815 = vsel %vm3625, %v3814, %v3811
    %vm3816 = vcmask 1043456
    %v3817 = vsel %vm3816, %v3781, 0.0
    %3818 = vadd.xlane.f32.xlu0 %v3817
    %v3819 = vpop.xlane.xlu0 %3818
    %v3820 = vrcp.pop 128.0
    %v3821 = vmul.f32 %v3819, %v3820
    %v3822 = vsub.f32 %v3781, %v3821
    %v3823 = vmul.f32 %v3822, %v3822
    %v3824 = vsel %vm3816, %v3823, 0.0
    %3825 = vadd.xlane.f32.xlu0 %v3824
    %v3826 = vpop.xlane.xlu0 %3825
    %v3827 = vmul.f32 %v3826, %v3820
    %v3828 = vadd.f32 %v3827, 1e-05
    %v3829 = vrsqrt.pop %v3828
    %v3830 = vmul.f32 %v3822, %v3829
    %v3831 = vmul.f32 %v3830, %v3798
    %v3832 = vadd.f32 %v3831, %v3815
    %3833 = vst [vmem:[%s5] sm:$0xf] %v3832
    // Predicated region
    $region42: #{event_aware_visual_forward.1} parent=1 // pred_check
      _
    $region43: #{event_aware_visual_forward.1} parent=1 // pred_check_branch
      %3835 = sbr.rel (0) target = $region45
    $region44: #{event_aware_visual_forward.1} parent=1 // pred_region
      _
    $region45: #{event_aware_visual_forward.1} parent=1 // pred_fallthru
      _
    // Predicated region
    $region46: #{event_aware_visual_forward.1} parent=1 // pred_check
      _
    $region47: #{event_aware_visual_forward.1} parent=1 // pred_check_branch
      %3837 = sbr.rel (0) target = $region49
    $region48: #{event_aware_visual_forward.1} parent=1 // pred_region
      _
    $region49: #{event_aware_visual_forward.1} parent=1 // pred_fallthru
      _
    %3838 = vsyncpa [#allocation3], 1
    %3839 = vsyncpa [#allocation5], 1
    %3840 = vsyncpa [#allocation8], 1

</llo_original>
